<compile_context>
chip_gen: v5e
topology: v5e:2x2
jax: 0.10.0
libtpu: 0.0.40
codegen_flags: <defaults>
</compile_context>

<pallas_src>
import functools

import jax
import jax.numpy as jnp
from jax.experimental import pallas as pl
from jax.experimental.pallas import tpu as pltpu


# ---------------------------------------------------------------------------
# Helpers
# ---------------------------------------------------------------------------
def _choose_tile(total, target):
    """Largest multiple-of-8 divisor of `total` that is <= target, else `total`.

    Returned value always satisfies the TPU (8, 128) block constraint for the
    second-to-last block dim (multiple of 8, or the full dimension).
    """
    if total <= target:
        return total
    t = (min(target, total) // 8) * 8
    while t >= 8:
        if total % t == 0:
            return t
        t -= 8
    return total


def _vmem_limit_bytes():
    """~3/4 of physical VMEM: ~48 MiB on v7x (64 MiB), ~96 MiB on v5e/v6e."""
    cap = 128 * 1024 * 1024
    try:
        cap = int(pltpu.get_tpu_info().vmem_capacity_bytes)
    except Exception:
        pass
    return min((cap * 3) // 4, 110 * 1024 * 1024)


def _resident_weight_spec(shape):
    """Full-array, constant-index weight block; single-buffered if supported."""
    idx = lambda *_: (0,) * len(shape)
    try:
        return pl.BlockSpec(shape, idx, pipeline_mode=pl.Buffered(1))
    except TypeError:  # older BlockSpec without pipeline_mode: default buffering
        return pl.BlockSpec(shape, idx)


# ---------------------------------------------------------------------------
# Fused flash-attention kernel (projections + online softmax + out projection)
# ---------------------------------------------------------------------------
def _flash_attn_kernel(hs_ref, ctx_ref, wq_ref, wk_ref, wv_ref, wo_ref, out_ref,
                       q_hm, m_sc, l_sc, acc_sc, o_merge,
                       *, scale, mxu_dtype):
    num_heads, _, head_dim = q_hm.shape
    ki = pl.program_id(2)

    # ---- per-(batch, q-tile) init: fused head-major q projection + accums ----
    @pl.when(ki == 0)
    def _init():
        hs = hs_ref[0].astype(mxu_dtype)                                   # (tq, D)
        hs_b = jnp.broadcast_to(hs[None, :, :], (num_heads,) + hs.shape)   # (H, tq, D)
        q = jnp.einsum("hqd,hde->hqe", hs_b, wq_ref[...],
                       preferred_element_type=jnp.float32)                 # (H, tq, Hd)
        q_hm[...] = (q * scale).astype(mxu_dtype)   # scale folded into q once
        m_sc[...] = jnp.full(m_sc.shape, -jnp.inf, dtype=m_sc.dtype)
        l_sc[...] = jnp.zeros(l_sc.shape, dtype=l_sc.dtype)
        acc_sc[...] = jnp.zeros(acc_sc.shape, dtype=acc_sc.dtype)

    # ---- per-KV-tile: fused head-major k/v projection + online softmax ----
    ctx = ctx_ref[0].astype(mxu_dtype)                                     # (tk, Dk)
    ctx_b = jnp.broadcast_to(ctx[None, :, :], (num_heads,) + ctx.shape)    # (H, tk, Dk)
    k = jnp.einsum("hkd,hde->hke", ctx_b, wk_ref[...],
                   preferred_element_type=jnp.float32).astype(mxu_dtype)   # (H, tk, Hd)
    v = jnp.einsum("hkd,hde->hke", ctx_b, wv_ref[...],
                   preferred_element_type=jnp.float32).astype(mxu_dtype)   # (H, tk, Hd)

    s = jnp.einsum("hqe,hke->hqk", q_hm[...], k,
                   preferred_element_type=jnp.float32)                     # (H, tq, tk)

    m_prev = m_sc[...]                                                     # (H, tq, 1)
    m_new = jnp.maximum(m_prev, jnp.max(s, axis=-1, keepdims=True))
    alpha = jnp.exp(m_prev - m_new)
    p = jnp.exp(s - m_new)                                                 # f32 softmax math
    l_sc[...] = alpha * l_sc[...] + jnp.sum(p, axis=-1, keepdims=True)
    acc_sc[...] = alpha * acc_sc[...] + jnp.einsum(
        "hqk,hke->hqe", p.astype(mxu_dtype), v,
        preferred_element_type=jnp.float32)                                # (H, tq, Hd)
    m_sc[...] = m_new

    # ---- finalize: normalize, merge heads lane-dense, ONE K=D out projection ----
    @pl.when(ki == pl.num_programs(2) - 1)
    def _finalize():
        inv_l = pl.reciprocal(l_sc[...], approx=False)   # exact; tiny (H, tq, 1)
        o_hm = acc_sc[...] * inv_l                                         # (H, tq, Hd)
        for h in range(num_heads):   # finalize-only: H lane-slice stores
            o_merge[:, h * head_dim:(h + 1) * head_dim] = o_hm[h]
        out = jnp.dot(o_merge[...].astype(mxu_dtype), wo_ref[...],
                      preferred_element_type=jnp.float32)                  # (tq, D)
        out_ref[0] = out.astype(out_ref.dtype)


# ---------------------------------------------------------------------------
# "original_attention": the wrapped multi-head attention, fully fused in Pallas
# ---------------------------------------------------------------------------
def original_attention(hidden_states, params, num_heads,
                       encoder_hidden_states=None,
                       q_tile=256, kv_tile=512, mxu_dtype=jnp.bfloat16):
    """hidden_states: (B, Sq, D) -> (B, Sq, D)."""
    B, Sq, D = hidden_states.shape
    head_dim = D // num_heads
    scale = float(head_dim) ** -0.5

    ctx = hidden_states if encoder_hidden_states is None else encoder_hidden_states
    Skv, Dk = ctx.shape[1], ctx.shape[2]

    # Default tiles (tq=256, tk=512) keep the resident working set (q tile,
    # double-buffered ctx tiles, (H,tq,tk) scores, f32 accumulators, bf16
    # weights) well under the ~48 MiB v7x budget even at D=1280.
    tq = _choose_tile(Sq, q_tile)
    tk = _choose_tile(Skv, kv_tile)
    nq, nk = Sq // tq, Skv // tk

    # Head-blocked weight layout (one-time, outside the kernel): projecting with
    # (H, D, Hd) weights yields head-major q/k/v directly, so the kernel never
    # lane-slices activations.  Weights cast to the MXU dtype once (bf16).
    wq_hb = params["wq"].reshape(D, num_heads, head_dim).transpose(1, 0, 2).astype(mxu_dtype)
    wk_hb = params["wk"].reshape(Dk, num_heads, head_dim).transpose(1, 0, 2).astype(mxu_dtype)
    wv_hb = params["wv"].reshape(Dk, num_heads, head_dim).transpose(1, 0, 2).astype(mxu_dtype)
    wo = params["wo"].astype(mxu_dtype)          # kept dense: single K=D out-proj

    # Cost hint for XLA scheduling around the custom call.
    flops = int(B * (2 * Sq * D * D                    # q projection
                     + nq * 2 * 2 * Skv * Dk * D       # k/v projections (per q tile)
                     + 4 * Sq * Skv * D                # QK^T + P.V over all heads
                     + 2 * Sq * D * D))                # output projection
    transcendentals = int(B * num_heads * Sq * Skv)
    itemsize = jnp.dtype(hidden_states.dtype).itemsize
    w_itemsize = jnp.dtype(mxu_dtype).itemsize
    bytes_accessed = int((hidden_states.size + ctx.size + B * Sq * D) * itemsize
                         + (wq_hb.size + wk_hb.size + wv_hb.size + wo.size) * w_itemsize)

    kernel = functools.partial(_flash_attn_kernel, scale=scale, mxu_dtype=mxu_dtype)

    # NOTE: at the demo size D=32 the output stores are lane-masked; at real
    # UNet widths (320..1280) the (tq, D) output tile is lane-dense.
    return pl.pallas_call(
        kernel,
        out_shape=jax.ShapeDtypeStruct((B, Sq, D), hidden_states.dtype),
        grid_spec=pltpu.PrefetchScalarGridSpec(
            num_scalar_prefetch=0,
            grid=(B, nq, nk),                      # KV (reduction) axis last
            in_specs=[
                pl.BlockSpec((1, tq, D), lambda b, qi, ki: (b, qi, 0)),
                pl.BlockSpec((1, tk, Dk), lambda b, qi, ki: (b, ki, 0)),
                _resident_weight_spec((num_heads, D, head_dim)),
                _resident_weight_spec((num_heads, Dk, head_dim)),
                _resident_weight_spec((num_heads, Dk, head_dim)),
                _resident_weight_spec((D, D)),
            ],
            out_specs=pl.BlockSpec((1, tq, D), lambda b, qi, ki: (b, qi, 0)),
            scratch_shapes=[
                pltpu.VMEM((num_heads, tq, head_dim), mxu_dtype),   # q (head-major)
                pltpu.VMEM((num_heads, tq, 1), jnp.float32),        # running max
                pltpu.VMEM((num_heads, tq, 1), jnp.float32),        # running denom
                pltpu.VMEM((num_heads, tq, head_dim), jnp.float32), # running P.V
                pltpu.VMEM((tq, D), jnp.float32),                   # merged heads
            ],
        ),
        compiler_params=pltpu.CompilerParams(
            dimension_semantics=("parallel", "parallel", "arbitrary"),
            vmem_limit_bytes=_vmem_limit_bytes(),
        ),
        cost_estimate=pl.CostEstimate(
            flops=flops,
            transcendentals=transcendentals,
            bytes_accessed=bytes_accessed,
        ),
    )(hidden_states, ctx, wq_hb, wk_hb, wv_hb, wo)


# ---------------------------------------------------------------------------
# CubemapAttention forward (matches the PyTorch wrapper semantics)
# ---------------------------------------------------------------------------
def cubemap_attention_forward(hidden_states, params, num_heads,
                              encoder_hidden_states=None, **kw):
    batch_size, sequence_length, dim = hidden_states.shape
    if batch_size % 6 == 0:
        actual_batch = batch_size // 6
        hs = hidden_states.reshape(actual_batch, 6 * sequence_length, dim)
        ehs = encoder_hidden_states
        if ehs is not None and ehs.shape[0] == batch_size:
            ehs = ehs.reshape(actual_batch, 6 * ehs.shape[1], ehs.shape[2])
        result = original_attention(hs, params, num_heads,
                                    encoder_hidden_states=ehs, **kw)
        return result.reshape(batch_size, sequence_length, dim)
    return original_attention(hidden_states, params, num_heads,
                              encoder_hidden_states=encoder_hidden_states, **kw)


# ---------------------------------------------------------------------------
# Plain-JAX reference (no Pallas) for correctness checks
# ---------------------------------------------------------------------------
def _reference_attention(hs, params, num_heads):
    B, S, D = hs.shape
    Hd = D // num_heads
    scale = float(Hd) ** -0.5
    hp = jax.lax.Precision.HIGHEST
    q = jnp.einsum("bsd,de->bse", hs, params["wq"], precision=hp)
    k = jnp.einsum("bsd,de->bse", hs, params["wk"], precision=hp)
    v = jnp.einsum("bsd,de->bse", hs, params["wv"], precision=hp)
    q = q.reshape(B, S, num_heads, Hd)
    k = k.reshape(B, S, num_heads, Hd)
    v = v.reshape(B, S, num_heads, Hd)
    s = jnp.einsum("bqhd,bkhd->bhqk", q, k, precision=hp) * scale
    p = jax.nn.softmax(s, axis=-1)
    o = jnp.einsum("bhqk,bkhd->bqhd", p, v, precision=hp).reshape(B, S, D)
    return jnp.einsum("bsd,de->bse", o, params["wo"], precision=hp)


def reference_forward(hidden_states, params, num_heads):
    B, S, D = hidden_states.shape
    if B % 6 == 0:
        hs = hidden_states.reshape(B // 6, 6 * S, D)
        return _reference_attention(hs, params, num_heads).reshape(B, S, D)
    return _reference_attention(hidden_states, params, num_heads)


if __name__ == "__main__":
    # 6 cubemap faces x actual_batch=2, seq=16, dim=32, 4 heads.
    # Fused sequence 6*16 = 96; tiles 48/32 give grid (2, 2, 3) so the flash
    # init / accumulate / finalize paths and both parallel axes are exercised.
    batch, seq, dim, num_heads = 12, 16, 32, 4

    key = jax.random.PRNGKey(0)
    kx, kq, kk, kv, ko = jax.random.split(key, 5)
    hidden_states = jax.random.normal(kx, (batch, seq, dim), dtype=jnp.float32)
    params = {
        "wq": jax.random.normal(kq, (dim, dim), dtype=jnp.float32) * 0.1,
        "wk": jax.random.normal(kk, (dim, dim), dtype=jnp.float32) * 0.1,
        "wv": jax.random.normal(kv, (dim, dim), dtype=jnp.float32) * 0.1,
        "wo": jax.random.normal(ko, (dim, dim), dtype=jnp.float32) * 0.1,
    }

    ref = jax.block_until_ready(reference_forward(hidden_states, params, num_heads))

    # Production path: bf16 MXU operands, f32 accumulation + f32 softmax.
    out = jax.block_until_ready(cubemap_attention_forward(
        hidden_states, params, num_heads, q_tile=48, kv_tile=32))
    assert out.shape == (batch, seq, dim)
    err_bf16 = float(jnp.max(jnp.abs(out - ref)))
    # Tolerance covers bf16 rounding of MXU operands vs. the f32 HIGHEST reference.
    assert jnp.allclose(out, ref, atol=3e-2, rtol=3e-2), err_bf16

    # Algorithmic check of the flash/online-softmax structure at full f32 precision.
    out_f32 = jax.block_until_ready(cubemap_attention_forward(
        hidden_states, params, num_heads, q_tile=48, kv_tile=32,
        mxu_dtype=jnp.float32))
    err_f32 = float(jnp.max(jnp.abs(out_f32 - ref)))
    assert jnp.allclose(out_f32, ref, atol=2e-3, rtol=2e-3), err_f32

    print("KERNEL_OK")
</pallas_src>

<mosaic_0001>
module attributes {stable_mosaic.version = 11 : i64} {
  func.func @_flash_attn_kernel(%arg0: i32, %arg1: i32, %arg2: i32, %arg3: memref<1x48x32xf32, #tpu.memory_space<vmem>>, %arg4: memref<1x32x32xf32, #tpu.memory_space<vmem>>, %arg5: memref<4x32x8xbf16, #tpu.memory_space<vmem>>, %arg6: memref<4x32x8xbf16, #tpu.memory_space<vmem>>, %arg7: memref<4x32x8xbf16, #tpu.memory_space<vmem>>, %arg8: memref<32x32xbf16, #tpu.memory_space<vmem>>, %arg9: memref<1x48x32xf32, #tpu.memory_space<vmem>>, %arg10: memref<4x48x8xbf16, #tpu.memory_space<vmem>>, %arg11: memref<4x48x1xf32, #tpu.memory_space<vmem>>, %arg12: memref<4x48x1xf32, #tpu.memory_space<vmem>>, %arg13: memref<4x48x8xf32, #tpu.memory_space<vmem>>, %arg14: memref<48x32xf32, #tpu.memory_space<vmem>>) attributes {dimension_semantics = [#tpu.dimension_semantics<parallel>, #tpu.dimension_semantics<parallel>, #tpu.dimension_semantics<arbitrary>], iteration_bounds = array<i64: 2, 2, 3>, scalar_prefetch = 0 : i64, scratch_operands = 5 : i64, tpu.core_type = #tpu.core_type<tc>, window_params = [{transform_indices = @transform_0, window_bounds = array<i64: 1, 48, 32>}, {transform_indices = @transform_1, window_bounds = array<i64: 1, 32, 32>}, {pipeline_mode = #tpu.pipeline_mode<synchronous>, transform_indices = @transform_2, window_bounds = array<i64: 4, 32, 8>}, {pipeline_mode = #tpu.pipeline_mode<synchronous>, transform_indices = @transform_3, window_bounds = array<i64: 4, 32, 8>}, {pipeline_mode = #tpu.pipeline_mode<synchronous>, transform_indices = @transform_4, window_bounds = array<i64: 4, 32, 8>}, {pipeline_mode = #tpu.pipeline_mode<synchronous>, transform_indices = @transform_5, window_bounds = array<i64: 32, 32>}, {transform_indices = @transform_6, window_bounds = array<i64: 1, 48, 32>}]} {
    %c0_i32 = arith.constant 0 : i32
    %0 = arith.cmpi eq, %arg2, %c0_i32 : i32
    %1 = arith.extui %0 : i1 to i32
    %c0_i32_0 = arith.constant 0 : i32
    %2 = arith.cmpi ne, %1, %c0_i32_0 : i32
    scf.if %2 {
      %c0_36 = arith.constant 0 : index
      %c0_37 = arith.constant 0 : index
      %c0_38 = arith.constant 0 : index
      %43 = vector.load %arg3[%c0_36, %c0_37, %c0_38] : memref<1x48x32xf32, #tpu.memory_space<vmem>>, vector<1x48x32xf32>
      %44 = vector.shape_cast %43 : vector<1x48x32xf32> to vector<48x32xf32>
      %45 = arith.truncf %44 : vector<48x32xf32> to vector<48x32xbf16>
      %46 = vector.shape_cast %45 : vector<48x32xbf16> to vector<1x48x32xbf16>
      %47 = vector.shape_cast %46 : vector<1x48x32xbf16> to vector<1x48x32xbf16>
      %48 = vector.broadcast %47 : vector<1x48x32xbf16> to vector<4x48x32xbf16>
      %c0_39 = arith.constant 0 : index
      %c0_40 = arith.constant 0 : index
      %c0_41 = arith.constant 0 : index
      %49 = vector.load %arg5[%c0_39, %c0_40, %c0_41] : memref<4x32x8xbf16, #tpu.memory_space<vmem>>, vector<4x32x8xbf16>
      "tpu.trace_start"() <{level = 10 : i32, message = "hqd,hde->hqe"}> : () -> ()
      %cst_42 = arith.constant dense<0.000000e+00> : vector<4x48x8xf32>
      %50 = tpu.matmul %48, %49, %cst_42 {dimension_numbers = #tpu.dot_dimension_numbers<[2], [1], [1], [2], [0, 0, 0, 1, 1, 2], [0], [0]>} : vector<4x48x32xbf16>, vector<4x32x8xbf16>, vector<4x48x8xf32> -> vector<4x48x8xf32>
      "tpu.trace_stop"() : () -> ()
      %cst_43 = arith.constant 0.353553385 : f32
      %51 = vector.broadcast %cst_43 : f32 to vector<4x48x8xf32>
      %52 = arith.mulf %50, %51 : vector<4x48x8xf32>
      %53 = arith.truncf %52 : vector<4x48x8xf32> to vector<4x48x8xbf16>
      %c0_44 = arith.constant 0 : index
      %c0_45 = arith.constant 0 : index
      %c0_46 = arith.constant 0 : index
      %54 = vector.load %arg10[%c0_44, %c0_45, %c0_46] : memref<4x48x8xbf16, #tpu.memory_space<vmem>>, vector<4x48x8xbf16>
      tpu.vector_store %arg10[%c0_44, %c0_45, %c0_46], %53 {strides = array<i32>} : memref<4x48x8xbf16, #tpu.memory_space<vmem>>, vector<4x48x8xbf16>,
      %cst_47 = arith.constant 0xFF800000 : f32
      %55 = vector.broadcast %cst_47 : f32 to vector<4x48x1xf32>
      %c0_48 = arith.constant 0 : index
      %c0_49 = arith.constant 0 : index
      %c0_50 = arith.constant 0 : index
      %56 = vector.load %arg11[%c0_48, %c0_49, %c0_50] : memref<4x48x1xf32, #tpu.memory_space<vmem>>, vector<4x48x1xf32>
      tpu.vector_store %arg11[%c0_48, %c0_49, %c0_50], %55 {strides = array<i32>} : memref<4x48x1xf32, #tpu.memory_space<vmem>>, vector<4x48x1xf32>,
      %cst_51 = arith.constant 0.000000e+00 : f32
      %57 = vector.broadcast %cst_51 : f32 to vector<4x48x1xf32>
      %c0_52 = arith.constant 0 : index
      %c0_53 = arith.constant 0 : index
      %c0_54 = arith.constant 0 : index
      %58 = vector.load %arg12[%c0_52, %c0_53, %c0_54] : memref<4x48x1xf32, #tpu.memory_space<vmem>>, vector<4x48x1xf32>
      tpu.vector_store %arg12[%c0_52, %c0_53, %c0_54], %57 {strides = array<i32>} : memref<4x48x1xf32, #tpu.memory_space<vmem>>, vector<4x48x1xf32>,
      %cst_55 = arith.constant 0.000000e+00 : f32
      %59 = vector.broadcast %cst_55 : f32 to vector<4x48x8xf32>
      %c0_56 = arith.constant 0 : index
      %c0_57 = arith.constant 0 : index
      %c0_58 = arith.constant 0 : index
      %60 = vector.load %arg13[%c0_56, %c0_57, %c0_58] : memref<4x48x8xf32, #tpu.memory_space<vmem>>, vector<4x48x8xf32>
      tpu.vector_store %arg13[%c0_56, %c0_57, %c0_58], %59 {strides = array<i32>} : memref<4x48x8xf32, #tpu.memory_space<vmem>>, vector<4x48x8xf32>,
    } else {
    }
    %c0 = arith.constant 0 : index
    %c0_1 = arith.constant 0 : index
    %c0_2 = arith.constant 0 : index
    %3 = vector.load %arg4[%c0, %c0_1, %c0_2] : memref<1x32x32xf32, #tpu.memory_space<vmem>>, vector<1x32x32xf32>
    %4 = vector.shape_cast %3 : vector<1x32x32xf32> to vector<32x32xf32>
    %5 = arith.truncf %4 : vector<32x32xf32> to vector<32x32xbf16>
    %6 = vector.shape_cast %5 : vector<32x32xbf16> to vector<1x32x32xbf16>
    %7 = vector.shape_cast %6 : vector<1x32x32xbf16> to vector<1x32x32xbf16>
    %8 = vector.broadcast %7 : vector<1x32x32xbf16> to vector<4x32x32xbf16>
    %c0_3 = arith.constant 0 : index
    %c0_4 = arith.constant 0 : index
    %c0_5 = arith.constant 0 : index
    %9 = vector.load %arg6[%c0_3, %c0_4, %c0_5] : memref<4x32x8xbf16, #tpu.memory_space<vmem>>, vector<4x32x8xbf16>
    "tpu.trace_start"() <{level = 10 : i32, message = "hkd,hde->hke"}> : () -> ()
    %cst = arith.constant dense<0.000000e+00> : vector<4x32x8xf32>
    %10 = tpu.matmul %8, %9, %cst {dimension_numbers = #tpu.dot_dimension_numbers<[2], [1], [1], [2], [0, 0, 0, 1, 1, 2], [0], [0]>} : vector<4x32x32xbf16>, vector<4x32x8xbf16>, vector<4x32x8xf32> -> vector<4x32x8xf32>
    "tpu.trace_stop"() : () -> ()
    %11 = arith.truncf %10 : vector<4x32x8xf32> to vector<4x32x8xbf16>
    %c0_6 = arith.constant 0 : index
    %c0_7 = arith.constant 0 : index
    %c0_8 = arith.constant 0 : index
    %12 = vector.load %arg7[%c0_6, %c0_7, %c0_8] : memref<4x32x8xbf16, #tpu.memory_space<vmem>>, vector<4x32x8xbf16>
    "tpu.trace_start"() <{level = 10 : i32, message = "hkd,hde->hke"}> : () -> ()
    %cst_9 = arith.constant dense<0.000000e+00> : vector<4x32x8xf32>
    %13 = tpu.matmul %8, %12, %cst_9 {dimension_numbers = #tpu.dot_dimension_numbers<[2], [1], [1], [2], [0, 0, 0, 1, 1, 2], [0], [0]>} : vector<4x32x32xbf16>, vector<4x32x8xbf16>, vector<4x32x8xf32> -> vector<4x32x8xf32>
    "tpu.trace_stop"() : () -> ()
    %14 = arith.truncf %13 : vector<4x32x8xf32> to vector<4x32x8xbf16>
    %c0_10 = arith.constant 0 : index
    %c0_11 = arith.constant 0 : index
    %c0_12 = arith.constant 0 : index
    %15 = vector.load %arg10[%c0_10, %c0_11, %c0_12] : memref<4x48x8xbf16, #tpu.memory_space<vmem>>, vector<4x48x8xbf16>
    "tpu.trace_start"() <{level = 10 : i32, message = "hqe,hke->hqk"}> : () -> ()
    %cst_13 = arith.constant dense<0.000000e+00> : vector<4x48x32xf32>
    %16 = tpu.matmul %15, %11, %cst_13 {dimension_numbers = #tpu.dot_dimension_numbers<[2], [2], [1], [1], [0, 0, 0, 1, 1, 1], [0], [0]>} : vector<4x48x8xbf16>, vector<4x32x8xbf16>, vector<4x48x32xf32> -> vector<4x48x32xf32>
    "tpu.trace_stop"() : () -> ()
    %c0_14 = arith.constant 0 : index
    %c0_15 = arith.constant 0 : index
    %c0_16 = arith.constant 0 : index
    %17 = vector.load %arg11[%c0_14, %c0_15, %c0_16] : memref<4x48x1xf32, #tpu.memory_space<vmem>>, vector<4x48x1xf32>
    %cst_17 = arith.constant dense<0xFF800000> : vector<4x48xf32>
    %18 = vector.multi_reduction <maximumf>, %16, %cst_17 [2] : vector<4x48x32xf32> to vector<4x48xf32>
    %19 = vector.shape_cast %18 : vector<4x48xf32> to vector<4x48x1xf32>
    %20 = arith.maximumf %17, %19 : vector<4x48x1xf32>
    %21 = arith.subf %17, %20 : vector<4x48x1xf32>
    %22 = math.exp %21 : vector<4x48x1xf32>
    %23 = vector.broadcast %20 : vector<4x48x1xf32> to vector<4x48x32xf32>
    %24 = arith.subf %16, %23 : vector<4x48x32xf32>
    %25 = math.exp %24 : vector<4x48x32xf32>
    %c0_18 = arith.constant 0 : index
    %c0_19 = arith.constant 0 : index
    %c0_20 = arith.constant 0 : index
    %26 = vector.load %arg12[%c0_18, %c0_19, %c0_20] : memref<4x48x1xf32, #tpu.memory_space<vmem>>, vector<4x48x1xf32>
    %27 = arith.mulf %22, %26 : vector<4x48x1xf32>
    %cst_21 = arith.constant dense<0.000000e+00> : vector<4x48xf32>
    %28 = vector.multi_reduction <add>, %25, %cst_21 [2] : vector<4x48x32xf32> to vector<4x48xf32>
    %29 = vector.shape_cast %28 : vector<4x48xf32> to vector<4x48x1xf32>
    %30 = arith.addf %27, %29 : vector<4x48x1xf32>
    %c0_22 = arith.constant 0 : index
    %c0_23 = arith.constant 0 : index
    %c0_24 = arith.constant 0 : index
    %31 = vector.load %arg12[%c0_22, %c0_23, %c0_24] : memref<4x48x1xf32, #tpu.memory_space<vmem>>, vector<4x48x1xf32>
    tpu.vector_store %arg12[%c0_22, %c0_23, %c0_24], %30 {strides = array<i32>} : memref<4x48x1xf32, #tpu.memory_space<vmem>>, vector<4x48x1xf32>,
    %c0_25 = arith.constant 0 : index
    %c0_26 = arith.constant 0 : index
    %c0_27 = arith.constant 0 : index
    %32 = vector.load %arg13[%c0_25, %c0_26, %c0_27] : memref<4x48x8xf32, #tpu.memory_space<vmem>>, vector<4x48x8xf32>
    %33 = vector.broadcast %22 : vector<4x48x1xf32> to vector<4x48x8xf32>
    %34 = arith.mulf %33, %32 : vector<4x48x8xf32>
    %35 = arith.truncf %25 : vector<4x48x32xf32> to vector<4x48x32xbf16>
    "tpu.trace_start"() <{level = 10 : i32, message = "hqk,hke->hqe"}> : () -> ()
    %cst_28 = arith.constant dense<0.000000e+00> : vector<4x48x8xf32>
    %36 = tpu.matmul %35, %14, %cst_28 {dimension_numbers = #tpu.dot_dimension_numbers<[2], [1], [1], [2], [0, 0, 0, 1, 1, 2], [0], [0]>} : vector<4x48x32xbf16>, vector<4x32x8xbf16>, vector<4x48x8xf32> -> vector<4x48x8xf32>
    "tpu.trace_stop"() : () -> ()
    %37 = arith.addf %34, %36 : vector<4x48x8xf32>
    %c0_29 = arith.constant 0 : index
    %c0_30 = arith.constant 0 : index
    %c0_31 = arith.constant 0 : index
    %38 = vector.load %arg13[%c0_29, %c0_30, %c0_31] : memref<4x48x8xf32, #tpu.memory_space<vmem>>, vector<4x48x8xf32>
    tpu.vector_store %arg13[%c0_29, %c0_30, %c0_31], %37 {strides = array<i32>} : memref<4x48x8xf32, #tpu.memory_space<vmem>>, vector<4x48x8xf32>,
    %c0_32 = arith.constant 0 : index
    %c0_33 = arith.constant 0 : index
    %c0_34 = arith.constant 0 : index
    %39 = vector.load %arg11[%c0_32, %c0_33, %c0_34] : memref<4x48x1xf32, #tpu.memory_space<vmem>>, vector<4x48x1xf32>
    tpu.vector_store %arg11[%c0_32, %c0_33, %c0_34], %20 {strides = array<i32>} : memref<4x48x1xf32, #tpu.memory_space<vmem>>, vector<4x48x1xf32>,
    %c2_i32 = arith.constant 2 : i32
    %40 = arith.cmpi eq, %arg2, %c2_i32 : i32
    %41 = arith.extui %40 : i1 to i32
    %c0_i32_35 = arith.constant 0 : i32
    %42 = arith.cmpi ne, %41, %c0_i32_35 : i32
    scf.if %42 {
      %c0_36 = arith.constant 0 : index
      %c0_37 = arith.constant 0 : index
      %c0_38 = arith.constant 0 : index
      %43 = vector.load %arg12[%c0_36, %c0_37, %c0_38] : memref<4x48x1xf32, #tpu.memory_space<vmem>>, vector<4x48x1xf32>
      %44 = tpu.reciprocal %43 : vector<4x48x1xf32> -> vector<4x48x1xf32>
      %c0_39 = arith.constant 0 : index
      %c0_40 = arith.constant 0 : index
      %c0_41 = arith.constant 0 : index
      %45 = vector.load %arg13[%c0_39, %c0_40, %c0_41] : memref<4x48x8xf32, #tpu.memory_space<vmem>>, vector<4x48x8xf32>
      %46 = vector.broadcast %44 : vector<4x48x1xf32> to vector<4x48x8xf32>
      %47 = arith.mulf %45, %46 : vector<4x48x8xf32>
      %48 = vector.extract_strided_slice %47 {offsets = [0, 0, 0], sizes = [1, 48, 8], strides = [1, 1, 1]} : vector<4x48x8xf32> to vector<1x48x8xf32>
      %49 = vector.shape_cast %48 : vector<1x48x8xf32> to vector<48x8xf32>
      %c0_42 = arith.constant 0 : index
      %c0_43 = arith.constant 0 : index
      %50 = vector.load %arg14[%c0_42, %c0_43] : memref<48x32xf32, #tpu.memory_space<vmem>>, vector<48x8xf32>
      tpu.vector_store %arg14[%c0_42, %c0_43], %49 {strides = array<i32>} : memref<48x32xf32, #tpu.memory_space<vmem>>, vector<48x8xf32>,
      %51 = vector.extract_strided_slice %47 {offsets = [1, 0, 0], sizes = [1, 48, 8], strides = [1, 1, 1]} : vector<4x48x8xf32> to vector<1x48x8xf32>
      %52 = vector.shape_cast %51 : vector<1x48x8xf32> to vector<48x8xf32>
      %c0_44 = arith.constant 0 : index
      %c8 = arith.constant 8 : index
      %53 = vector.load %arg14[%c0_44, %c8] : memref<48x32xf32, #tpu.memory_space<vmem>>, vector<48x8xf32>
      tpu.vector_store %arg14[%c0_44, %c8], %52 {strides = array<i32>} : memref<48x32xf32, #tpu.memory_space<vmem>>, vector<48x8xf32>,
      %54 = vector.extract_strided_slice %47 {offsets = [2, 0, 0], sizes = [1, 48, 8], strides = [1, 1, 1]} : vector<4x48x8xf32> to vector<1x48x8xf32>
      %55 = vector.shape_cast %54 : vector<1x48x8xf32> to vector<48x8xf32>
      %c0_45 = arith.constant 0 : index
      %c16 = arith.constant 16 : index
      %56 = vector.load %arg14[%c0_45, %c16] : memref<48x32xf32, #tpu.memory_space<vmem>>, vector<48x8xf32>
      tpu.vector_store %arg14[%c0_45, %c16], %55 {strides = array<i32>} : memref<48x32xf32, #tpu.memory_space<vmem>>, vector<48x8xf32>,
      %57 = vector.extract_strided_slice %47 {offsets = [3, 0, 0], sizes = [1, 48, 8], strides = [1, 1, 1]} : vector<4x48x8xf32> to vector<1x48x8xf32>
      %58 = vector.shape_cast %57 : vector<1x48x8xf32> to vector<48x8xf32>
      %c0_46 = arith.constant 0 : index
      %c24 = arith.constant 24 : index
      %59 = vector.load %arg14[%c0_46, %c24] : memref<48x32xf32, #tpu.memory_space<vmem>>, vector<48x8xf32>
      tpu.vector_store %arg14[%c0_46, %c24], %58 {strides = array<i32>} : memref<48x32xf32, #tpu.memory_space<vmem>>, vector<48x8xf32>,
      %c0_47 = arith.constant 0 : index
      %c0_48 = arith.constant 0 : index
      %60 = vector.load %arg14[%c0_47, %c0_48] : memref<48x32xf32, #tpu.memory_space<vmem>>, vector<48x32xf32>
      %61 = arith.truncf %60 : vector<48x32xf32> to vector<48x32xbf16>
      %c0_49 = arith.constant 0 : index
      %c0_50 = arith.constant 0 : index
      %62 = vector.load %arg8[%c0_49, %c0_50] : memref<32x32xbf16, #tpu.memory_space<vmem>>, vector<32x32xbf16>
      %cst_51 = arith.constant dense<0.000000e+00> : vector<48x32xf32>
      %63 = tpu.matmul %61, %62, %cst_51 {dimension_numbers = #tpu.dot_dimension_numbers<[1], [0], [0], [1], [0, 0, 1, 1], [], []>} : vector<48x32xbf16>, vector<32x32xbf16>, vector<48x32xf32> -> vector<48x32xf32>
      %c0_52 = arith.constant 0 : index
      %c0_53 = arith.constant 0 : index
      %c0_54 = arith.constant 0 : index
      %64 = vector.load %arg9[%c0_52, %c0_53, %c0_54] : memref<1x48x32xf32, #tpu.memory_space<vmem>>, vector<1x48x32xf32>
      %65 = vector.shape_cast %64 : vector<1x48x32xf32> to vector<48x32xf32>
      %66 = vector.shape_cast %63 : vector<48x32xf32> to vector<1x48x32xf32>
      tpu.vector_store %arg9[%c0_52, %c0_53, %c0_54], %66 {strides = array<i32>} : memref<1x48x32xf32, #tpu.memory_space<vmem>>, vector<1x48x32xf32>,
    } else {
    }
    return
  }
  func.func @transform_0(%arg0: i32, %arg1: i32, %arg2: i32) -> (i32, i32, i32) {
    %c0_i32 = arith.constant 0 : i32
    %c0_i32_0 = arith.constant 0 : i32
    return %arg0, %arg1, %c0_i32 : i32, i32, i32
  }
  func.func @transform_1(%arg0: i32, %arg1: i32, %arg2: i32) -> (i32, i32, i32) {
    %c0_i32 = arith.constant 0 : i32
    %c0_i32_0 = arith.constant 0 : i32
    return %arg0, %arg2, %c0_i32 : i32, i32, i32
  }
  func.func @transform_2(%arg0: i32, %arg1: i32, %arg2: i32) -> (i32, i32, i32) {
    %c0_i32 = arith.constant 0 : i32
    %c0_i32_0 = arith.constant 0 : i32
    %c0_i32_1 = arith.constant 0 : i32
    %c0_i32_2 = arith.constant 0 : i32
    return %c0_i32, %c0_i32_0, %c0_i32_1 : i32, i32, i32
  }
  func.func @transform_3(%arg0: i32, %arg1: i32, %arg2: i32) -> (i32, i32, i32) {
    %c0_i32 = arith.constant 0 : i32
    %c0_i32_0 = arith.constant 0 : i32
    %c0_i32_1 = arith.constant 0 : i32
    %c0_i32_2 = arith.constant 0 : i32
    return %c0_i32, %c0_i32_0, %c0_i32_1 : i32, i32, i32
  }
  func.func @transform_4(%arg0: i32, %arg1: i32, %arg2: i32) -> (i32, i32, i32) {
    %c0_i32 = arith.constant 0 : i32
    %c0_i32_0 = arith.constant 0 : i32
    %c0_i32_1 = arith.constant 0 : i32
    %c0_i32_2 = arith.constant 0 : i32
    return %c0_i32, %c0_i32_0, %c0_i32_1 : i32, i32, i32
  }
  func.func @transform_5(%arg0: i32, %arg1: i32, %arg2: i32) -> (i32, i32) {
    %c0_i32 = arith.constant 0 : i32
    %c0_i32_0 = arith.constant 0 : i32
    %c0_i32_1 = arith.constant 0 : i32
    return %c0_i32, %c0_i32_0 : i32, i32
  }
  func.func @transform_6(%arg0: i32, %arg1: i32, %arg2: i32) -> (i32, i32, i32) {
    %c0_i32 = arith.constant 0 : i32
    %c0_i32_0 = arith.constant 0 : i32
    return %arg0, %arg1, %c0_i32 : i32, i32, i32
  }
}

</mosaic_0001>

<llo_original>
// kernel: tpu_custom_call.1
$region0: #{tpu_custom_call.1}
  #allocation0 [shape = 'u32[]', space=smem, size = 0x4, offset = 0x4, fixed_abs, tag = 'smem constant byte address 0x4 - core index']
  #allocation1 [shape = 'u32[72,128]{1,0:T(1,128)}', space=vmem, size = 0x9000, scoped, tag = 'internal scratch']
  #allocation2 [shape = 'bf16[4,48,8]{2,1,0:T(8,128)(2,1)}', space=vmem, size = 0xc000, scoped, tag = 'scratch operand']
  #allocation3 [shape = 'f32[4,48,1]{2,1,0:T(8,128)}', space=vmem, size = 0x18000, scoped, tag = 'scratch operand']
  #allocation4 [shape = 'f32[4,48,1]{2,1,0:T(8,128)}', space=vmem, size = 0x18000, scoped, tag = 'scratch operand']
  #allocation5 [shape = 'f32[4,48,8]{2,1,0:T(8,128)}', space=vmem, size = 0x18000, scoped, tag = 'scratch operand']
  #allocation6 [shape = 'f32[48,32]{1,0:T(8,128)}', space=vmem, size = 0x6000, scoped, tag = 'scratch operand']
  %s0 = inlined_call_operand.vmem [shape: f32[2,96,32], index: 0, kind: input, shape index: {}]
  %s1 = inlined_call_operand.vmem [shape: f32[2,96,32], index: 1, kind: input, shape index: {}]
  %s2 = inlined_call_operand.vmem [shape: bf16[4,32,8], index: 2, kind: input, shape index: {}]
  %s3 = inlined_call_operand.vmem [shape: bf16[4,32,8], index: 3, kind: input, shape index: {}]
  %s4 = inlined_call_operand.vmem [shape: bf16[4,32,8], index: 4, kind: input, shape index: {}]
  %s5 = inlined_call_operand.vmem [shape: bf16[32,32], index: 5, kind: input, shape index: {}]
  %s6 = inlined_call_operand.vmem [shape: f32[2,96,32], index: 6, kind: output, shape index: {}]
  %s7 = sld [smem:[#allocation0]]
  $region65: #{tpu_custom_call.1} parent=0
    _
  %s9 = ssub.s32 1, %s7
  %s10 = scalar_select 0, %s9, %s7
  loop: start=0, step=1, limit=14
  $region2: #{tpu_custom_call.1} parent=0 // loop_pre_header
    _
  $region3: #{tpu_custom_call.1} parent=0 // loop_header
    %s12 = sphi 0, %s16
    %p13 = scmp.ge.s32.totalorder %s12, 14
    %s19 = sphi 0, %s38
    %s20 = sphi 0, %s34
    %s21 = sphi 0, %s30
    %s22 = sphi 0, %s19
    %s23 = sphi 0, %s20
    %s24 = sphi 0, %s21
    %s25 = sphi 0, %s22
    %s26 = sphi 0, %s23
    %s27 = sphi 0, %s24
    %s43 = sphi 0, %s45
    %s46 = sphi 0, %s43
    %s47 = sphi 0, %s46
    %s63 = sphi 0, %s47
    %s71 = sphi 0, %s73
    %s74 = sphi 0, %s71
    %s75 = sphi 0, %s74
    %s91 = sphi 0, %s75
    %s95 = sphi 0, %s95
    %s97 = sphi 0, %s95
    %s98 = sphi 0, %s97
    %s112 = sphi 0, %s98
    %s116 = sphi 0, %s116
    %s118 = sphi 0, %s116
    %s119 = sphi 0, %s118
    %s133 = sphi 0, %s119
    %s137 = sphi 0, %s137
    %s139 = sphi 0, %s137
    %s140 = sphi 0, %s139
    %s154 = sphi 0, %s140
    %s158 = sphi 0, %s158
    %s160 = sphi 0, %s158
    %s161 = sphi 0, %s160
    %s175 = sphi 0, %s161
    %s183 = sphi 0, %s185
    %s186 = sphi 0, %s183
    %s187 = sphi 0, %s186
    %s203 = sphi 0, %s187
  $region4: #{tpu_custom_call.1} parent=0 // loop_header_branch
    %15 = sbr.rel (%p13) target = $region8
  $region5: #{tpu_custom_call.1} parent=0 // loop_body
    %s17 = ssub.s32 %s12, 1
    %s18 = ssub.s32 %s12, 2
    %s28 = sadd.s32 1, %s21
    %p29 = scmp.ge.s32.totalorder %s28, 3
    %s30 = scalar_select %p29, 0, %s28
    %s31 = sadd.s32 1, %s20
    %s32 = scalar_select %p29, %s31, %s20
    %p33 = scmp.ge.s32.totalorder %s32, 2
    %s34 = scalar_select %p33, 0, %s32
    %s35 = sadd.s32 1, %s19
    %s36 = scalar_select %p33, %s35, %s19
    %p37 = scmp.ge.s32.totalorder %s36, 2
    %s38 = scalar_select %p37, 0, %s36
    %s39 = ssub.s32 %s19, %s38
    %s40 = ssub.s32 %s20, %s34
    %s41 = sor.u32 %s39, %s40
    %p42 = scmp.eq.s32.totalorder %s41, 0
    %s44 = sadd.s32 %s43, 1
    %s45 = scalar_select %p42, %s43, %s44
    %p48 = pneg %p42
    %p49 = scmp.eq.s32.totalorder %s12, 11
    %p50 = por %p48, %p49
    %p51 = scmp.ne.s32.totalorder %s43, %s46
    %p52 = scmp.eq.s32.totalorder %s12, 0
    %p53 = por %p51, %p52
    %p54 = scmp.ne.s32.totalorder %s43, %s46
    %p55 = scmp.eq.s32.totalorder %s17, 11
    %p56 = por %p54, %p55
    %p57 = scmp.ne.s32.totalorder %s46, %s47
    %p58 = scmp.eq.s32.totalorder %s17, 0
    %p59 = por %p57, %p58
    %p60 = scmp.ne.s32.totalorder %s46, %s47
    %p61 = scmp.eq.s32.totalorder %s18, 11
    %p62 = por %p60, %p61
    %p64 = scmp.ne.s32.totalorder %s47, %s63
    %p65 = scmp.eq.s32.totalorder %s18, 0
    %p66 = por %p64, %p65
    %s67 = ssub.s32 %s19, %s38
    %s68 = ssub.s32 %s21, %s30
    %s69 = sor.u32 %s67, %s68
    %p70 = scmp.eq.s32.totalorder %s69, 0
    %s72 = sadd.s32 %s71, 1
    %s73 = scalar_select %p70, %s71, %s72
    %p76 = pneg %p70
    %p77 = scmp.eq.s32.totalorder %s12, 11
    %p78 = por %p76, %p77
    %p79 = scmp.ne.s32.totalorder %s71, %s74
    %p80 = scmp.eq.s32.totalorder %s12, 0
    %p81 = por %p79, %p80
    %p82 = scmp.ne.s32.totalorder %s71, %s74
    %p83 = scmp.eq.s32.totalorder %s17, 11
    %p84 = por %p82, %p83
    %p85 = scmp.ne.s32.totalorder %s74, %s75
    %p86 = scmp.eq.s32.totalorder %s17, 0
    %p87 = por %p85, %p86
    %p88 = scmp.ne.s32.totalorder %s74, %s75
    %p89 = scmp.eq.s32.totalorder %s18, 11
    %p90 = por %p88, %p89
    %p92 = scmp.ne.s32.totalorder %s75, %s91
    %p93 = scmp.eq.s32.totalorder %s18, 0
    %p94 = por %p92, %p93
    %s96 = sadd.s32 %s95, 1
    %p99 = scmp.eq.s32.totalorder %s12, 11
    %p100 = scmp.ne.s32.totalorder %s95, %s97
    %p101 = scmp.eq.s32.totalorder %s12, 0
    %p102 = por %p100, %p101
    %p103 = scmp.ne.s32.totalorder %s95, %s97
    %p104 = scmp.eq.s32.totalorder %s17, 11
    %p105 = por %p103, %p104
    %p106 = scmp.ne.s32.totalorder %s97, %s98
    %p107 = scmp.eq.s32.totalorder %s17, 0
    %p108 = por %p106, %p107
    %p109 = scmp.ne.s32.totalorder %s97, %s98
    %p110 = scmp.eq.s32.totalorder %s18, 11
    %p111 = por %p109, %p110
    %p113 = scmp.ne.s32.totalorder %s98, %s112
    %p114 = scmp.eq.s32.totalorder %s18, 0
    %p115 = por %p113, %p114
    %s117 = sadd.s32 %s116, 1
    %p120 = scmp.eq.s32.totalorder %s12, 11
    %p121 = scmp.ne.s32.totalorder %s116, %s118
    %p122 = scmp.eq.s32.totalorder %s12, 0
    %p123 = por %p121, %p122
    %p124 = scmp.ne.s32.totalorder %s116, %s118
    %p125 = scmp.eq.s32.totalorder %s17, 11
    %p126 = por %p124, %p125
    %p127 = scmp.ne.s32.totalorder %s118, %s119
    %p128 = scmp.eq.s32.totalorder %s17, 0
    %p129 = por %p127, %p128
    %p130 = scmp.ne.s32.totalorder %s118, %s119
    %p131 = scmp.eq.s32.totalorder %s18, 11
    %p132 = por %p130, %p131
    %p134 = scmp.ne.s32.totalorder %s119, %s133
    %p135 = scmp.eq.s32.totalorder %s18, 0
    %p136 = por %p134, %p135
    %s138 = sadd.s32 %s137, 1
    %p141 = scmp.eq.s32.totalorder %s12, 11
    %p142 = scmp.ne.s32.totalorder %s137, %s139
    %p143 = scmp.eq.s32.totalorder %s12, 0
    %p144 = por %p142, %p143
    %p145 = scmp.ne.s32.totalorder %s137, %s139
    %p146 = scmp.eq.s32.totalorder %s17, 11
    %p147 = por %p145, %p146
    %p148 = scmp.ne.s32.totalorder %s139, %s140
    %p149 = scmp.eq.s32.totalorder %s17, 0
    %p150 = por %p148, %p149
    %p151 = scmp.ne.s32.totalorder %s139, %s140
    %p152 = scmp.eq.s32.totalorder %s18, 11
    %p153 = por %p151, %p152
    %p155 = scmp.ne.s32.totalorder %s140, %s154
    %p156 = scmp.eq.s32.totalorder %s18, 0
    %p157 = por %p155, %p156
    %s159 = sadd.s32 %s158, 1
    %p162 = scmp.eq.s32.totalorder %s12, 11
    %p163 = scmp.ne.s32.totalorder %s158, %s160
    %p164 = scmp.eq.s32.totalorder %s12, 0
    %p165 = por %p163, %p164
    %p166 = scmp.ne.s32.totalorder %s158, %s160
    %p167 = scmp.eq.s32.totalorder %s17, 11
    %p168 = por %p166, %p167
    %p169 = scmp.ne.s32.totalorder %s160, %s161
    %p170 = scmp.eq.s32.totalorder %s17, 0
    %p171 = por %p169, %p170
    %p172 = scmp.ne.s32.totalorder %s160, %s161
    %p173 = scmp.eq.s32.totalorder %s18, 11
    %p174 = por %p172, %p173
    %p176 = scmp.ne.s32.totalorder %s161, %s175
    %p177 = scmp.eq.s32.totalorder %s18, 0
    %p178 = por %p176, %p177
    %s179 = ssub.s32 %s19, %s38
    %s180 = ssub.s32 %s20, %s34
    %s181 = sor.u32 %s179, %s180
    %p182 = scmp.eq.s32.totalorder %s181, 0
    %s184 = sadd.s32 %s183, 1
    %s185 = scalar_select %p182, %s183, %s184
    %p188 = pneg %p182
    %p189 = scmp.eq.s32.totalorder %s12, 11
    %p190 = por %p188, %p189
    %p191 = scmp.ne.s32.totalorder %s183, %s186
    %p192 = scmp.eq.s32.totalorder %s12, 0
    %p193 = por %p191, %p192
    %p194 = scmp.ne.s32.totalorder %s183, %s186
    %p195 = scmp.eq.s32.totalorder %s17, 11
    %p196 = por %p194, %p195
    %p197 = scmp.ne.s32.totalorder %s186, %s187
    %p198 = scmp.eq.s32.totalorder %s17, 0
    %p199 = por %p197, %p198
    %p200 = scmp.ne.s32.totalorder %s186, %s187
    %p201 = scmp.eq.s32.totalorder %s18, 11
    %p202 = por %p200, %p201
    %p204 = scmp.ne.s32.totalorder %s187, %s203
    %p205 = scmp.eq.s32.totalorder %s18, 0
    %p206 = por %p204, %p205
    %p207 = scmp.le.s32.totalorder 1, %s12
    %p208 = scmp.lt.s32.totalorder %s12, 13
    %p209 = pnand %p207, %p208
    %p210 = pneg %p209
    // Predicated region
    $region9: #{tpu_custom_call.1} parent=5 // pred_check
      _
    $region10: #{tpu_custom_call.1} parent=5 // pred_check_branch
      %212 = sbr.rel (%p209) target = $region12
    $region11: #{tpu_custom_call.1} parent=5 // pred_region
      %s213 = ssub.s32 %s12, 1
      // Predicated region
      $region13: #{tpu_custom_call.1} parent=11 // pred_check
        %p214 = pneg %p108
      $region14: #{tpu_custom_call.1} parent=11 // pred_check_branch
        %216 = sbr.rel (%p214) target = $region16
      $region15: #{tpu_custom_call.1} parent=11 // pred_region
        _
      $region16: #{tpu_custom_call.1} parent=11 // pred_fallthru
        _
      // Predicated region
      $region17: #{tpu_custom_call.1} parent=11 // pred_check
        %p217 = pneg %p129
      $region18: #{tpu_custom_call.1} parent=11 // pred_check_branch
        %219 = sbr.rel (%p217) target = $region20
      $region19: #{tpu_custom_call.1} parent=11 // pred_region
        _
      $region20: #{tpu_custom_call.1} parent=11 // pred_fallthru
        _
      // Predicated region
      $region21: #{tpu_custom_call.1} parent=11 // pred_check
        %p220 = pneg %p150
      $region22: #{tpu_custom_call.1} parent=11 // pred_check_branch
        %222 = sbr.rel (%p220) target = $region24
      $region23: #{tpu_custom_call.1} parent=11 // pred_region
        _
      $region24: #{tpu_custom_call.1} parent=11 // pred_fallthru
        _
      // Predicated region
      $region25: #{tpu_custom_call.1} parent=11 // pred_check
        %p223 = pneg %p171
      $region26: #{tpu_custom_call.1} parent=11 // pred_check_branch
        %225 = sbr.rel (%p223) target = $region28
      $region27: #{tpu_custom_call.1} parent=11 // pred_region
        _
      $region28: #{tpu_custom_call.1} parent=11 // pred_fallthru
        _
    $region12: #{tpu_custom_call.1} parent=5 // pred_fallthru
      _
    %p226 = scmp.lt.s32.totalorder %s12, 12
    // Predicated region
    $region29: #{tpu_custom_call.1} parent=5 // pred_check
      %p227 = pneg %p226
    $region30: #{tpu_custom_call.1} parent=5 // pred_check_branch
      %229 = sbr.rel (%p227) target = $region32
    $region31: #{tpu_custom_call.1} parent=5 // pred_region
      // Predicated region
      $region33: #{tpu_custom_call.1} parent=31 // pred_check
        %p230 = pneg %p53
      $region34: #{tpu_custom_call.1} parent=31 // pred_check_branch
        %232 = sbr.rel (%p230) target = $region36
      $region35: #{tpu_custom_call.1} parent=31 // pred_region
        %s233 = smul.u32 6, %s20
        %p234 = scmp.lt.s32.totalorder %s19, 1
        %s235 = scalar_select %p234, %s19, 1
        %p236 = scmp.lt.s32.totalorder %s233, 11
        %s237 = scalar_select %p236, %s233, 11
        %s238 = smul.addr %s235, 12
        %s239 = sadd.s32 %s237, %s238
        %s240 = smul.addr %s239, 8
        %s241 = scalar_lea.vmem %s0, %s240
        %s242 = smul.u32 6, %s20
      $region36: #{tpu_custom_call.1} parent=31 // pred_fallthru
        _
      // Predicated region
      $region37: #{tpu_custom_call.1} parent=31 // pred_check
        %p243 = pneg %p81
      $region38: #{tpu_custom_call.1} parent=31 // pred_check_branch
        %245 = sbr.rel (%p243) target = $region40
      $region39: #{tpu_custom_call.1} parent=31 // pred_region
        %s246 = smul.u32 4, %s21
        %p247 = scmp.lt.s32.totalorder %s19, 1
        %s248 = scalar_select %p247, %s19, 1
        %p249 = scmp.lt.s32.totalorder %s246, 11
        %s250 = scalar_select %p249, %s246, 11
        %s251 = smul.addr %s248, 12
        %s252 = sadd.s32 %s250, %s251
        %s253 = smul.addr %s252, 8
        %s254 = scalar_lea.vmem %s1, %s253
        %s255 = smul.u32 4, %s21
      $region40: #{tpu_custom_call.1} parent=31 // pred_fallthru
        _
    $region32: #{tpu_custom_call.1} parent=5 // pred_fallthru
      _
    %p256 = scmp.le.s32.totalorder 1, %s12
    %p257 = scmp.lt.s32.totalorder %s12, 13
    %p258 = pnand %p256, %p257
    %p259 = pneg %p258
    // Predicated region
    $region41: #{tpu_custom_call.1} parent=5 // pred_check
      _
    $region42: #{tpu_custom_call.1} parent=5 // pred_check_branch
      %261 = sbr.rel (%p258) target = $region44
    $region43: #{tpu_custom_call.1} parent=5 // pred_region
      %s262 = ssub.s32 %s12, 1
      %s263 = smul.u32 6, %s23
      %p264 = scmp.lt.s32.totalorder %s22, 1
      %s265 = scalar_select %p264, %s22, 1
      %p266 = scmp.lt.s32.totalorder %s263, 11
      %s267 = scalar_select %p266, %s263, 11
      %s268 = smul.addr %s265, 12
      %s269 = sadd.s32 %s267, %s268
      %s270 = smul.addr %s269, 8
      %s271 = scalar_lea.vmem %s0, %s270
      %p272 = pneg %p59
      %p273 = pneg %p56
      %s274 = smul.u32 4, %s24
      %p275 = scmp.lt.s32.totalorder %s22, 1
      %s276 = scalar_select %p275, %s22, 1
      %p277 = scmp.lt.s32.totalorder %s274, 11
      %s278 = scalar_select %p277, %s274, 11
      %s279 = smul.addr %s276, 12
      %s280 = sadd.s32 %s278, %s279
      %s281 = smul.addr %s280, 8
      %s282 = scalar_lea.vmem %s1, %s281
      %p283 = pneg %p87
      %p284 = pneg %p84
      %p285 = pneg %p108
      %p286 = pneg %p105
      %p287 = pneg %p129
      %p288 = pneg %p126
      %p289 = pneg %p150
      %p290 = pneg %p147
      %p291 = pneg %p171
      %p292 = pneg %p168
      %p293 = pneg %p199
      %p294 = pneg %p196
      %s295 = smul.u32 6, %s23
      %p296 = scmp.lt.s32.totalorder %s22, 1
      %s297 = scalar_select %p296, %s22, 1
      %p298 = scmp.lt.s32.totalorder %s295, 11
      %s299 = scalar_select %p298, %s295, 11
      %s300 = smul.addr %s297, 12
      %s301 = sadd.s32 %s299, %s300
      %s302 = smul.addr %s301, 8
      %s303 = scalar_lea.vmem %s6, %s302
      %s304 = smul.u32 6, %s23
      %p305 = scmp.lt.s32.totalorder %s22, 1
      %s306 = scalar_select %p305, %s22, 1
      %p307 = scmp.lt.s32.totalorder %s304, 11
      %s308 = scalar_select %p307, %s304, 11
      %s309 = smul.addr %s306, 12
      %s310 = sadd.s32 %s308, %s309
      %s311 = smul.addr %s310, 8
      %s312 = scalar_lea.vmem %s0, %s311
      %s313 = smul.u32 6, %s23
      %s314 = smul.u32 4, %s24
      %p315 = scmp.lt.s32.totalorder %s22, 1
      %s316 = scalar_select %p315, %s22, 1
      %p317 = scmp.lt.s32.totalorder %s314, 11
      %s318 = scalar_select %p317, %s314, 11
      %s319 = smul.addr %s316, 12
      %s320 = sadd.s32 %s318, %s319
      %s321 = smul.addr %s320, 8
      %s322 = scalar_lea.vmem %s1, %s321
      %s323 = smul.u32 4, %s24
      %s324 = smul.u32 6, %s23
      %p325 = scmp.lt.s32.totalorder %s22, 1
      %s326 = scalar_select %p325, %s22, 1
      %p327 = scmp.lt.s32.totalorder %s324, 11
      %s328 = scalar_select %p327, %s324, 11
      %s329 = smul.addr %s326, 12
      %s330 = sadd.s32 %s328, %s329
      %s331 = smul.addr %s330, 8
      %s332 = scalar_lea.vmem %s6, %s331
      %s333 = smul.u32 6, %s23
      %p335 = scmp.eq.s32.totalorder %s24, 0
      // Predicated region
      $region45: #{tpu_custom_call.1} parent=43 // pred_check
        %p336 = pneg %p335
      $region46: #{tpu_custom_call.1} parent=43 // pred_check_branch
        %338 = sbr.rel (%p336) target = $region48
      $region47: #{tpu_custom_call.1} parent=43 // pred_region
        %v339 = vld [vmem:[%s312] sm:$0xff]
        %v340 = vld [vmem:[%s312 + $0x8] sm:$0xff]
        %v341 = vld [vmem:[%s312 + $0x10] sm:$0xff]
        %v342 = vld [vmem:[%s312 + $0x18] sm:$0xff]
        %v343 = vld [vmem:[%s312 + $0x20] sm:$0xff]
        %v344 = vld [vmem:[%s312 + $0x28] sm:$0xff]
        %v345 = vpack.c.bf16 %v339, %v339
        %v346 = vpack.c.bf16 %v340, %v340
        %v347 = vpack.c.bf16 %v341, %v341
        %v348 = vpack.c.bf16 %v342, %v342
        %v349 = vpack.c.bf16 %v343, %v343
        %v350 = vpack.c.bf16 %v344, %v344
        %v351 = vld [vmem:[%s2] sm:$0xf]
        %v352 = vld [vmem:[%s2 + $0x4] sm:$0xf]
        %v353 = vld [vmem:[%s2 + $0x8] sm:$0xf]
        %v354 = vld [vmem:[%s2 + $0xc] sm:$0xf]
        %v355 = vld [vmem:[%s2 + $0x10] sm:$0xf]
        %v356 = vld [vmem:[%s2 + $0x14] sm:$0xf]
        %v357 = vld [vmem:[%s2 + $0x18] sm:$0xf]
        %v358 = vld [vmem:[%s2 + $0x1c] sm:$0xf]
        %v359 = vld [vmem:[%s2 + $0x20] sm:$0xf]
        %v360 = vld [vmem:[%s2 + $0x24] sm:$0xf]
        %v361 = vld [vmem:[%s2 + $0x28] sm:$0xf]
        %v362 = vld [vmem:[%s2 + $0x2c] sm:$0xf]
        %v363 = vld [vmem:[%s2 + $0x30] sm:$0xf]
        %v364 = vld [vmem:[%s2 + $0x34] sm:$0xf]
        %v365 = vld [vmem:[%s2 + $0x38] sm:$0xf]
        %v366 = vld [vmem:[%s2 + $0x3c] sm:$0xf]
        %v373 = vunpack.c.l.b16 %v345
        %v374 = vunpack.c.l.b16 %v346
        %v375 = vunpack.c.l.b16 %v347
        %v376 = vunpack.c.l.b16 %v348
        %v377 = vunpack.c.l.b16 %v349
        %v378 = vunpack.c.l.b16 %v350
        %v379 = vpack.c.b16 %v374, %v373
        %v380 = vpack.c.b16 %v376, %v375
        %v381 = vpack.c.b16 %v378, %v377
        %v386 = vunpack.c.l.b16 %v351
        %v387 = vunpack.c.l.b16 %v352
        %v388 = vunpack.c.l.b16 %v353
        %v389 = vunpack.c.l.b16 %v354
        %v390 = vpack.c.b16 %v387, %v386
        %v391 = vpack.c.b16 %v389, %v388
        %vm394 = vcmask 261120
        %v396 = vsel %vm394, %v379, 0
        %v399 = vsel %vm394, %v380, 0
        %v402 = vsel %vm394, %v381, 0
        %404 = vmatpush.bf16.msra.mxu0 0
        %405 = vmatpush.bf16.msra.mxu0 0
        %406 = vmatpush.bf16.msra.mxu0 0
        %407 = vmatpush.bf16.msra.mxu0 0
        %408 = vmatpush.bf16.msra.mxu0 0
        %409 = vmatpush.bf16.msra.mxu0 0
        %410 = vmatpush.bf16.msra.mxu0 %v391
        %411 = vmatpush.bf16.msra.mxu0 %v390
        %412 = vmatmul.bf16.gmra.mxu0 %v396
        %v413 = vpop.f32.mrf.mxu0
        %v414 = vadd.f32 0.0, %v413
        %v415 = vpop.f32.mrf.mxu0
        %v416 = vadd.f32 0.0, %v415
        %417 = vmatmul.bf16.gmra.mxu0 %v399
        %v418 = vpop.f32.mrf.mxu0
        %v419 = vadd.f32 0.0, %v418
        %v420 = vpop.f32.mrf.mxu0
        %v421 = vadd.f32 0.0, %v420
        %422 = vmatmul.bf16.gmra.mxu0 %v402
        %v423 = vpop.f32.mrf.mxu0
        %v424 = vadd.f32 0.0, %v423
        %v425 = vpop.f32.mrf.mxu0
        %v426 = vadd.f32 0.0, %v425
        %427 = vdwg.mxu0
        %v432 = vunpack.c.l.b16 %v355
        %v433 = vunpack.c.l.b16 %v356
        %v434 = vunpack.c.l.b16 %v357
        %v435 = vunpack.c.l.b16 %v358
        %v436 = vpack.c.b16 %v433, %v432
        %v437 = vpack.c.b16 %v435, %v434
        %440 = vmatpush.bf16.msra.mxu0 0
        %441 = vmatpush.bf16.msra.mxu0 0
        %442 = vmatpush.bf16.msra.mxu0 0
        %443 = vmatpush.bf16.msra.mxu0 0
        %444 = vmatpush.bf16.msra.mxu0 0
        %445 = vmatpush.bf16.msra.mxu0 0
        %446 = vmatpush.bf16.msra.mxu0 %v437
        %447 = vmatpush.bf16.msra.mxu0 %v436
        %448 = vmatmul.bf16.gmra.mxu0 %v396
        %v449 = vpop.f32.mrf.mxu0
        %v450 = vadd.f32 0.0, %v449
        %v451 = vpop.f32.mrf.mxu0
        %v452 = vadd.f32 0.0, %v451
        %453 = vmatmul.bf16.gmra.mxu0 %v399
        %v454 = vpop.f32.mrf.mxu0
        %v455 = vadd.f32 0.0, %v454
        %v456 = vpop.f32.mrf.mxu0
        %v457 = vadd.f32 0.0, %v456
        %458 = vmatmul.bf16.gmra.mxu0 %v402
        %v459 = vpop.f32.mrf.mxu0
        %v460 = vadd.f32 0.0, %v459
        %v461 = vpop.f32.mrf.mxu0
        %v462 = vadd.f32 0.0, %v461
        %463 = vdwg.mxu0
        %v468 = vunpack.c.l.b16 %v359
        %v469 = vunpack.c.l.b16 %v360
        %v470 = vunpack.c.l.b16 %v361
        %v471 = vunpack.c.l.b16 %v362
        %v472 = vpack.c.b16 %v469, %v468
        %v473 = vpack.c.b16 %v471, %v470
        %476 = vmatpush.bf16.msra.mxu0 0
        %477 = vmatpush.bf16.msra.mxu0 0
        %478 = vmatpush.bf16.msra.mxu0 0
        %479 = vmatpush.bf16.msra.mxu0 0
        %480 = vmatpush.bf16.msra.mxu0 0
        %481 = vmatpush.bf16.msra.mxu0 0
        %482 = vmatpush.bf16.msra.mxu0 %v473
        %483 = vmatpush.bf16.msra.mxu0 %v472
        %484 = vmatmul.bf16.gmra.mxu0 %v396
        %v485 = vpop.f32.mrf.mxu0
        %v486 = vadd.f32 0.0, %v485
        %v487 = vpop.f32.mrf.mxu0
        %v488 = vadd.f32 0.0, %v487
        %489 = vmatmul.bf16.gmra.mxu0 %v399
        %v490 = vpop.f32.mrf.mxu0
        %v491 = vadd.f32 0.0, %v490
        %v492 = vpop.f32.mrf.mxu0
        %v493 = vadd.f32 0.0, %v492
        %494 = vmatmul.bf16.gmra.mxu0 %v402
        %v495 = vpop.f32.mrf.mxu0
        %v496 = vadd.f32 0.0, %v495
        %v497 = vpop.f32.mrf.mxu0
        %v498 = vadd.f32 0.0, %v497
        %499 = vdwg.mxu0
        %v504 = vunpack.c.l.b16 %v363
        %v505 = vunpack.c.l.b16 %v364
        %v506 = vunpack.c.l.b16 %v365
        %v507 = vunpack.c.l.b16 %v366
        %v508 = vpack.c.b16 %v505, %v504
        %v509 = vpack.c.b16 %v507, %v506
        %512 = vmatpush.bf16.msra.mxu0 0
        %513 = vmatpush.bf16.msra.mxu0 0
        %514 = vmatpush.bf16.msra.mxu0 0
        %515 = vmatpush.bf16.msra.mxu0 0
        %516 = vmatpush.bf16.msra.mxu0 0
        %517 = vmatpush.bf16.msra.mxu0 0
        %518 = vmatpush.bf16.msra.mxu0 %v509
        %519 = vmatpush.bf16.msra.mxu0 %v508
        %520 = vmatmul.bf16.gmra.mxu0 %v396
        %v521 = vpop.f32.mrf.mxu0
        %v522 = vadd.f32 0.0, %v521
        %v523 = vpop.f32.mrf.mxu0
        %v524 = vadd.f32 0.0, %v523
        %525 = vmatmul.bf16.gmra.mxu0 %v399
        %v526 = vpop.f32.mrf.mxu0
        %v527 = vadd.f32 0.0, %v526
        %v528 = vpop.f32.mrf.mxu0
        %v529 = vadd.f32 0.0, %v528
        %530 = vmatmul.bf16.gmra.mxu0 %v402
        %v531 = vpop.f32.mrf.mxu0
        %v532 = vadd.f32 0.0, %v531
        %v533 = vpop.f32.mrf.mxu0
        %v534 = vadd.f32 0.0, %v533
        %535 = vdwg.mxu0
        %v536 = vmul.f32 %v414, 0.35355338
        %v537 = vmul.f32 %v416, 0.35355338
        %v538 = vmul.f32 %v419, 0.35355338
        %v539 = vmul.f32 %v421, 0.35355338
        %v540 = vmul.f32 %v424, 0.35355338
        %v541 = vmul.f32 %v426, 0.35355338
        %v542 = vmul.f32 %v450, 0.35355338
        %v543 = vmul.f32 %v452, 0.35355338
        %v544 = vmul.f32 %v455, 0.35355338
        %v545 = vmul.f32 %v457, 0.35355338
        %v546 = vmul.f32 %v460, 0.35355338
        %v547 = vmul.f32 %v462, 0.35355338
        %v548 = vmul.f32 %v486, 0.35355338
        %v549 = vmul.f32 %v488, 0.35355338
        %v550 = vmul.f32 %v491, 0.35355338
        %v551 = vmul.f32 %v493, 0.35355338
        %v552 = vmul.f32 %v496, 0.35355338
        %v553 = vmul.f32 %v498, 0.35355338
        %v554 = vmul.f32 %v522, 0.35355338
        %v555 = vmul.f32 %v524, 0.35355338
        %v556 = vmul.f32 %v527, 0.35355338
        %v557 = vmul.f32 %v529, 0.35355338
        %v558 = vmul.f32 %v532, 0.35355338
        %v559 = vmul.f32 %v534, 0.35355338
        %v560 = vpack.c.bf16 %v536, %v536
        %v561 = vpack.c.bf16 %v537, %v537
        %v562 = vpack.c.bf16 %v538, %v538
        %v563 = vpack.c.bf16 %v539, %v539
        %v564 = vpack.c.bf16 %v540, %v540
        %v565 = vpack.c.bf16 %v541, %v541
        %v566 = vpack.c.bf16 %v542, %v542
        %v567 = vpack.c.bf16 %v543, %v543
        %v568 = vpack.c.bf16 %v544, %v544
        %v569 = vpack.c.bf16 %v545, %v545
        %v570 = vpack.c.bf16 %v546, %v546
        %v571 = vpack.c.bf16 %v547, %v547
        %v572 = vpack.c.bf16 %v548, %v548
        %v573 = vpack.c.bf16 %v549, %v549
        %v574 = vpack.c.bf16 %v550, %v550
        %v575 = vpack.c.bf16 %v551, %v551
        %v576 = vpack.c.bf16 %v552, %v552
        %v577 = vpack.c.bf16 %v553, %v553
        %v578 = vpack.c.bf16 %v554, %v554
        %v579 = vpack.c.bf16 %v555, %v555
        %v580 = vpack.c.bf16 %v556, %v556
        %v581 = vpack.c.bf16 %v557, %v557
        %v582 = vpack.c.bf16 %v558, %v558
        %v583 = vpack.c.bf16 %v559, %v559
        %vm584 = vcmask 60416
        %585 = vst.msk [vmem:[#allocation2] sm:$0xf] %vm584, %v560
        %586 = vst.msk [vmem:[#allocation2 + $0x4] sm:$0xf] %vm584, %v561
        %587 = vst.msk [vmem:[#allocation2 + $0x8] sm:$0xf] %vm584, %v562
        %588 = vst.msk [vmem:[#allocation2 + $0xc] sm:$0xf] %vm584, %v563
        %589 = vst.msk [vmem:[#allocation2 + $0x10] sm:$0xf] %vm584, %v564
        %590 = vst.msk [vmem:[#allocation2 + $0x14] sm:$0xf] %vm584, %v565
        %591 = vst.msk [vmem:[#allocation2 + $0x18] sm:$0xf] %vm584, %v566
        %592 = vst.msk [vmem:[#allocation2 + $0x1c] sm:$0xf] %vm584, %v567
        %593 = vst.msk [vmem:[#allocation2 + $0x20] sm:$0xf] %vm584, %v568
        %594 = vst.msk [vmem:[#allocation2 + $0x24] sm:$0xf] %vm584, %v569
        %595 = vst.msk [vmem:[#allocation2 + $0x28] sm:$0xf] %vm584, %v570
        %596 = vst.msk [vmem:[#allocation2 + $0x2c] sm:$0xf] %vm584, %v571
        %597 = vst.msk [vmem:[#allocation2 + $0x30] sm:$0xf] %vm584, %v572
        %598 = vst.msk [vmem:[#allocation2 + $0x34] sm:$0xf] %vm584, %v573
        %599 = vst.msk [vmem:[#allocation2 + $0x38] sm:$0xf] %vm584, %v574
        %600 = vst.msk [vmem:[#allocation2 + $0x3c] sm:$0xf] %vm584, %v575
        %601 = vst.msk [vmem:[#allocation2 + $0x40] sm:$0xf] %vm584, %v576
        %602 = vst.msk [vmem:[#allocation2 + $0x44] sm:$0xf] %vm584, %v577
        %603 = vst.msk [vmem:[#allocation2 + $0x48] sm:$0xf] %vm584, %v578
        %604 = vst.msk [vmem:[#allocation2 + $0x4c] sm:$0xf] %vm584, %v579
        %605 = vst.msk [vmem:[#allocation2 + $0x50] sm:$0xf] %vm584, %v580
        %606 = vst.msk [vmem:[#allocation2 + $0x54] sm:$0xf] %vm584, %v581
        %607 = vst.msk [vmem:[#allocation2 + $0x58] sm:$0xf] %vm584, %v582
        %608 = vst.msk [vmem:[#allocation2 + $0x5c] sm:$0xf] %vm584, %v583
        %vm609 = vcmask 7168
        %610 = vst.msk [vmem:[#allocation3] sm:$0xff] %vm609, -inf
        %611 = vst.msk [vmem:[#allocation3 + $0x8] sm:$0xff] %vm609, -inf
        %612 = vst.msk [vmem:[#allocation3 + $0x10] sm:$0xff] %vm609, -inf
        %613 = vst.msk [vmem:[#allocation3 + $0x18] sm:$0xff] %vm609, -inf
        %614 = vst.msk [vmem:[#allocation3 + $0x20] sm:$0xff] %vm609, -inf
        %615 = vst.msk [vmem:[#allocation3 + $0x28] sm:$0xff] %vm609, -inf
        %616 = vst.msk [vmem:[#allocation3 + $0x30] sm:$0xff] %vm609, -inf
        %617 = vst.msk [vmem:[#allocation3 + $0x38] sm:$0xff] %vm609, -inf
        %618 = vst.msk [vmem:[#allocation3 + $0x40] sm:$0xff] %vm609, -inf
        %619 = vst.msk [vmem:[#allocation3 + $0x48] sm:$0xff] %vm609, -inf
        %620 = vst.msk [vmem:[#allocation3 + $0x50] sm:$0xff] %vm609, -inf
        %621 = vst.msk [vmem:[#allocation3 + $0x58] sm:$0xff] %vm609, -inf
        %622 = vst.msk [vmem:[#allocation3 + $0x60] sm:$0xff] %vm609, -inf
        %623 = vst.msk [vmem:[#allocation3 + $0x68] sm:$0xff] %vm609, -inf
        %624 = vst.msk [vmem:[#allocation3 + $0x70] sm:$0xff] %vm609, -inf
        %625 = vst.msk [vmem:[#allocation3 + $0x78] sm:$0xff] %vm609, -inf
        %626 = vst.msk [vmem:[#allocation3 + $0x80] sm:$0xff] %vm609, -inf
        %627 = vst.msk [vmem:[#allocation3 + $0x88] sm:$0xff] %vm609, -inf
        %628 = vst.msk [vmem:[#allocation3 + $0x90] sm:$0xff] %vm609, -inf
        %629 = vst.msk [vmem:[#allocation3 + $0x98] sm:$0xff] %vm609, -inf
        %630 = vst.msk [vmem:[#allocation3 + $0xa0] sm:$0xff] %vm609, -inf
        %631 = vst.msk [vmem:[#allocation3 + $0xa8] sm:$0xff] %vm609, -inf
        %632 = vst.msk [vmem:[#allocation3 + $0xb0] sm:$0xff] %vm609, -inf
        %633 = vst.msk [vmem:[#allocation3 + $0xb8] sm:$0xff] %vm609, -inf
        %634 = vst.msk [vmem:[#allocation4] sm:$0xff] %vm609, 0.0
        %635 = vst.msk [vmem:[#allocation4 + $0x8] sm:$0xff] %vm609, 0.0
        %636 = vst.msk [vmem:[#allocation4 + $0x10] sm:$0xff] %vm609, 0.0
        %637 = vst.msk [vmem:[#allocation4 + $0x18] sm:$0xff] %vm609, 0.0
        %638 = vst.msk [vmem:[#allocation4 + $0x20] sm:$0xff] %vm609, 0.0
        %639 = vst.msk [vmem:[#allocation4 + $0x28] sm:$0xff] %vm609, 0.0
        %640 = vst.msk [vmem:[#allocation4 + $0x30] sm:$0xff] %vm609, 0.0
        %641 = vst.msk [vmem:[#allocation4 + $0x38] sm:$0xff] %vm609, 0.0
        %642 = vst.msk [vmem:[#allocation4 + $0x40] sm:$0xff] %vm609, 0.0
        %643 = vst.msk [vmem:[#allocation4 + $0x48] sm:$0xff] %vm609, 0.0
        %644 = vst.msk [vmem:[#allocation4 + $0x50] sm:$0xff] %vm609, 0.0
        %645 = vst.msk [vmem:[#allocation4 + $0x58] sm:$0xff] %vm609, 0.0
        %646 = vst.msk [vmem:[#allocation4 + $0x60] sm:$0xff] %vm609, 0.0
        %647 = vst.msk [vmem:[#allocation4 + $0x68] sm:$0xff] %vm609, 0.0
        %648 = vst.msk [vmem:[#allocation4 + $0x70] sm:$0xff] %vm609, 0.0
        %649 = vst.msk [vmem:[#allocation4 + $0x78] sm:$0xff] %vm609, 0.0
        %650 = vst.msk [vmem:[#allocation4 + $0x80] sm:$0xff] %vm609, 0.0
        %651 = vst.msk [vmem:[#allocation4 + $0x88] sm:$0xff] %vm609, 0.0
        %652 = vst.msk [vmem:[#allocation4 + $0x90] sm:$0xff] %vm609, 0.0
        %653 = vst.msk [vmem:[#allocation4 + $0x98] sm:$0xff] %vm609, 0.0
        %654 = vst.msk [vmem:[#allocation4 + $0xa0] sm:$0xff] %vm609, 0.0
        %655 = vst.msk [vmem:[#allocation4 + $0xa8] sm:$0xff] %vm609, 0.0
        %656 = vst.msk [vmem:[#allocation4 + $0xb0] sm:$0xff] %vm609, 0.0
        %657 = vst.msk [vmem:[#allocation4 + $0xb8] sm:$0xff] %vm609, 0.0
        %vm658 = vcmask 64512
        %659 = vst.msk [vmem:[#allocation5] sm:$0xff] %vm658, 0.0
        %660 = vst.msk [vmem:[#allocation5 + $0x8] sm:$0xff] %vm658, 0.0
        %661 = vst.msk [vmem:[#allocation5 + $0x10] sm:$0xff] %vm658, 0.0
        %662 = vst.msk [vmem:[#allocation5 + $0x18] sm:$0xff] %vm658, 0.0
        %663 = vst.msk [vmem:[#allocation5 + $0x20] sm:$0xff] %vm658, 0.0
        %664 = vst.msk [vmem:[#allocation5 + $0x28] sm:$0xff] %vm658, 0.0
        %665 = vst.msk [vmem:[#allocation5 + $0x30] sm:$0xff] %vm658, 0.0
        %666 = vst.msk [vmem:[#allocation5 + $0x38] sm:$0xff] %vm658, 0.0
        %667 = vst.msk [vmem:[#allocation5 + $0x40] sm:$0xff] %vm658, 0.0
        %668 = vst.msk [vmem:[#allocation5 + $0x48] sm:$0xff] %vm658, 0.0
        %669 = vst.msk [vmem:[#allocation5 + $0x50] sm:$0xff] %vm658, 0.0
        %670 = vst.msk [vmem:[#allocation5 + $0x58] sm:$0xff] %vm658, 0.0
        %671 = vst.msk [vmem:[#allocation5 + $0x60] sm:$0xff] %vm658, 0.0
        %672 = vst.msk [vmem:[#allocation5 + $0x68] sm:$0xff] %vm658, 0.0
        %673 = vst.msk [vmem:[#allocation5 + $0x70] sm:$0xff] %vm658, 0.0
        %674 = vst.msk [vmem:[#allocation5 + $0x78] sm:$0xff] %vm658, 0.0
        %675 = vst.msk [vmem:[#allocation5 + $0x80] sm:$0xff] %vm658, 0.0
        %676 = vst.msk [vmem:[#allocation5 + $0x88] sm:$0xff] %vm658, 0.0
        %677 = vst.msk [vmem:[#allocation5 + $0x90] sm:$0xff] %vm658, 0.0
        %678 = vst.msk [vmem:[#allocation5 + $0x98] sm:$0xff] %vm658, 0.0
        %679 = vst.msk [vmem:[#allocation5 + $0xa0] sm:$0xff] %vm658, 0.0
        %680 = vst.msk [vmem:[#allocation5 + $0xa8] sm:$0xff] %vm658, 0.0
        %681 = vst.msk [vmem:[#allocation5 + $0xb0] sm:$0xff] %vm658, 0.0
        %682 = vst.msk [vmem:[#allocation5 + $0xb8] sm:$0xff] %vm658, 0.0
      $region48: #{tpu_custom_call.1} parent=43 // pred_fallthru
        _
      %v683 = vld [vmem:[%s322] sm:$0xff]
      %v684 = vld [vmem:[%s322 + $0x8] sm:$0xff]
      %v685 = vld [vmem:[%s322 + $0x10] sm:$0xff]
      %v686 = vld [vmem:[%s322 + $0x18] sm:$0xff]
      %v687 = vpack.c.bf16 %v683, %v683
      %v688 = vpack.c.bf16 %v684, %v684
      %v689 = vpack.c.bf16 %v685, %v685
      %v690 = vpack.c.bf16 %v686, %v686
      %v691 = vld [vmem:[%s3] sm:$0xf]
      %v692 = vld [vmem:[%s3 + $0x4] sm:$0xf]
      %v693 = vld [vmem:[%s3 + $0x8] sm:$0xf]
      %v694 = vld [vmem:[%s3 + $0xc] sm:$0xf]
      %v695 = vld [vmem:[%s3 + $0x10] sm:$0xf]
      %v696 = vld [vmem:[%s3 + $0x14] sm:$0xf]
      %v697 = vld [vmem:[%s3 + $0x18] sm:$0xf]
      %v698 = vld [vmem:[%s3 + $0x1c] sm:$0xf]
      %v699 = vld [vmem:[%s3 + $0x20] sm:$0xf]
      %v700 = vld [vmem:[%s3 + $0x24] sm:$0xf]
      %v701 = vld [vmem:[%s3 + $0x28] sm:$0xf]
      %v702 = vld [vmem:[%s3 + $0x2c] sm:$0xf]
      %v703 = vld [vmem:[%s3 + $0x30] sm:$0xf]
      %v704 = vld [vmem:[%s3 + $0x34] sm:$0xf]
      %v705 = vld [vmem:[%s3 + $0x38] sm:$0xf]
      %v706 = vld [vmem:[%s3 + $0x3c] sm:$0xf]
      %v711 = vunpack.c.l.b16 %v687
      %v712 = vunpack.c.l.b16 %v688
      %v713 = vunpack.c.l.b16 %v689
      %v714 = vunpack.c.l.b16 %v690
      %v715 = vpack.c.b16 %v712, %v711
      %v716 = vpack.c.b16 %v714, %v713
      %v721 = vunpack.c.l.b16 %v691
      %v722 = vunpack.c.l.b16 %v692
      %v723 = vunpack.c.l.b16 %v693
      %v724 = vunpack.c.l.b16 %v694
      %v725 = vpack.c.b16 %v722, %v721
      %v726 = vpack.c.b16 %v724, %v723
      %vm729 = vcmask 261120
      %v731 = vsel %vm729, %v715, 0
      %v734 = vsel %vm729, %v716, 0
      %736 = vmatpush.bf16.msra.mxu0 0
      %737 = vmatpush.bf16.msra.mxu0 0
      %738 = vmatpush.bf16.msra.mxu0 0
      %739 = vmatpush.bf16.msra.mxu0 0
      %740 = vmatpush.bf16.msra.mxu0 0
      %741 = vmatpush.bf16.msra.mxu0 0
      %742 = vmatpush.bf16.msra.mxu0 %v726
      %743 = vmatpush.bf16.msra.mxu0 %v725
      %744 = vmatmul.bf16.gmra.mxu0 %v731
      %v745 = vpop.f32.mrf.mxu0
      %v746 = vadd.f32 0.0, %v745
      %v747 = vpop.f32.mrf.mxu0
      %v748 = vadd.f32 0.0, %v747
      %749 = vmatmul.bf16.gmra.mxu0 %v734
      %v750 = vpop.f32.mrf.mxu0
      %v751 = vadd.f32 0.0, %v750
      %v752 = vpop.f32.mrf.mxu0
      %v753 = vadd.f32 0.0, %v752
      %754 = vdwg.mxu0
      %v759 = vunpack.c.l.b16 %v695
      %v760 = vunpack.c.l.b16 %v696
      %v761 = vunpack.c.l.b16 %v697
      %v762 = vunpack.c.l.b16 %v698
      %v763 = vpack.c.b16 %v760, %v759
      %v764 = vpack.c.b16 %v762, %v761
      %767 = vmatpush.bf16.msra.mxu0 0
      %768 = vmatpush.bf16.msra.mxu0 0
      %769 = vmatpush.bf16.msra.mxu0 0
      %770 = vmatpush.bf16.msra.mxu0 0
      %771 = vmatpush.bf16.msra.mxu0 0
      %772 = vmatpush.bf16.msra.mxu0 0
      %773 = vmatpush.bf16.msra.mxu0 %v764
      %774 = vmatpush.bf16.msra.mxu0 %v763
      %775 = vmatmul.bf16.gmra.mxu0 %v731
      %v776 = vpop.f32.mrf.mxu0
      %v777 = vadd.f32 0.0, %v776
      %v778 = vpop.f32.mrf.mxu0
      %v779 = vadd.f32 0.0, %v778
      %780 = vmatmul.bf16.gmra.mxu0 %v734
      %v781 = vpop.f32.mrf.mxu0
      %v782 = vadd.f32 0.0, %v781
      %v783 = vpop.f32.mrf.mxu0
      %v784 = vadd.f32 0.0, %v783
      %785 = vdwg.mxu0
      %v790 = vunpack.c.l.b16 %v699
      %v791 = vunpack.c.l.b16 %v700
      %v792 = vunpack.c.l.b16 %v701
      %v793 = vunpack.c.l.b16 %v702
      %v794 = vpack.c.b16 %v791, %v790
      %v795 = vpack.c.b16 %v793, %v792
      %798 = vmatpush.bf16.msra.mxu0 0
      %799 = vmatpush.bf16.msra.mxu0 0
      %800 = vmatpush.bf16.msra.mxu0 0
      %801 = vmatpush.bf16.msra.mxu0 0
      %802 = vmatpush.bf16.msra.mxu0 0
      %803 = vmatpush.bf16.msra.mxu0 0
      %804 = vmatpush.bf16.msra.mxu0 %v795
      %805 = vmatpush.bf16.msra.mxu0 %v794
      %806 = vmatmul.bf16.gmra.mxu0 %v731
      %v807 = vpop.f32.mrf.mxu0
      %v808 = vadd.f32 0.0, %v807
      %v809 = vpop.f32.mrf.mxu0
      %v810 = vadd.f32 0.0, %v809
      %811 = vmatmul.bf16.gmra.mxu0 %v734
      %v812 = vpop.f32.mrf.mxu0
      %v813 = vadd.f32 0.0, %v812
      %v814 = vpop.f32.mrf.mxu0
      %v815 = vadd.f32 0.0, %v814
      %816 = vdwg.mxu0
      %v821 = vunpack.c.l.b16 %v703
      %v822 = vunpack.c.l.b16 %v704
      %v823 = vunpack.c.l.b16 %v705
      %v824 = vunpack.c.l.b16 %v706
      %v825 = vpack.c.b16 %v822, %v821
      %v826 = vpack.c.b16 %v824, %v823
      %829 = vmatpush.bf16.msra.mxu0 0
      %830 = vmatpush.bf16.msra.mxu0 0
      %831 = vmatpush.bf16.msra.mxu0 0
      %832 = vmatpush.bf16.msra.mxu0 0
      %833 = vmatpush.bf16.msra.mxu0 0
      %834 = vmatpush.bf16.msra.mxu0 0
      %835 = vmatpush.bf16.msra.mxu0 %v826
      %836 = vmatpush.bf16.msra.mxu0 %v825
      %837 = vmatmul.bf16.gmra.mxu0 %v731
      %v838 = vpop.f32.mrf.mxu0
      %v839 = vadd.f32 0.0, %v838
      %v840 = vpop.f32.mrf.mxu0
      %v841 = vadd.f32 0.0, %v840
      %842 = vmatmul.bf16.gmra.mxu0 %v734
      %v843 = vpop.f32.mrf.mxu0
      %v844 = vadd.f32 0.0, %v843
      %v845 = vpop.f32.mrf.mxu0
      %v846 = vadd.f32 0.0, %v845
      %847 = vdwg.mxu0
      %v848 = vpack.c.bf16 %v746, %v746
      %v849 = vpack.c.bf16 %v748, %v748
      %v850 = vpack.c.bf16 %v751, %v751
      %v851 = vpack.c.bf16 %v753, %v753
      %v852 = vpack.c.bf16 %v777, %v777
      %v853 = vpack.c.bf16 %v779, %v779
      %v854 = vpack.c.bf16 %v782, %v782
      %v855 = vpack.c.bf16 %v784, %v784
      %v856 = vpack.c.bf16 %v808, %v808
      %v857 = vpack.c.bf16 %v810, %v810
      %v858 = vpack.c.bf16 %v813, %v813
      %v859 = vpack.c.bf16 %v815, %v815
      %v860 = vpack.c.bf16 %v839, %v839
      %v861 = vpack.c.bf16 %v841, %v841
      %v862 = vpack.c.bf16 %v844, %v844
      %v863 = vpack.c.bf16 %v846, %v846
      %v864 = vld [vmem:[%s4] sm:$0xf]
      %v865 = vld [vmem:[%s4 + $0x4] sm:$0xf]
      %v866 = vld [vmem:[%s4 + $0x8] sm:$0xf]
      %v867 = vld [vmem:[%s4 + $0xc] sm:$0xf]
      %v868 = vld [vmem:[%s4 + $0x10] sm:$0xf]
      %v869 = vld [vmem:[%s4 + $0x14] sm:$0xf]
      %v870 = vld [vmem:[%s4 + $0x18] sm:$0xf]
      %v871 = vld [vmem:[%s4 + $0x1c] sm:$0xf]
      %v872 = vld [vmem:[%s4 + $0x20] sm:$0xf]
      %v873 = vld [vmem:[%s4 + $0x24] sm:$0xf]
      %v874 = vld [vmem:[%s4 + $0x28] sm:$0xf]
      %v875 = vld [vmem:[%s4 + $0x2c] sm:$0xf]
      %v876 = vld [vmem:[%s4 + $0x30] sm:$0xf]
      %v877 = vld [vmem:[%s4 + $0x34] sm:$0xf]
      %v878 = vld [vmem:[%s4 + $0x38] sm:$0xf]
      %v879 = vld [vmem:[%s4 + $0x3c] sm:$0xf]
      %v884 = vunpack.c.l.b16 %v864
      %v885 = vunpack.c.l.b16 %v865
      %v886 = vunpack.c.l.b16 %v866
      %v887 = vunpack.c.l.b16 %v867
      %v888 = vpack.c.b16 %v885, %v884
      %v889 = vpack.c.b16 %v887, %v886
      %892 = vmatpush.bf16.msra.mxu0 0
      %893 = vmatpush.bf16.msra.mxu0 0
      %894 = vmatpush.bf16.msra.mxu0 0
      %895 = vmatpush.bf16.msra.mxu0 0
      %896 = vmatpush.bf16.msra.mxu0 0
      %897 = vmatpush.bf16.msra.mxu0 0
      %898 = vmatpush.bf16.msra.mxu0 %v889
      %899 = vmatpush.bf16.msra.mxu0 %v888
      %900 = vmatmul.bf16.gmra.mxu0 %v731
      %v901 = vpop.f32.mrf.mxu0
      %v902 = vadd.f32 0.0, %v901
      %v903 = vpop.f32.mrf.mxu0
      %v904 = vadd.f32 0.0, %v903
      %905 = vmatmul.bf16.gmra.mxu0 %v734
      %v906 = vpop.f32.mrf.mxu0
      %v907 = vadd.f32 0.0, %v906
      %v908 = vpop.f32.mrf.mxu0
      %v909 = vadd.f32 0.0, %v908
      %910 = vdwg.mxu0
      %v915 = vunpack.c.l.b16 %v868
      %v916 = vunpack.c.l.b16 %v869
      %v917 = vunpack.c.l.b16 %v870
      %v918 = vunpack.c.l.b16 %v871
      %v919 = vpack.c.b16 %v916, %v915
      %v920 = vpack.c.b16 %v918, %v917
      %923 = vmatpush.bf16.msra.mxu0 0
      %924 = vmatpush.bf16.msra.mxu0 0
      %925 = vmatpush.bf16.msra.mxu0 0
      %926 = vmatpush.bf16.msra.mxu0 0
      %927 = vmatpush.bf16.msra.mxu0 0
      %928 = vmatpush.bf16.msra.mxu0 0
      %929 = vmatpush.bf16.msra.mxu0 %v920
      %930 = vmatpush.bf16.msra.mxu0 %v919
      %931 = vmatmul.bf16.gmra.mxu0 %v731
      %v932 = vpop.f32.mrf.mxu0
      %v933 = vadd.f32 0.0, %v932
      %v934 = vpop.f32.mrf.mxu0
      %v935 = vadd.f32 0.0, %v934
      %936 = vmatmul.bf16.gmra.mxu0 %v734
      %v937 = vpop.f32.mrf.mxu0
      %v938 = vadd.f32 0.0, %v937
      %v939 = vpop.f32.mrf.mxu0
      %v940 = vadd.f32 0.0, %v939
      %941 = vdwg.mxu0
      %v946 = vunpack.c.l.b16 %v872
      %v947 = vunpack.c.l.b16 %v873
      %v948 = vunpack.c.l.b16 %v874
      %v949 = vunpack.c.l.b16 %v875
      %v950 = vpack.c.b16 %v947, %v946
      %v951 = vpack.c.b16 %v949, %v948
      %954 = vmatpush.bf16.msra.mxu0 0
      %955 = vmatpush.bf16.msra.mxu0 0
      %956 = vmatpush.bf16.msra.mxu0 0
      %957 = vmatpush.bf16.msra.mxu0 0
      %958 = vmatpush.bf16.msra.mxu0 0
      %959 = vmatpush.bf16.msra.mxu0 0
      %960 = vmatpush.bf16.msra.mxu0 %v951
      %961 = vmatpush.bf16.msra.mxu0 %v950
      %962 = vmatmul.bf16.gmra.mxu0 %v731
      %v963 = vpop.f32.mrf.mxu0
      %v964 = vadd.f32 0.0, %v963
      %v965 = vpop.f32.mrf.mxu0
      %v966 = vadd.f32 0.0, %v965
      %967 = vmatmul.bf16.gmra.mxu0 %v734
      %v968 = vpop.f32.mrf.mxu0
      %v969 = vadd.f32 0.0, %v968
      %v970 = vpop.f32.mrf.mxu0
      %v971 = vadd.f32 0.0, %v970
      %972 = vdwg.mxu0
      %v977 = vunpack.c.l.b16 %v876
      %v978 = vunpack.c.l.b16 %v877
      %v979 = vunpack.c.l.b16 %v878
      %v980 = vunpack.c.l.b16 %v879
      %v981 = vpack.c.b16 %v978, %v977
      %v982 = vpack.c.b16 %v980, %v979
      %985 = vmatpush.bf16.msra.mxu0 0
      %986 = vmatpush.bf16.msra.mxu0 0
      %987 = vmatpush.bf16.msra.mxu0 0
      %988 = vmatpush.bf16.msra.mxu0 0
      %989 = vmatpush.bf16.msra.mxu0 0
      %990 = vmatpush.bf16.msra.mxu0 0
      %991 = vmatpush.bf16.msra.mxu0 %v982
      %992 = vmatpush.bf16.msra.mxu0 %v981
      %993 = vmatmul.bf16.gmra.mxu0 %v731
      %v994 = vpop.f32.mrf.mxu0
      %v995 = vadd.f32 0.0, %v994
      %v996 = vpop.f32.mrf.mxu0
      %v997 = vadd.f32 0.0, %v996
      %998 = vmatmul.bf16.gmra.mxu0 %v734
      %v999 = vpop.f32.mrf.mxu0
      %v1000 = vadd.f32 0.0, %v999
      %v1001 = vpop.f32.mrf.mxu0
      %v1002 = vadd.f32 0.0, %v1001
      %1003 = vdwg.mxu0
      %v1004 = vpack.c.bf16 %v902, %v902
      %v1005 = vpack.c.bf16 %v904, %v904
      %v1006 = vpack.c.bf16 %v907, %v907
      %v1007 = vpack.c.bf16 %v909, %v909
      %v1008 = vpack.c.bf16 %v933, %v933
      %v1009 = vpack.c.bf16 %v935, %v935
      %v1010 = vpack.c.bf16 %v938, %v938
      %v1011 = vpack.c.bf16 %v940, %v940
      %v1012 = vpack.c.bf16 %v964, %v964
      %v1013 = vpack.c.bf16 %v966, %v966
      %v1014 = vpack.c.bf16 %v969, %v969
      %v1015 = vpack.c.bf16 %v971, %v971
      %v1016 = vpack.c.bf16 %v995, %v995
      %v1017 = vpack.c.bf16 %v997, %v997
      %v1018 = vpack.c.bf16 %v1000, %v1000
      %v1019 = vpack.c.bf16 %v1002, %v1002
      %v1020 = vld [vmem:[#allocation2] sm:$0xf]
      %v1021 = vld [vmem:[#allocation2 + $0x4] sm:$0xf]
      %v1022 = vld [vmem:[#allocation2 + $0x8] sm:$0xf]
      %v1023 = vld [vmem:[#allocation2 + $0xc] sm:$0xf]
      %v1024 = vld [vmem:[#allocation2 + $0x10] sm:$0xf]
      %v1025 = vld [vmem:[#allocation2 + $0x14] sm:$0xf]
      %v1026 = vld [vmem:[#allocation2 + $0x18] sm:$0xf]
      %v1027 = vld [vmem:[#allocation2 + $0x1c] sm:$0xf]
      %v1028 = vld [vmem:[#allocation2 + $0x20] sm:$0xf]
      %v1029 = vld [vmem:[#allocation2 + $0x24] sm:$0xf]
      %v1030 = vld [vmem:[#allocation2 + $0x28] sm:$0xf]
      %v1031 = vld [vmem:[#allocation2 + $0x2c] sm:$0xf]
      %v1032 = vld [vmem:[#allocation2 + $0x30] sm:$0xf]
      %v1033 = vld [vmem:[#allocation2 + $0x34] sm:$0xf]
      %v1034 = vld [vmem:[#allocation2 + $0x38] sm:$0xf]
      %v1035 = vld [vmem:[#allocation2 + $0x3c] sm:$0xf]
      %v1036 = vld [vmem:[#allocation2 + $0x40] sm:$0xf]
      %v1037 = vld [vmem:[#allocation2 + $0x44] sm:$0xf]
      %v1038 = vld [vmem:[#allocation2 + $0x48] sm:$0xf]
      %v1039 = vld [vmem:[#allocation2 + $0x4c] sm:$0xf]
      %v1040 = vld [vmem:[#allocation2 + $0x50] sm:$0xf]
      %v1041 = vld [vmem:[#allocation2 + $0x54] sm:$0xf]
      %v1042 = vld [vmem:[#allocation2 + $0x58] sm:$0xf]
      %v1043 = vld [vmem:[#allocation2 + $0x5c] sm:$0xf]
      %v1050 = vunpack.c.l.b16 %v1020
      %v1051 = vunpack.c.l.b16 %v1021
      %v1052 = vunpack.c.l.b16 %v1022
      %v1053 = vunpack.c.l.b16 %v1023
      %v1054 = vunpack.c.l.b16 %v1024
      %v1055 = vunpack.c.l.b16 %v1025
      %v1056 = vpack.c.b16 %v1051, %v1050
      %v1057 = vpack.c.b16 %v1053, %v1052
      %v1058 = vpack.c.b16 %v1055, %v1054
      %v1063 = vunpack.c.l.b16 %v848
      %v1064 = vunpack.c.l.b16 %v849
      %v1065 = vunpack.c.l.b16 %v850
      %v1066 = vunpack.c.l.b16 %v851
      %v1067 = vpack.c.b16 %v1064, %v1063
      %v1068 = vpack.c.b16 %v1066, %v1065
      %vm1069 = vcmask 64512
      %v1071 = vsel %vm1069, %v1056, 0
      %v1074 = vsel %vm1069, %v1057, 0
      %v1077 = vsel %vm1069, %v1058, 0
      %v1080 = vsel %vm1069, %v1067, 0
      %v1083 = vsel %vm1069, %v1068, 0
      %1085 = vmatpush.bf16.xpose.msra.mxu0 0
      %1086 = vmatpush.bf16.xpose.msra.mxu0 0
      %1087 = vmatpush.bf16.xpose.msra.mxu0 0
      %1088 = vmatpush.bf16.xpose.msra.mxu0 0
      %1089 = vmatpush.bf16.xpose.msra.mxu0 0
      %1090 = vmatpush.bf16.xpose.msra.mxu0 0
      %1091 = vmatpush.bf16.xpose.msra.mxu0 %v1083
      %1092 = vmatpush.bf16.xpose.msra.mxu0 %v1080
      %1093 = vmatmul.bf16.gmra.mxu0 %v1071
      %v1094 = vpop.f32.mrf.mxu0
      %v1095 = vadd.f32 0.0, %v1094
      %v1096 = vpop.f32.mrf.mxu0
      %v1097 = vadd.f32 0.0, %v1096
      %1098 = vmatmul.bf16.gmra.mxu0 %v1074
      %v1099 = vpop.f32.mrf.mxu0
      %v1100 = vadd.f32 0.0, %v1099
      %v1101 = vpop.f32.mrf.mxu0
      %v1102 = vadd.f32 0.0, %v1101
      %1103 = vmatmul.bf16.gmra.mxu0 %v1077
      %v1104 = vpop.f32.mrf.mxu0
      %v1105 = vadd.f32 0.0, %v1104
      %v1106 = vpop.f32.mrf.mxu0
      %v1107 = vadd.f32 0.0, %v1106
      %1108 = vdwg.mxu0
      %v1115 = vunpack.c.l.b16 %v1026
      %v1116 = vunpack.c.l.b16 %v1027
      %v1117 = vunpack.c.l.b16 %v1028
      %v1118 = vunpack.c.l.b16 %v1029
      %v1119 = vunpack.c.l.b16 %v1030
      %v1120 = vunpack.c.l.b16 %v1031
      %v1121 = vpack.c.b16 %v1116, %v1115
      %v1122 = vpack.c.b16 %v1118, %v1117
      %v1123 = vpack.c.b16 %v1120, %v1119
      %v1128 = vunpack.c.l.b16 %v852
      %v1129 = vunpack.c.l.b16 %v853
      %v1130 = vunpack.c.l.b16 %v854
      %v1131 = vunpack.c.l.b16 %v855
      %v1132 = vpack.c.b16 %v1129, %v1128
      %v1133 = vpack.c.b16 %v1131, %v1130
      %v1135 = vsel %vm1069, %v1121, 0
      %v1138 = vsel %vm1069, %v1122, 0
      %v1141 = vsel %vm1069, %v1123, 0
      %v1144 = vsel %vm1069, %v1132, 0
      %v1147 = vsel %vm1069, %v1133, 0
      %1149 = vmatpush.bf16.xpose.msra.mxu0 0
      %1150 = vmatpush.bf16.xpose.msra.mxu0 0
      %1151 = vmatpush.bf16.xpose.msra.mxu0 0
      %1152 = vmatpush.bf16.xpose.msra.mxu0 0
      %1153 = vmatpush.bf16.xpose.msra.mxu0 0
      %1154 = vmatpush.bf16.xpose.msra.mxu0 0
      %1155 = vmatpush.bf16.xpose.msra.mxu0 %v1147
      %1156 = vmatpush.bf16.xpose.msra.mxu0 %v1144
      %1157 = vmatmul.bf16.gmra.mxu0 %v1135
      %v1158 = vpop.f32.mrf.mxu0
      %v1159 = vadd.f32 0.0, %v1158
      %v1160 = vpop.f32.mrf.mxu0
      %v1161 = vadd.f32 0.0, %v1160
      %1162 = vmatmul.bf16.gmra.mxu0 %v1138
      %v1163 = vpop.f32.mrf.mxu0
      %v1164 = vadd.f32 0.0, %v1163
      %v1165 = vpop.f32.mrf.mxu0
      %v1166 = vadd.f32 0.0, %v1165
      %1167 = vmatmul.bf16.gmra.mxu0 %v1141
      %v1168 = vpop.f32.mrf.mxu0
      %v1169 = vadd.f32 0.0, %v1168
      %v1170 = vpop.f32.mrf.mxu0
      %v1171 = vadd.f32 0.0, %v1170
      %1172 = vdwg.mxu0
      %v1179 = vunpack.c.l.b16 %v1032
      %v1180 = vunpack.c.l.b16 %v1033
      %v1181 = vunpack.c.l.b16 %v1034
      %v1182 = vunpack.c.l.b16 %v1035
      %v1183 = vunpack.c.l.b16 %v1036
      %v1184 = vunpack.c.l.b16 %v1037
      %v1185 = vpack.c.b16 %v1180, %v1179
      %v1186 = vpack.c.b16 %v1182, %v1181
      %v1187 = vpack.c.b16 %v1184, %v1183
      %v1192 = vunpack.c.l.b16 %v856
      %v1193 = vunpack.c.l.b16 %v857
      %v1194 = vunpack.c.l.b16 %v858
      %v1195 = vunpack.c.l.b16 %v859
      %v1196 = vpack.c.b16 %v1193, %v1192
      %v1197 = vpack.c.b16 %v1195, %v1194
      %v1199 = vsel %vm1069, %v1185, 0
      %v1202 = vsel %vm1069, %v1186, 0
      %v1205 = vsel %vm1069, %v1187, 0
      %v1208 = vsel %vm1069, %v1196, 0
      %v1211 = vsel %vm1069, %v1197, 0
      %1213 = vmatpush.bf16.xpose.msra.mxu0 0
      %1214 = vmatpush.bf16.xpose.msra.mxu0 0
      %1215 = vmatpush.bf16.xpose.msra.mxu0 0
      %1216 = vmatpush.bf16.xpose.msra.mxu0 0
      %1217 = vmatpush.bf16.xpose.msra.mxu0 0
      %1218 = vmatpush.bf16.xpose.msra.mxu0 0
      %1219 = vmatpush.bf16.xpose.msra.mxu0 %v1211
      %1220 = vmatpush.bf16.xpose.msra.mxu0 %v1208
      %1221 = vmatmul.bf16.gmra.mxu0 %v1199
      %v1222 = vpop.f32.mrf.mxu0
      %v1223 = vadd.f32 0.0, %v1222
      %v1224 = vpop.f32.mrf.mxu0
      %v1225 = vadd.f32 0.0, %v1224
      %1226 = vmatmul.bf16.gmra.mxu0 %v1202
      %v1227 = vpop.f32.mrf.mxu0
      %v1228 = vadd.f32 0.0, %v1227
      %v1229 = vpop.f32.mrf.mxu0
      %v1230 = vadd.f32 0.0, %v1229
      %1231 = vmatmul.bf16.gmra.mxu0 %v1205
      %v1232 = vpop.f32.mrf.mxu0
      %v1233 = vadd.f32 0.0, %v1232
      %v1234 = vpop.f32.mrf.mxu0
      %v1235 = vadd.f32 0.0, %v1234
      %1236 = vdwg.mxu0
      %v1243 = vunpack.c.l.b16 %v1038
      %v1244 = vunpack.c.l.b16 %v1039
      %v1245 = vunpack.c.l.b16 %v1040
      %v1246 = vunpack.c.l.b16 %v1041
      %v1247 = vunpack.c.l.b16 %v1042
      %v1248 = vunpack.c.l.b16 %v1043
      %v1249 = vpack.c.b16 %v1244, %v1243
      %v1250 = vpack.c.b16 %v1246, %v1245
      %v1251 = vpack.c.b16 %v1248, %v1247
      %v1256 = vunpack.c.l.b16 %v860
      %v1257 = vunpack.c.l.b16 %v861
      %v1258 = vunpack.c.l.b16 %v862
      %v1259 = vunpack.c.l.b16 %v863
      %v1260 = vpack.c.b16 %v1257, %v1256
      %v1261 = vpack.c.b16 %v1259, %v1258
      %v1263 = vsel %vm1069, %v1249, 0
      %v1266 = vsel %vm1069, %v1250, 0
      %v1269 = vsel %vm1069, %v1251, 0
      %v1272 = vsel %vm1069, %v1260, 0
      %v1275 = vsel %vm1069, %v1261, 0
      %1277 = vmatpush.bf16.xpose.msra.mxu0 0
      %1278 = vmatpush.bf16.xpose.msra.mxu0 0
      %1279 = vmatpush.bf16.xpose.msra.mxu0 0
      %1280 = vmatpush.bf16.xpose.msra.mxu0 0
      %1281 = vmatpush.bf16.xpose.msra.mxu0 0
      %1282 = vmatpush.bf16.xpose.msra.mxu0 0
      %1283 = vmatpush.bf16.xpose.msra.mxu0 %v1275
      %1284 = vmatpush.bf16.xpose.msra.mxu0 %v1272
      %1285 = vmatmul.bf16.gmra.mxu0 %v1263
      %v1286 = vpop.f32.mrf.mxu0
      %v1287 = vadd.f32 0.0, %v1286
      %v1288 = vpop.f32.mrf.mxu0
      %v1289 = vadd.f32 0.0, %v1288
      %1290 = vmatmul.bf16.gmra.mxu0 %v1266
      %v1291 = vpop.f32.mrf.mxu0
      %v1292 = vadd.f32 0.0, %v1291
      %v1293 = vpop.f32.mrf.mxu0
      %v1294 = vadd.f32 0.0, %v1293
      %1295 = vmatmul.bf16.gmra.mxu0 %v1269
      %v1296 = vpop.f32.mrf.mxu0
      %v1297 = vadd.f32 0.0, %v1296
      %v1298 = vpop.f32.mrf.mxu0
      %v1299 = vadd.f32 0.0, %v1298
      %1300 = vdwg.mxu0
      %v1301 = vld [vmem:[#allocation3] sm:$0xff]
      %v1302 = vld [vmem:[#allocation3 + $0x8] sm:$0xff]
      %v1303 = vld [vmem:[#allocation3 + $0x10] sm:$0xff]
      %v1304 = vld [vmem:[#allocation3 + $0x18] sm:$0xff]
      %v1305 = vld [vmem:[#allocation3 + $0x20] sm:$0xff]
      %v1306 = vld [vmem:[#allocation3 + $0x28] sm:$0xff]
      %v1307 = vld [vmem:[#allocation3 + $0x30] sm:$0xff]
      %v1308 = vld [vmem:[#allocation3 + $0x38] sm:$0xff]
      %v1309 = vld [vmem:[#allocation3 + $0x40] sm:$0xff]
      %v1310 = vld [vmem:[#allocation3 + $0x48] sm:$0xff]
      %v1311 = vld [vmem:[#allocation3 + $0x50] sm:$0xff]
      %v1312 = vld [vmem:[#allocation3 + $0x58] sm:$0xff]
      %v1313 = vld [vmem:[#allocation3 + $0x60] sm:$0xff]
      %v1314 = vld [vmem:[#allocation3 + $0x68] sm:$0xff]
      %v1315 = vld [vmem:[#allocation3 + $0x70] sm:$0xff]
      %v1316 = vld [vmem:[#allocation3 + $0x78] sm:$0xff]
      %v1317 = vld [vmem:[#allocation3 + $0x80] sm:$0xff]
      %v1318 = vld [vmem:[#allocation3 + $0x88] sm:$0xff]
      %v1319 = vld [vmem:[#allocation3 + $0x90] sm:$0xff]
      %v1320 = vld [vmem:[#allocation3 + $0x98] sm:$0xff]
      %v1321 = vld [vmem:[#allocation3 + $0xa0] sm:$0xff]
      %v1322 = vld [vmem:[#allocation3 + $0xa8] sm:$0xff]
      %v1323 = vld [vmem:[#allocation3 + $0xb0] sm:$0xff]
      %v1324 = vld [vmem:[#allocation3 + $0xb8] sm:$0xff]
      %v1325 = vsel %vm729, %v1095, -inf
      %1326 = vmax.xlane.f32.xlu0 %v1325
      %v1327 = vpop.xlane.xlu0 %1326
      %v1328 = vsel %vm729, %v1097, -inf
      %1329 = vmax.xlane.f32.xlu0 %v1328
      %v1330 = vpop.xlane.xlu0 %1329
      %v1331 = vsel %vm729, %v1100, -inf
      %1332 = vmax.xlane.f32.xlu0 %v1331
      %v1333 = vpop.xlane.xlu0 %1332
      %v1334 = vsel %vm729, %v1102, -inf
      %1335 = vmax.xlane.f32.xlu0 %v1334
      %v1336 = vpop.xlane.xlu0 %1335
      %v1337 = vsel %vm729, %v1105, -inf
      %1338 = vmax.xlane.f32.xlu0 %v1337
      %v1339 = vpop.xlane.xlu0 %1338
      %v1340 = vsel %vm729, %v1107, -inf
      %1341 = vmax.xlane.f32.xlu0 %v1340
      %v1342 = vpop.xlane.xlu0 %1341
      %v1343 = vsel %vm729, %v1159, -inf
      %1344 = vmax.xlane.f32.xlu0 %v1343
      %v1345 = vpop.xlane.xlu0 %1344
      %v1346 = vsel %vm729, %v1161, -inf
      %1347 = vmax.xlane.f32.xlu0 %v1346
      %v1348 = vpop.xlane.xlu0 %1347
      %v1349 = vsel %vm729, %v1164, -inf
      %1350 = vmax.xlane.f32.xlu0 %v1349
      %v1351 = vpop.xlane.xlu0 %1350
      %v1352 = vsel %vm729, %v1166, -inf
      %1353 = vmax.xlane.f32.xlu0 %v1352
      %v1354 = vpop.xlane.xlu0 %1353
      %v1355 = vsel %vm729, %v1169, -inf
      %1356 = vmax.xlane.f32.xlu0 %v1355
      %v1357 = vpop.xlane.xlu0 %1356
      %v1358 = vsel %vm729, %v1171, -inf
      %1359 = vmax.xlane.f32.xlu0 %v1358
      %v1360 = vpop.xlane.xlu0 %1359
      %v1361 = vsel %vm729, %v1223, -inf
      %1362 = vmax.xlane.f32.xlu0 %v1361
      %v1363 = vpop.xlane.xlu0 %1362
      %v1364 = vsel %vm729, %v1225, -inf
      %1365 = vmax.xlane.f32.xlu0 %v1364
      %v1366 = vpop.xlane.xlu0 %1365
      %v1367 = vsel %vm729, %v1228, -inf
      %1368 = vmax.xlane.f32.xlu0 %v1367
      %v1369 = vpop.xlane.xlu0 %1368
      %v1370 = vsel %vm729, %v1230, -inf
      %1371 = vmax.xlane.f32.xlu0 %v1370
      %v1372 = vpop.xlane.xlu0 %1371
      %v1373 = vsel %vm729, %v1233, -inf
      %1374 = vmax.xlane.f32.xlu0 %v1373
      %v1375 = vpop.xlane.xlu0 %1374
      %v1376 = vsel %vm729, %v1235, -inf
      %1377 = vmax.xlane.f32.xlu0 %v1376
      %v1378 = vpop.xlane.xlu0 %1377
      %v1379 = vsel %vm729, %v1287, -inf
      %1380 = vmax.xlane.f32.xlu0 %v1379
      %v1381 = vpop.xlane.xlu0 %1380
      %v1382 = vsel %vm729, %v1289, -inf
      %1383 = vmax.xlane.f32.xlu0 %v1382
      %v1384 = vpop.xlane.xlu0 %1383
      %v1385 = vsel %vm729, %v1292, -inf
      %1386 = vmax.xlane.f32.xlu0 %v1385
      %v1387 = vpop.xlane.xlu0 %1386
      %v1388 = vsel %vm729, %v1294, -inf
      %1389 = vmax.xlane.f32.xlu0 %v1388
      %v1390 = vpop.xlane.xlu0 %1389
      %v1391 = vsel %vm729, %v1297, -inf
      %1392 = vmax.xlane.f32.xlu0 %v1391
      %v1393 = vpop.xlane.xlu0 %1392
      %v1394 = vsel %vm729, %v1299, -inf
      %1395 = vmax.xlane.f32.xlu0 %v1394
      %v1396 = vpop.xlane.xlu0 %1395
      %v1397 = vmax.f32 %v1301, %v1327
      %v1398 = vmax.f32 %v1302, %v1330
      %v1399 = vmax.f32 %v1303, %v1333
      %v1400 = vmax.f32 %v1304, %v1336
      %v1401 = vmax.f32 %v1305, %v1339
      %v1402 = vmax.f32 %v1306, %v1342
      %v1403 = vmax.f32 %v1307, %v1345
      %v1404 = vmax.f32 %v1308, %v1348
      %v1405 = vmax.f32 %v1309, %v1351
      %v1406 = vmax.f32 %v1310, %v1354
      %v1407 = vmax.f32 %v1311, %v1357
      %v1408 = vmax.f32 %v1312, %v1360
      %v1409 = vmax.f32 %v1313, %v1363
      %v1410 = vmax.f32 %v1314, %v1366
      %v1411 = vmax.f32 %v1315, %v1369
      %v1412 = vmax.f32 %v1316, %v1372
      %v1413 = vmax.f32 %v1317, %v1375
      %v1414 = vmax.f32 %v1318, %v1378
      %v1415 = vmax.f32 %v1319, %v1381
      %v1416 = vmax.f32 %v1320, %v1384
      %v1417 = vmax.f32 %v1321, %v1387
      %v1418 = vmax.f32 %v1322, %v1390
      %v1419 = vmax.f32 %v1323, %v1393
      %v1420 = vmax.f32 %v1324, %v1396
      %v1421 = vsub.f32 %v1301, %v1397
      %v1422 = vsub.f32 %v1302, %v1398
      %v1423 = vsub.f32 %v1303, %v1399
      %v1424 = vsub.f32 %v1304, %v1400
      %v1425 = vsub.f32 %v1305, %v1401
      %v1426 = vsub.f32 %v1306, %v1402
      %v1427 = vsub.f32 %v1307, %v1403
      %v1428 = vsub.f32 %v1308, %v1404
      %v1429 = vsub.f32 %v1309, %v1405
      %v1430 = vsub.f32 %v1310, %v1406
      %v1431 = vsub.f32 %v1311, %v1407
      %v1432 = vsub.f32 %v1312, %v1408
      %v1433 = vsub.f32 %v1313, %v1409
      %v1434 = vsub.f32 %v1314, %v1410
      %v1435 = vsub.f32 %v1315, %v1411
      %v1436 = vsub.f32 %v1316, %v1412
      %v1437 = vsub.f32 %v1317, %v1413
      %v1438 = vsub.f32 %v1318, %v1414
      %v1439 = vsub.f32 %v1319, %v1415
      %v1440 = vsub.f32 %v1320, %v1416
      %v1441 = vsub.f32 %v1321, %v1417
      %v1442 = vsub.f32 %v1322, %v1418
      %v1443 = vsub.f32 %v1323, %v1419
      %v1444 = vsub.f32 %v1324, %v1420
      %v1445 = vmul.f32 %v1421, 1.442695
      %v1446 = vpow.pop %v1445
      %v1447 = vmul.f32 %v1422, 1.442695
      %v1448 = vpow.pop %v1447
      %v1449 = vmul.f32 %v1423, 1.442695
      %v1450 = vpow.pop %v1449
      %v1451 = vmul.f32 %v1424, 1.442695
      %v1452 = vpow.pop %v1451
      %v1453 = vmul.f32 %v1425, 1.442695
      %v1454 = vpow.pop %v1453
      %v1455 = vmul.f32 %v1426, 1.442695
      %v1456 = vpow.pop %v1455
      %v1457 = vmul.f32 %v1427, 1.442695
      %v1458 = vpow.pop %v1457
      %v1459 = vmul.f32 %v1428, 1.442695
      %v1460 = vpow.pop %v1459
      %v1461 = vmul.f32 %v1429, 1.442695
      %v1462 = vpow.pop %v1461
      %v1463 = vmul.f32 %v1430, 1.442695
      %v1464 = vpow.pop %v1463
      %v1465 = vmul.f32 %v1431, 1.442695
      %v1466 = vpow.pop %v1465
      %v1467 = vmul.f32 %v1432, 1.442695
      %v1468 = vpow.pop %v1467
      %v1469 = vmul.f32 %v1433, 1.442695
      %v1470 = vpow.pop %v1469
      %v1471 = vmul.f32 %v1434, 1.442695
      %v1472 = vpow.pop %v1471
      %v1473 = vmul.f32 %v1435, 1.442695
      %v1474 = vpow.pop %v1473
      %v1475 = vmul.f32 %v1436, 1.442695
      %v1476 = vpow.pop %v1475
      %v1477 = vmul.f32 %v1437, 1.442695
      %v1478 = vpow.pop %v1477
      %v1479 = vmul.f32 %v1438, 1.442695
      %v1480 = vpow.pop %v1479
      %v1481 = vmul.f32 %v1439, 1.442695
      %v1482 = vpow.pop %v1481
      %v1483 = vmul.f32 %v1440, 1.442695
      %v1484 = vpow.pop %v1483
      %v1485 = vmul.f32 %v1441, 1.442695
      %v1486 = vpow.pop %v1485
      %v1487 = vmul.f32 %v1442, 1.442695
      %v1488 = vpow.pop %v1487
      %v1489 = vmul.f32 %v1443, 1.442695
      %v1490 = vpow.pop %v1489
      %v1491 = vmul.f32 %v1444, 1.442695
      %v1492 = vpow.pop %v1491
      %1494 = vset.pattern.permute.xlu0 0
      %1495 = vperm.xlu0 %1494, %v1397
      %v1496 = vpop.permute.xlu0 %1495
      %1499 = vset.pattern.permute.xlu0 0
      %1500 = vperm.xlu0 %1499, %v1398
      %v1501 = vpop.permute.xlu0 %1500
      %1504 = vset.pattern.permute.xlu0 0
      %1505 = vperm.xlu0 %1504, %v1399
      %v1506 = vpop.permute.xlu0 %1505
      %1509 = vset.pattern.permute.xlu0 0
      %1510 = vperm.xlu0 %1509, %v1400
      %v1511 = vpop.permute.xlu0 %1510
      %1514 = vset.pattern.permute.xlu0 0
      %1515 = vperm.xlu0 %1514, %v1401
      %v1516 = vpop.permute.xlu0 %1515
      %1519 = vset.pattern.permute.xlu0 0
      %1520 = vperm.xlu0 %1519, %v1402
      %v1521 = vpop.permute.xlu0 %1520
      %1524 = vset.pattern.permute.xlu0 0
      %1525 = vperm.xlu0 %1524, %v1403
      %v1526 = vpop.permute.xlu0 %1525
      %1529 = vset.pattern.permute.xlu0 0
      %1530 = vperm.xlu0 %1529, %v1404
      %v1531 = vpop.permute.xlu0 %1530
      %1534 = vset.pattern.permute.xlu0 0
      %1535 = vperm.xlu0 %1534, %v1405
      %v1536 = vpop.permute.xlu0 %1535
      %1539 = vset.pattern.permute.xlu0 0
      %1540 = vperm.xlu0 %1539, %v1406
      %v1541 = vpop.permute.xlu0 %1540
      %1544 = vset.pattern.permute.xlu0 0
      %1545 = vperm.xlu0 %1544, %v1407
      %v1546 = vpop.permute.xlu0 %1545
      %1549 = vset.pattern.permute.xlu0 0
      %1550 = vperm.xlu0 %1549, %v1408
      %v1551 = vpop.permute.xlu0 %1550
      %1554 = vset.pattern.permute.xlu0 0
      %1555 = vperm.xlu0 %1554, %v1409
      %v1556 = vpop.permute.xlu0 %1555
      %1559 = vset.pattern.permute.xlu0 0
      %1560 = vperm.xlu0 %1559, %v1410
      %v1561 = vpop.permute.xlu0 %1560
      %1564 = vset.pattern.permute.xlu0 0
      %1565 = vperm.xlu0 %1564, %v1411
      %v1566 = vpop.permute.xlu0 %1565
      %1569 = vset.pattern.permute.xlu0 0
      %1570 = vperm.xlu0 %1569, %v1412
      %v1571 = vpop.permute.xlu0 %1570
      %1574 = vset.pattern.permute.xlu0 0
      %1575 = vperm.xlu0 %1574, %v1413
      %v1576 = vpop.permute.xlu0 %1575
      %1579 = vset.pattern.permute.xlu0 0
      %1580 = vperm.xlu0 %1579, %v1414
      %v1581 = vpop.permute.xlu0 %1580
      %1584 = vset.pattern.permute.xlu0 0
      %1585 = vperm.xlu0 %1584, %v1415
      %v1586 = vpop.permute.xlu0 %1585
      %1589 = vset.pattern.permute.xlu0 0
      %1590 = vperm.xlu0 %1589, %v1416
      %v1591 = vpop.permute.xlu0 %1590
      %1594 = vset.pattern.permute.xlu0 0
      %1595 = vperm.xlu0 %1594, %v1417
      %v1596 = vpop.permute.xlu0 %1595
      %1599 = vset.pattern.permute.xlu0 0
      %1600 = vperm.xlu0 %1599, %v1418
      %v1601 = vpop.permute.xlu0 %1600
      %1604 = vset.pattern.permute.xlu0 0
      %1605 = vperm.xlu0 %1604, %v1419
      %v1606 = vpop.permute.xlu0 %1605
      %1609 = vset.pattern.permute.xlu0 0
      %1610 = vperm.xlu0 %1609, %v1420
      %v1611 = vpop.permute.xlu0 %1610
      %v1613 = vsub.f32 %v1095, %v1496
      %v1614 = vsub.f32 %v1097, %v1501
      %v1615 = vsub.f32 %v1100, %v1506
      %v1616 = vsub.f32 %v1102, %v1511
      %v1617 = vsub.f32 %v1105, %v1516
      %v1618 = vsub.f32 %v1107, %v1521
      %v1619 = vsub.f32 %v1159, %v1526
      %v1620 = vsub.f32 %v1161, %v1531
      %v1621 = vsub.f32 %v1164, %v1536
      %v1622 = vsub.f32 %v1166, %v1541
      %v1623 = vsub.f32 %v1169, %v1546
      %v1624 = vsub.f32 %v1171, %v1551
      %v1625 = vsub.f32 %v1223, %v1556
      %v1626 = vsub.f32 %v1225, %v1561
      %v1627 = vsub.f32 %v1228, %v1566
      %v1628 = vsub.f32 %v1230, %v1571
      %v1629 = vsub.f32 %v1233, %v1576
      %v1630 = vsub.f32 %v1235, %v1581
      %v1631 = vsub.f32 %v1287, %v1586
      %v1632 = vsub.f32 %v1289, %v1591
      %v1633 = vsub.f32 %v1292, %v1596
      %v1634 = vsub.f32 %v1294, %v1601
      %v1635 = vsub.f32 %v1297, %v1606
      %v1636 = vsub.f32 %v1299, %v1611
      %v1637 = vmul.f32 %v1613, 1.442695
      %v1638 = vpow.pop %v1637
      %v1639 = vmul.f32 %v1614, 1.442695
      %v1640 = vpow.pop %v1639
      %v1641 = vmul.f32 %v1615, 1.442695
      %v1642 = vpow.pop %v1641
      %v1643 = vmul.f32 %v1616, 1.442695
      %v1644 = vpow.pop %v1643
      %v1645 = vmul.f32 %v1617, 1.442695
      %v1646 = vpow.pop %v1645
      %v1647 = vmul.f32 %v1618, 1.442695
      %v1648 = vpow.pop %v1647
      %v1649 = vmul.f32 %v1619, 1.442695
      %v1650 = vpow.pop %v1649
      %v1651 = vmul.f32 %v1620, 1.442695
      %v1652 = vpow.pop %v1651
      %v1653 = vmul.f32 %v1621, 1.442695
      %v1654 = vpow.pop %v1653
      %v1655 = vmul.f32 %v1622, 1.442695
      %v1656 = vpow.pop %v1655
      %v1657 = vmul.f32 %v1623, 1.442695
      %v1658 = vpow.pop %v1657
      %v1659 = vmul.f32 %v1624, 1.442695
      %v1660 = vpow.pop %v1659
      %v1661 = vmul.f32 %v1625, 1.442695
      %v1662 = vpow.pop %v1661
      %v1663 = vmul.f32 %v1626, 1.442695
      %v1664 = vpow.pop %v1663
      %v1665 = vmul.f32 %v1627, 1.442695
      %v1666 = vpow.pop %v1665
      %v1667 = vmul.f32 %v1628, 1.442695
      %v1668 = vpow.pop %v1667
      %v1669 = vmul.f32 %v1629, 1.442695
      %v1670 = vpow.pop %v1669
      %v1671 = vmul.f32 %v1630, 1.442695
      %v1672 = vpow.pop %v1671
      %v1673 = vmul.f32 %v1631, 1.442695
      %v1674 = vpow.pop %v1673
      %v1675 = vmul.f32 %v1632, 1.442695
      %v1676 = vpow.pop %v1675
      %v1677 = vmul.f32 %v1633, 1.442695
      %v1678 = vpow.pop %v1677
      %v1679 = vmul.f32 %v1634, 1.442695
      %v1680 = vpow.pop %v1679
      %v1681 = vmul.f32 %v1635, 1.442695
      %v1682 = vpow.pop %v1681
      %v1683 = vmul.f32 %v1636, 1.442695
      %v1684 = vpow.pop %v1683
      %v1685 = vld [vmem:[#allocation4] sm:$0xff]
      %v1686 = vld [vmem:[#allocation4 + $0x8] sm:$0xff]
      %v1687 = vld [vmem:[#allocation4 + $0x10] sm:$0xff]
      %v1688 = vld [vmem:[#allocation4 + $0x18] sm:$0xff]
      %v1689 = vld [vmem:[#allocation4 + $0x20] sm:$0xff]
      %v1690 = vld [vmem:[#allocation4 + $0x28] sm:$0xff]
      %v1691 = vld [vmem:[#allocation4 + $0x30] sm:$0xff]
      %v1692 = vld [vmem:[#allocation4 + $0x38] sm:$0xff]
      %v1693 = vld [vmem:[#allocation4 + $0x40] sm:$0xff]
      %v1694 = vld [vmem:[#allocation4 + $0x48] sm:$0xff]
      %v1695 = vld [vmem:[#allocation4 + $0x50] sm:$0xff]
      %v1696 = vld [vmem:[#allocation4 + $0x58] sm:$0xff]
      %v1697 = vld [vmem:[#allocation4 + $0x60] sm:$0xff]
      %v1698 = vld [vmem:[#allocation4 + $0x68] sm:$0xff]
      %v1699 = vld [vmem:[#allocation4 + $0x70] sm:$0xff]
      %v1700 = vld [vmem:[#allocation4 + $0x78] sm:$0xff]
      %v1701 = vld [vmem:[#allocation4 + $0x80] sm:$0xff]
      %v1702 = vld [vmem:[#allocation4 + $0x88] sm:$0xff]
      %v1703 = vld [vmem:[#allocation4 + $0x90] sm:$0xff]
      %v1704 = vld [vmem:[#allocation4 + $0x98] sm:$0xff]
      %v1705 = vld [vmem:[#allocation4 + $0xa0] sm:$0xff]
      %v1706 = vld [vmem:[#allocation4 + $0xa8] sm:$0xff]
      %v1707 = vld [vmem:[#allocation4 + $0xb0] sm:$0xff]
      %v1708 = vld [vmem:[#allocation4 + $0xb8] sm:$0xff]
      %v1709 = vmul.f32 %v1446, %v1685
      %v1710 = vmul.f32 %v1448, %v1686
      %v1711 = vmul.f32 %v1450, %v1687
      %v1712 = vmul.f32 %v1452, %v1688
      %v1713 = vmul.f32 %v1454, %v1689
      %v1714 = vmul.f32 %v1456, %v1690
      %v1715 = vmul.f32 %v1458, %v1691
      %v1716 = vmul.f32 %v1460, %v1692
      %v1717 = vmul.f32 %v1462, %v1693
      %v1718 = vmul.f32 %v1464, %v1694
      %v1719 = vmul.f32 %v1466, %v1695
      %v1720 = vmul.f32 %v1468, %v1696
      %v1721 = vmul.f32 %v1470, %v1697
      %v1722 = vmul.f32 %v1472, %v1698
      %v1723 = vmul.f32 %v1474, %v1699
      %v1724 = vmul.f32 %v1476, %v1700
      %v1725 = vmul.f32 %v1478, %v1701
      %v1726 = vmul.f32 %v1480, %v1702
      %v1727 = vmul.f32 %v1482, %v1703
      %v1728 = vmul.f32 %v1484, %v1704
      %v1729 = vmul.f32 %v1486, %v1705
      %v1730 = vmul.f32 %v1488, %v1706
      %v1731 = vmul.f32 %v1490, %v1707
      %v1732 = vmul.f32 %v1492, %v1708
      %v1733 = vsel %vm729, %v1638, 0.0
      %1734 = vadd.xlane.f32.xlu0 %v1733
      %v1735 = vpop.xlane.xlu0 %1734
      %v1736 = vsel %vm729, %v1640, 0.0
      %1737 = vadd.xlane.f32.xlu0 %v1736
      %v1738 = vpop.xlane.xlu0 %1737
      %v1739 = vsel %vm729, %v1642, 0.0
      %1740 = vadd.xlane.f32.xlu0 %v1739
      %v1741 = vpop.xlane.xlu0 %1740
      %v1742 = vsel %vm729, %v1644, 0.0
      %1743 = vadd.xlane.f32.xlu0 %v1742
      %v1744 = vpop.xlane.xlu0 %1743
      %v1745 = vsel %vm729, %v1646, 0.0
      %1746 = vadd.xlane.f32.xlu0 %v1745
      %v1747 = vpop.xlane.xlu0 %1746
      %v1748 = vsel %vm729, %v1648, 0.0
      %1749 = vadd.xlane.f32.xlu0 %v1748
      %v1750 = vpop.xlane.xlu0 %1749
      %v1751 = vsel %vm729, %v1650, 0.0
      %1752 = vadd.xlane.f32.xlu0 %v1751
      %v1753 = vpop.xlane.xlu0 %1752
      %v1754 = vsel %vm729, %v1652, 0.0
      %1755 = vadd.xlane.f32.xlu0 %v1754
      %v1756 = vpop.xlane.xlu0 %1755
      %v1757 = vsel %vm729, %v1654, 0.0
      %1758 = vadd.xlane.f32.xlu0 %v1757
      %v1759 = vpop.xlane.xlu0 %1758
      %v1760 = vsel %vm729, %v1656, 0.0
      %1761 = vadd.xlane.f32.xlu0 %v1760
      %v1762 = vpop.xlane.xlu0 %1761
      %v1763 = vsel %vm729, %v1658, 0.0
      %1764 = vadd.xlane.f32.xlu0 %v1763
      %v1765 = vpop.xlane.xlu0 %1764
      %v1766 = vsel %vm729, %v1660, 0.0
      %1767 = vadd.xlane.f32.xlu0 %v1766
      %v1768 = vpop.xlane.xlu0 %1767
      %v1769 = vsel %vm729, %v1662, 0.0
      %1770 = vadd.xlane.f32.xlu0 %v1769
      %v1771 = vpop.xlane.xlu0 %1770
      %v1772 = vsel %vm729, %v1664, 0.0
      %1773 = vadd.xlane.f32.xlu0 %v1772
      %v1774 = vpop.xlane.xlu0 %1773
      %v1775 = vsel %vm729, %v1666, 0.0
      %1776 = vadd.xlane.f32.xlu0 %v1775
      %v1777 = vpop.xlane.xlu0 %1776
      %v1778 = vsel %vm729, %v1668, 0.0
      %1779 = vadd.xlane.f32.xlu0 %v1778
      %v1780 = vpop.xlane.xlu0 %1779
      %v1781 = vsel %vm729, %v1670, 0.0
      %1782 = vadd.xlane.f32.xlu0 %v1781
      %v1783 = vpop.xlane.xlu0 %1782
      %v1784 = vsel %vm729, %v1672, 0.0
      %1785 = vadd.xlane.f32.xlu0 %v1784
      %v1786 = vpop.xlane.xlu0 %1785
      %v1787 = vsel %vm729, %v1674, 0.0
      %1788 = vadd.xlane.f32.xlu0 %v1787
      %v1789 = vpop.xlane.xlu0 %1788
      %v1790 = vsel %vm729, %v1676, 0.0
      %1791 = vadd.xlane.f32.xlu0 %v1790
      %v1792 = vpop.xlane.xlu0 %1791
      %v1793 = vsel %vm729, %v1678, 0.0
      %1794 = vadd.xlane.f32.xlu0 %v1793
      %v1795 = vpop.xlane.xlu0 %1794
      %v1796 = vsel %vm729, %v1680, 0.0
      %1797 = vadd.xlane.f32.xlu0 %v1796
      %v1798 = vpop.xlane.xlu0 %1797
      %v1799 = vsel %vm729, %v1682, 0.0
      %1800 = vadd.xlane.f32.xlu0 %v1799
      %v1801 = vpop.xlane.xlu0 %1800
      %v1802 = vsel %vm729, %v1684, 0.0
      %1803 = vadd.xlane.f32.xlu0 %v1802
      %v1804 = vpop.xlane.xlu0 %1803
      %v1805 = vadd.f32 %v1709, %v1735
      %v1806 = vadd.f32 %v1710, %v1738
      %v1807 = vadd.f32 %v1711, %v1741
      %v1808 = vadd.f32 %v1712, %v1744
      %v1809 = vadd.f32 %v1713, %v1747
      %v1810 = vadd.f32 %v1714, %v1750
      %v1811 = vadd.f32 %v1715, %v1753
      %v1812 = vadd.f32 %v1716, %v1756
      %v1813 = vadd.f32 %v1717, %v1759
      %v1814 = vadd.f32 %v1718, %v1762
      %v1815 = vadd.f32 %v1719, %v1765
      %v1816 = vadd.f32 %v1720, %v1768
      %v1817 = vadd.f32 %v1721, %v1771
      %v1818 = vadd.f32 %v1722, %v1774
      %v1819 = vadd.f32 %v1723, %v1777
      %v1820 = vadd.f32 %v1724, %v1780
      %v1821 = vadd.f32 %v1725, %v1783
      %v1822 = vadd.f32 %v1726, %v1786
      %v1823 = vadd.f32 %v1727, %v1789
      %v1824 = vadd.f32 %v1728, %v1792
      %v1825 = vadd.f32 %v1729, %v1795
      %v1826 = vadd.f32 %v1730, %v1798
      %v1827 = vadd.f32 %v1731, %v1801
      %v1828 = vadd.f32 %v1732, %v1804
      %vm1829 = vcmask 7168
      %1830 = vst.msk [vmem:[#allocation4] sm:$0xff] %vm1829, %v1805
      %1831 = vst.msk [vmem:[#allocation4 + $0x8] sm:$0xff] %vm1829, %v1806
      %1832 = vst.msk [vmem:[#allocation4 + $0x10] sm:$0xff] %vm1829, %v1807
      %1833 = vst.msk [vmem:[#allocation4 + $0x18] sm:$0xff] %vm1829, %v1808
      %1834 = vst.msk [vmem:[#allocation4 + $0x20] sm:$0xff] %vm1829, %v1809
      %1835 = vst.msk [vmem:[#allocation4 + $0x28] sm:$0xff] %vm1829, %v1810
      %1836 = vst.msk [vmem:[#allocation4 + $0x30] sm:$0xff] %vm1829, %v1811
      %1837 = vst.msk [vmem:[#allocation4 + $0x38] sm:$0xff] %vm1829, %v1812
      %1838 = vst.msk [vmem:[#allocation4 + $0x40] sm:$0xff] %vm1829, %v1813
      %1839 = vst.msk [vmem:[#allocation4 + $0x48] sm:$0xff] %vm1829, %v1814
      %1840 = vst.msk [vmem:[#allocation4 + $0x50] sm:$0xff] %vm1829, %v1815
      %1841 = vst.msk [vmem:[#allocation4 + $0x58] sm:$0xff] %vm1829, %v1816
      %1842 = vst.msk [vmem:[#allocation4 + $0x60] sm:$0xff] %vm1829, %v1817
      %1843 = vst.msk [vmem:[#allocation4 + $0x68] sm:$0xff] %vm1829, %v1818
      %1844 = vst.msk [vmem:[#allocation4 + $0x70] sm:$0xff] %vm1829, %v1819
      %1845 = vst.msk [vmem:[#allocation4 + $0x78] sm:$0xff] %vm1829, %v1820
      %1846 = vst.msk [vmem:[#allocation4 + $0x80] sm:$0xff] %vm1829, %v1821
      %1847 = vst.msk [vmem:[#allocation4 + $0x88] sm:$0xff] %vm1829, %v1822
      %1848 = vst.msk [vmem:[#allocation4 + $0x90] sm:$0xff] %vm1829, %v1823
      %1849 = vst.msk [vmem:[#allocation4 + $0x98] sm:$0xff] %vm1829, %v1824
      %1850 = vst.msk [vmem:[#allocation4 + $0xa0] sm:$0xff] %vm1829, %v1825
      %1851 = vst.msk [vmem:[#allocation4 + $0xa8] sm:$0xff] %vm1829, %v1826
      %1852 = vst.msk [vmem:[#allocation4 + $0xb0] sm:$0xff] %vm1829, %v1827
      %1853 = vst.msk [vmem:[#allocation4 + $0xb8] sm:$0xff] %vm1829, %v1828
      %v1854 = vld [vmem:[#allocation5] sm:$0xff]
      %v1855 = vld [vmem:[#allocation5 + $0x8] sm:$0xff]
      %v1856 = vld [vmem:[#allocation5 + $0x10] sm:$0xff]
      %v1857 = vld [vmem:[#allocation5 + $0x18] sm:$0xff]
      %v1858 = vld [vmem:[#allocation5 + $0x20] sm:$0xff]
      %v1859 = vld [vmem:[#allocation5 + $0x28] sm:$0xff]
      %v1860 = vld [vmem:[#allocation5 + $0x30] sm:$0xff]
      %v1861 = vld [vmem:[#allocation5 + $0x38] sm:$0xff]
      %v1862 = vld [vmem:[#allocation5 + $0x40] sm:$0xff]
      %v1863 = vld [vmem:[#allocation5 + $0x48] sm:$0xff]
      %v1864 = vld [vmem:[#allocation5 + $0x50] sm:$0xff]
      %v1865 = vld [vmem:[#allocation5 + $0x58] sm:$0xff]
      %v1866 = vld [vmem:[#allocation5 + $0x60] sm:$0xff]
      %v1867 = vld [vmem:[#allocation5 + $0x68] sm:$0xff]
      %v1868 = vld [vmem:[#allocation5 + $0x70] sm:$0xff]
      %v1869 = vld [vmem:[#allocation5 + $0x78] sm:$0xff]
      %v1870 = vld [vmem:[#allocation5 + $0x80] sm:$0xff]
      %v1871 = vld [vmem:[#allocation5 + $0x88] sm:$0xff]
      %v1872 = vld [vmem:[#allocation5 + $0x90] sm:$0xff]
      %v1873 = vld [vmem:[#allocation5 + $0x98] sm:$0xff]
      %v1874 = vld [vmem:[#allocation5 + $0xa0] sm:$0xff]
      %v1875 = vld [vmem:[#allocation5 + $0xa8] sm:$0xff]
      %v1876 = vld [vmem:[#allocation5 + $0xb0] sm:$0xff]
      %v1877 = vld [vmem:[#allocation5 + $0xb8] sm:$0xff]
      %1879 = vset.pattern.permute.xlu0 0
      %1880 = vperm.xlu0 %1879, %v1446
      %v1881 = vpop.permute.xlu0 %1880
      %1884 = vset.pattern.permute.xlu0 0
      %1885 = vperm.xlu0 %1884, %v1448
      %v1886 = vpop.permute.xlu0 %1885
      %1889 = vset.pattern.permute.xlu0 0
      %1890 = vperm.xlu0 %1889, %v1450
      %v1891 = vpop.permute.xlu0 %1890
      %1894 = vset.pattern.permute.xlu0 0
      %1895 = vperm.xlu0 %1894, %v1452
      %v1896 = vpop.permute.xlu0 %1895
      %1899 = vset.pattern.permute.xlu0 0
      %1900 = vperm.xlu0 %1899, %v1454
      %v1901 = vpop.permute.xlu0 %1900
      %1904 = vset.pattern.permute.xlu0 0
      %1905 = vperm.xlu0 %1904, %v1456
      %v1906 = vpop.permute.xlu0 %1905
      %1909 = vset.pattern.permute.xlu0 0
      %1910 = vperm.xlu0 %1909, %v1458
      %v1911 = vpop.permute.xlu0 %1910
      %1914 = vset.pattern.permute.xlu0 0
      %1915 = vperm.xlu0 %1914, %v1460
      %v1916 = vpop.permute.xlu0 %1915
      %1919 = vset.pattern.permute.xlu0 0
      %1920 = vperm.xlu0 %1919, %v1462
      %v1921 = vpop.permute.xlu0 %1920
      %1924 = vset.pattern.permute.xlu0 0
      %1925 = vperm.xlu0 %1924, %v1464
      %v1926 = vpop.permute.xlu0 %1925
      %1929 = vset.pattern.permute.xlu0 0
      %1930 = vperm.xlu0 %1929, %v1466
      %v1931 = vpop.permute.xlu0 %1930
      %1934 = vset.pattern.permute.xlu0 0
      %1935 = vperm.xlu0 %1934, %v1468
      %v1936 = vpop.permute.xlu0 %1935
      %1939 = vset.pattern.permute.xlu0 0
      %1940 = vperm.xlu0 %1939, %v1470
      %v1941 = vpop.permute.xlu0 %1940
      %1944 = vset.pattern.permute.xlu0 0
      %1945 = vperm.xlu0 %1944, %v1472
      %v1946 = vpop.permute.xlu0 %1945
      %1949 = vset.pattern.permute.xlu0 0
      %1950 = vperm.xlu0 %1949, %v1474
      %v1951 = vpop.permute.xlu0 %1950
      %1954 = vset.pattern.permute.xlu0 0
      %1955 = vperm.xlu0 %1954, %v1476
      %v1956 = vpop.permute.xlu0 %1955
      %1959 = vset.pattern.permute.xlu0 0
      %1960 = vperm.xlu0 %1959, %v1478
      %v1961 = vpop.permute.xlu0 %1960
      %1964 = vset.pattern.permute.xlu0 0
      %1965 = vperm.xlu0 %1964, %v1480
      %v1966 = vpop.permute.xlu0 %1965
      %1969 = vset.pattern.permute.xlu0 0
      %1970 = vperm.xlu0 %1969, %v1482
      %v1971 = vpop.permute.xlu0 %1970
      %1974 = vset.pattern.permute.xlu0 0
      %1975 = vperm.xlu0 %1974, %v1484
      %v1976 = vpop.permute.xlu0 %1975
      %1979 = vset.pattern.permute.xlu0 0
      %1980 = vperm.xlu0 %1979, %v1486
      %v1981 = vpop.permute.xlu0 %1980
      %1984 = vset.pattern.permute.xlu0 0
      %1985 = vperm.xlu0 %1984, %v1488
      %v1986 = vpop.permute.xlu0 %1985
      %1989 = vset.pattern.permute.xlu0 0
      %1990 = vperm.xlu0 %1989, %v1490
      %v1991 = vpop.permute.xlu0 %1990
      %1994 = vset.pattern.permute.xlu0 0
      %1995 = vperm.xlu0 %1994, %v1492
      %v1996 = vpop.permute.xlu0 %1995
      %v1998 = vmul.f32 %v1881, %v1854
      %v1999 = vmul.f32 %v1886, %v1855
      %v2000 = vmul.f32 %v1891, %v1856
      %v2001 = vmul.f32 %v1896, %v1857
      %v2002 = vmul.f32 %v1901, %v1858
      %v2003 = vmul.f32 %v1906, %v1859
      %v2004 = vmul.f32 %v1911, %v1860
      %v2005 = vmul.f32 %v1916, %v1861
      %v2006 = vmul.f32 %v1921, %v1862
      %v2007 = vmul.f32 %v1926, %v1863
      %v2008 = vmul.f32 %v1931, %v1864
      %v2009 = vmul.f32 %v1936, %v1865
      %v2010 = vmul.f32 %v1941, %v1866
      %v2011 = vmul.f32 %v1946, %v1867
      %v2012 = vmul.f32 %v1951, %v1868
      %v2013 = vmul.f32 %v1956, %v1869
      %v2014 = vmul.f32 %v1961, %v1870
      %v2015 = vmul.f32 %v1966, %v1871
      %v2016 = vmul.f32 %v1971, %v1872
      %v2017 = vmul.f32 %v1976, %v1873
      %v2018 = vmul.f32 %v1981, %v1874
      %v2019 = vmul.f32 %v1986, %v1875
      %v2020 = vmul.f32 %v1991, %v1876
      %v2021 = vmul.f32 %v1996, %v1877
      %v2022 = vpack.c.bf16 %v1638, %v1638
      %v2023 = vpack.c.bf16 %v1640, %v1640
      %v2024 = vpack.c.bf16 %v1642, %v1642
      %v2025 = vpack.c.bf16 %v1644, %v1644
      %v2026 = vpack.c.bf16 %v1646, %v1646
      %v2027 = vpack.c.bf16 %v1648, %v1648
      %v2028 = vpack.c.bf16 %v1650, %v1650
      %v2029 = vpack.c.bf16 %v1652, %v1652
      %v2030 = vpack.c.bf16 %v1654, %v1654
      %v2031 = vpack.c.bf16 %v1656, %v1656
      %v2032 = vpack.c.bf16 %v1658, %v1658
      %v2033 = vpack.c.bf16 %v1660, %v1660
      %v2034 = vpack.c.bf16 %v1662, %v1662
      %v2035 = vpack.c.bf16 %v1664, %v1664
      %v2036 = vpack.c.bf16 %v1666, %v1666
      %v2037 = vpack.c.bf16 %v1668, %v1668
      %v2038 = vpack.c.bf16 %v1670, %v1670
      %v2039 = vpack.c.bf16 %v1672, %v1672
      %v2040 = vpack.c.bf16 %v1674, %v1674
      %v2041 = vpack.c.bf16 %v1676, %v1676
      %v2042 = vpack.c.bf16 %v1678, %v1678
      %v2043 = vpack.c.bf16 %v1680, %v1680
      %v2044 = vpack.c.bf16 %v1682, %v1682
      %v2045 = vpack.c.bf16 %v1684, %v1684
      %v2052 = vunpack.c.l.b16 %v2022
      %v2053 = vunpack.c.l.b16 %v2023
      %v2054 = vunpack.c.l.b16 %v2024
      %v2055 = vunpack.c.l.b16 %v2025
      %v2056 = vunpack.c.l.b16 %v2026
      %v2057 = vunpack.c.l.b16 %v2027
      %v2058 = vpack.c.b16 %v2053, %v2052
      %v2059 = vpack.c.b16 %v2055, %v2054
      %v2060 = vpack.c.b16 %v2057, %v2056
      %v2065 = vunpack.c.l.b16 %v1004
      %v2066 = vunpack.c.l.b16 %v1005
      %v2067 = vunpack.c.l.b16 %v1006
      %v2068 = vunpack.c.l.b16 %v1007
      %v2069 = vpack.c.b16 %v2066, %v2065
      %v2070 = vpack.c.b16 %v2068, %v2067
      %v2074 = vsel %vm729, %v2058, 0
      %v2077 = vsel %vm729, %v2059, 0
      %v2080 = vsel %vm729, %v2060, 0
      %2082 = vmatpush.bf16.msra.mxu0 0
      %2083 = vmatpush.bf16.msra.mxu0 0
      %2084 = vmatpush.bf16.msra.mxu0 0
      %2085 = vmatpush.bf16.msra.mxu0 0
      %2086 = vmatpush.bf16.msra.mxu0 0
      %2087 = vmatpush.bf16.msra.mxu0 0
      %2088 = vmatpush.bf16.msra.mxu0 %v2070
      %2089 = vmatpush.bf16.msra.mxu0 %v2069
      %2090 = vmatmul.bf16.gmra.mxu0 %v2074
      %v2091 = vpop.f32.mrf.mxu0
      %v2092 = vadd.f32 0.0, %v2091
      %v2093 = vpop.f32.mrf.mxu0
      %v2094 = vadd.f32 0.0, %v2093
      %2095 = vmatmul.bf16.gmra.mxu0 %v2077
      %v2096 = vpop.f32.mrf.mxu0
      %v2097 = vadd.f32 0.0, %v2096
      %v2098 = vpop.f32.mrf.mxu0
      %v2099 = vadd.f32 0.0, %v2098
      %2100 = vmatmul.bf16.gmra.mxu0 %v2080
      %v2101 = vpop.f32.mrf.mxu0
      %v2102 = vadd.f32 0.0, %v2101
      %v2103 = vpop.f32.mrf.mxu0
      %v2104 = vadd.f32 0.0, %v2103
      %2105 = vdwg.mxu0
      %v2112 = vunpack.c.l.b16 %v2028
      %v2113 = vunpack.c.l.b16 %v2029
      %v2114 = vunpack.c.l.b16 %v2030
      %v2115 = vunpack.c.l.b16 %v2031
      %v2116 = vunpack.c.l.b16 %v2032
      %v2117 = vunpack.c.l.b16 %v2033
      %v2118 = vpack.c.b16 %v2113, %v2112
      %v2119 = vpack.c.b16 %v2115, %v2114
      %v2120 = vpack.c.b16 %v2117, %v2116
      %v2125 = vunpack.c.l.b16 %v1008
      %v2126 = vunpack.c.l.b16 %v1009
      %v2127 = vunpack.c.l.b16 %v1010
      %v2128 = vunpack.c.l.b16 %v1011
      %v2129 = vpack.c.b16 %v2126, %v2125
      %v2130 = vpack.c.b16 %v2128, %v2127
      %v2134 = vsel %vm729, %v2118, 0
      %v2137 = vsel %vm729, %v2119, 0
      %v2140 = vsel %vm729, %v2120, 0
      %2142 = vmatpush.bf16.msra.mxu0 0
      %2143 = vmatpush.bf16.msra.mxu0 0
      %2144 = vmatpush.bf16.msra.mxu0 0
      %2145 = vmatpush.bf16.msra.mxu0 0
      %2146 = vmatpush.bf16.msra.mxu0 0
      %2147 = vmatpush.bf16.msra.mxu0 0
      %2148 = vmatpush.bf16.msra.mxu0 %v2130
      %2149 = vmatpush.bf16.msra.mxu0 %v2129
      %2150 = vmatmul.bf16.gmra.mxu0 %v2134
      %v2151 = vpop.f32.mrf.mxu0
      %v2152 = vadd.f32 0.0, %v2151
      %v2153 = vpop.f32.mrf.mxu0
      %v2154 = vadd.f32 0.0, %v2153
      %2155 = vmatmul.bf16.gmra.mxu0 %v2137
      %v2156 = vpop.f32.mrf.mxu0
      %v2157 = vadd.f32 0.0, %v2156
      %v2158 = vpop.f32.mrf.mxu0
      %v2159 = vadd.f32 0.0, %v2158
      %2160 = vmatmul.bf16.gmra.mxu0 %v2140
      %v2161 = vpop.f32.mrf.mxu0
      %v2162 = vadd.f32 0.0, %v2161
      %v2163 = vpop.f32.mrf.mxu0
      %v2164 = vadd.f32 0.0, %v2163
      %2165 = vdwg.mxu0
      %v2172 = vunpack.c.l.b16 %v2034
      %v2173 = vunpack.c.l.b16 %v2035
      %v2174 = vunpack.c.l.b16 %v2036
      %v2175 = vunpack.c.l.b16 %v2037
      %v2176 = vunpack.c.l.b16 %v2038
      %v2177 = vunpack.c.l.b16 %v2039
      %v2178 = vpack.c.b16 %v2173, %v2172
      %v2179 = vpack.c.b16 %v2175, %v2174
      %v2180 = vpack.c.b16 %v2177, %v2176
      %v2185 = vunpack.c.l.b16 %v1012
      %v2186 = vunpack.c.l.b16 %v1013
      %v2187 = vunpack.c.l.b16 %v1014
      %v2188 = vunpack.c.l.b16 %v1015
      %v2189 = vpack.c.b16 %v2186, %v2185
      %v2190 = vpack.c.b16 %v2188, %v2187
      %v2194 = vsel %vm729, %v2178, 0
      %v2197 = vsel %vm729, %v2179, 0
      %v2200 = vsel %vm729, %v2180, 0
      %2202 = vmatpush.bf16.msra.mxu0 0
      %2203 = vmatpush.bf16.msra.mxu0 0
      %2204 = vmatpush.bf16.msra.mxu0 0
      %2205 = vmatpush.bf16.msra.mxu0 0
      %2206 = vmatpush.bf16.msra.mxu0 0
      %2207 = vmatpush.bf16.msra.mxu0 0
      %2208 = vmatpush.bf16.msra.mxu0 %v2190
      %2209 = vmatpush.bf16.msra.mxu0 %v2189
      %2210 = vmatmul.bf16.gmra.mxu0 %v2194
      %v2211 = vpop.f32.mrf.mxu0
      %v2212 = vadd.f32 0.0, %v2211
      %v2213 = vpop.f32.mrf.mxu0
      %v2214 = vadd.f32 0.0, %v2213
      %2215 = vmatmul.bf16.gmra.mxu0 %v2197
      %v2216 = vpop.f32.mrf.mxu0
      %v2217 = vadd.f32 0.0, %v2216
      %v2218 = vpop.f32.mrf.mxu0
      %v2219 = vadd.f32 0.0, %v2218
      %2220 = vmatmul.bf16.gmra.mxu0 %v2200
      %v2221 = vpop.f32.mrf.mxu0
      %v2222 = vadd.f32 0.0, %v2221
      %v2223 = vpop.f32.mrf.mxu0
      %v2224 = vadd.f32 0.0, %v2223
      %2225 = vdwg.mxu0
      %v2232 = vunpack.c.l.b16 %v2040
      %v2233 = vunpack.c.l.b16 %v2041
      %v2234 = vunpack.c.l.b16 %v2042
      %v2235 = vunpack.c.l.b16 %v2043
      %v2236 = vunpack.c.l.b16 %v2044
      %v2237 = vunpack.c.l.b16 %v2045
      %v2238 = vpack.c.b16 %v2233, %v2232
      %v2239 = vpack.c.b16 %v2235, %v2234
      %v2240 = vpack.c.b16 %v2237, %v2236
      %v2245 = vunpack.c.l.b16 %v1016
      %v2246 = vunpack.c.l.b16 %v1017
      %v2247 = vunpack.c.l.b16 %v1018
      %v2248 = vunpack.c.l.b16 %v1019
      %v2249 = vpack.c.b16 %v2246, %v2245
      %v2250 = vpack.c.b16 %v2248, %v2247
      %v2254 = vsel %vm729, %v2238, 0
      %v2257 = vsel %vm729, %v2239, 0
      %v2260 = vsel %vm729, %v2240, 0
      %2262 = vmatpush.bf16.msra.mxu0 0
      %2263 = vmatpush.bf16.msra.mxu0 0
      %2264 = vmatpush.bf16.msra.mxu0 0
      %2265 = vmatpush.bf16.msra.mxu0 0
      %2266 = vmatpush.bf16.msra.mxu0 0
      %2267 = vmatpush.bf16.msra.mxu0 0
      %2268 = vmatpush.bf16.msra.mxu0 %v2250
      %2269 = vmatpush.bf16.msra.mxu0 %v2249
      %2270 = vmatmul.bf16.gmra.mxu0 %v2254
      %v2271 = vpop.f32.mrf.mxu0
      %v2272 = vadd.f32 0.0, %v2271
      %v2273 = vpop.f32.mrf.mxu0
      %v2274 = vadd.f32 0.0, %v2273
      %2275 = vmatmul.bf16.gmra.mxu0 %v2257
      %v2276 = vpop.f32.mrf.mxu0
      %v2277 = vadd.f32 0.0, %v2276
      %v2278 = vpop.f32.mrf.mxu0
      %v2279 = vadd.f32 0.0, %v2278
      %2280 = vmatmul.bf16.gmra.mxu0 %v2260
      %v2281 = vpop.f32.mrf.mxu0
      %v2282 = vadd.f32 0.0, %v2281
      %v2283 = vpop.f32.mrf.mxu0
      %v2284 = vadd.f32 0.0, %v2283
      %2285 = vdwg.mxu0
      %v2286 = vadd.f32 %v1998, %v2092
      %v2287 = vadd.f32 %v1999, %v2094
      %v2288 = vadd.f32 %v2000, %v2097
      %v2289 = vadd.f32 %v2001, %v2099
      %v2290 = vadd.f32 %v2002, %v2102
      %v2291 = vadd.f32 %v2003, %v2104
      %v2292 = vadd.f32 %v2004, %v2152
      %v2293 = vadd.f32 %v2005, %v2154
      %v2294 = vadd.f32 %v2006, %v2157
      %v2295 = vadd.f32 %v2007, %v2159
      %v2296 = vadd.f32 %v2008, %v2162
      %v2297 = vadd.f32 %v2009, %v2164
      %v2298 = vadd.f32 %v2010, %v2212
      %v2299 = vadd.f32 %v2011, %v2214
      %v2300 = vadd.f32 %v2012, %v2217
      %v2301 = vadd.f32 %v2013, %v2219
      %v2302 = vadd.f32 %v2014, %v2222
      %v2303 = vadd.f32 %v2015, %v2224
      %v2304 = vadd.f32 %v2016, %v2272
      %v2305 = vadd.f32 %v2017, %v2274
      %v2306 = vadd.f32 %v2018, %v2277
      %v2307 = vadd.f32 %v2019, %v2279
      %v2308 = vadd.f32 %v2020, %v2282
      %v2309 = vadd.f32 %v2021, %v2284
      %2310 = vst.msk [vmem:[#allocation5] sm:$0xff] %vm1069, %v2286
      %2311 = vst.msk [vmem:[#allocation5 + $0x8] sm:$0xff] %vm1069, %v2287
      %2312 = vst.msk [vmem:[#allocation5 + $0x10] sm:$0xff] %vm1069, %v2288
      %2313 = vst.msk [vmem:[#allocation5 + $0x18] sm:$0xff] %vm1069, %v2289
      %2314 = vst.msk [vmem:[#allocation5 + $0x20] sm:$0xff] %vm1069, %v2290
      %2315 = vst.msk [vmem:[#allocation5 + $0x28] sm:$0xff] %vm1069, %v2291
      %2316 = vst.msk [vmem:[#allocation5 + $0x30] sm:$0xff] %vm1069, %v2292
      %2317 = vst.msk [vmem:[#allocation5 + $0x38] sm:$0xff] %vm1069, %v2293
      %2318 = vst.msk [vmem:[#allocation5 + $0x40] sm:$0xff] %vm1069, %v2294
      %2319 = vst.msk [vmem:[#allocation5 + $0x48] sm:$0xff] %vm1069, %v2295
      %2320 = vst.msk [vmem:[#allocation5 + $0x50] sm:$0xff] %vm1069, %v2296
      %2321 = vst.msk [vmem:[#allocation5 + $0x58] sm:$0xff] %vm1069, %v2297
      %2322 = vst.msk [vmem:[#allocation5 + $0x60] sm:$0xff] %vm1069, %v2298
      %2323 = vst.msk [vmem:[#allocation5 + $0x68] sm:$0xff] %vm1069, %v2299
      %2324 = vst.msk [vmem:[#allocation5 + $0x70] sm:$0xff] %vm1069, %v2300
      %2325 = vst.msk [vmem:[#allocation5 + $0x78] sm:$0xff] %vm1069, %v2301
      %2326 = vst.msk [vmem:[#allocation5 + $0x80] sm:$0xff] %vm1069, %v2302
      %2327 = vst.msk [vmem:[#allocation5 + $0x88] sm:$0xff] %vm1069, %v2303
      %2328 = vst.msk [vmem:[#allocation5 + $0x90] sm:$0xff] %vm1069, %v2304
      %2329 = vst.msk [vmem:[#allocation5 + $0x98] sm:$0xff] %vm1069, %v2305
      %2330 = vst.msk [vmem:[#allocation5 + $0xa0] sm:$0xff] %vm1069, %v2306
      %2331 = vst.msk [vmem:[#allocation5 + $0xa8] sm:$0xff] %vm1069, %v2307
      %2332 = vst.msk [vmem:[#allocation5 + $0xb0] sm:$0xff] %vm1069, %v2308
      %2333 = vst.msk [vmem:[#allocation5 + $0xb8] sm:$0xff] %vm1069, %v2309
      %2334 = vst.msk [vmem:[#allocation3] sm:$0xff] %vm1829, %v1397
      %2335 = vst.msk [vmem:[#allocation3 + $0x8] sm:$0xff] %vm1829, %v1398
      %2336 = vst.msk [vmem:[#allocation3 + $0x10] sm:$0xff] %vm1829, %v1399
      %2337 = vst.msk [vmem:[#allocation3 + $0x18] sm:$0xff] %vm1829, %v1400
      %2338 = vst.msk [vmem:[#allocation3 + $0x20] sm:$0xff] %vm1829, %v1401
      %2339 = vst.msk [vmem:[#allocation3 + $0x28] sm:$0xff] %vm1829, %v1402
      %2340 = vst.msk [vmem:[#allocation3 + $0x30] sm:$0xff] %vm1829, %v1403
      %2341 = vst.msk [vmem:[#allocation3 + $0x38] sm:$0xff] %vm1829, %v1404
      %2342 = vst.msk [vmem:[#allocation3 + $0x40] sm:$0xff] %vm1829, %v1405
      %2343 = vst.msk [vmem:[#allocation3 + $0x48] sm:$0xff] %vm1829, %v1406
      %2344 = vst.msk [vmem:[#allocation3 + $0x50] sm:$0xff] %vm1829, %v1407
      %2345 = vst.msk [vmem:[#allocation3 + $0x58] sm:$0xff] %vm1829, %v1408
      %2346 = vst.msk [vmem:[#allocation3 + $0x60] sm:$0xff] %vm1829, %v1409
      %2347 = vst.msk [vmem:[#allocation3 + $0x68] sm:$0xff] %vm1829, %v1410
      %2348 = vst.msk [vmem:[#allocation3 + $0x70] sm:$0xff] %vm1829, %v1411
      %2349 = vst.msk [vmem:[#allocation3 + $0x78] sm:$0xff] %vm1829, %v1412
      %2350 = vst.msk [vmem:[#allocation3 + $0x80] sm:$0xff] %vm1829, %v1413
      %2351 = vst.msk [vmem:[#allocation3 + $0x88] sm:$0xff] %vm1829, %v1414
      %2352 = vst.msk [vmem:[#allocation3 + $0x90] sm:$0xff] %vm1829, %v1415
      %2353 = vst.msk [vmem:[#allocation3 + $0x98] sm:$0xff] %vm1829, %v1416
      %2354 = vst.msk [vmem:[#allocation3 + $0xa0] sm:$0xff] %vm1829, %v1417
      %2355 = vst.msk [vmem:[#allocation3 + $0xa8] sm:$0xff] %vm1829, %v1418
      %2356 = vst.msk [vmem:[#allocation3 + $0xb0] sm:$0xff] %vm1829, %v1419
      %2357 = vst.msk [vmem:[#allocation3 + $0xb8] sm:$0xff] %vm1829, %v1420
      %p2358 = scmp.eq.s32.totalorder %s24, 2
      // Predicated region
      $region49: #{tpu_custom_call.1} parent=43 // pred_check
        %p2359 = pneg %p2358
      $region50: #{tpu_custom_call.1} parent=43 // pred_check_branch
        %2361 = sbr.rel (%p2359) target = $region52
      $region51: #{tpu_custom_call.1} parent=43 // pred_region
        %v2362 = vld [vmem:[#allocation4] sm:$0xff]
        %v2363 = vld [vmem:[#allocation4 + $0x8] sm:$0xff]
        %v2364 = vld [vmem:[#allocation4 + $0x10] sm:$0xff]
        %v2365 = vld [vmem:[#allocation4 + $0x18] sm:$0xff]
        %v2366 = vld [vmem:[#allocation4 + $0x20] sm:$0xff]
        %v2367 = vld [vmem:[#allocation4 + $0x28] sm:$0xff]
        %v2368 = vld [vmem:[#allocation4 + $0x30] sm:$0xff]
        %v2369 = vld [vmem:[#allocation4 + $0x38] sm:$0xff]
        %v2370 = vld [vmem:[#allocation4 + $0x40] sm:$0xff]
        %v2371 = vld [vmem:[#allocation4 + $0x48] sm:$0xff]
        %v2372 = vld [vmem:[#allocation4 + $0x50] sm:$0xff]
        %v2373 = vld [vmem:[#allocation4 + $0x58] sm:$0xff]
        %v2374 = vld [vmem:[#allocation4 + $0x60] sm:$0xff]
        %v2375 = vld [vmem:[#allocation4 + $0x68] sm:$0xff]
        %v2376 = vld [vmem:[#allocation4 + $0x70] sm:$0xff]
        %v2377 = vld [vmem:[#allocation4 + $0x78] sm:$0xff]
        %v2378 = vld [vmem:[#allocation4 + $0x80] sm:$0xff]
        %v2379 = vld [vmem:[#allocation4 + $0x88] sm:$0xff]
        %v2380 = vld [vmem:[#allocation4 + $0x90] sm:$0xff]
        %v2381 = vld [vmem:[#allocation4 + $0x98] sm:$0xff]
        %v2382 = vld [vmem:[#allocation4 + $0xa0] sm:$0xff]
        %v2383 = vld [vmem:[#allocation4 + $0xa8] sm:$0xff]
        %v2384 = vld [vmem:[#allocation4 + $0xb0] sm:$0xff]
        %v2385 = vld [vmem:[#allocation4 + $0xb8] sm:$0xff]
        %v2386 = vrcp.pop %v2362
        %v2387 = vmul.f32 %v2362, %v2386
        %v2388 = vsub.f32 1.0, %v2387
        %v2389 = vmul.f32 %v2386, %v2388
        %v2390 = vadd.f32 %v2386, %v2389
        %vm2391 = vweird.f32 %v2362
        %vm2392 = vweird.f32 %v2386
        %vm2393 = vmor %vm2391, %vm2392
        %v2394 = vsel %vm2393, %v2386, %v2390
        %v2395 = vand.u32 2147483647, %v2362
        %vm2396 = vcmp.eq.f32.partialorder %v2395, 8.507059e+37
        %v2397 = vand.u32 %v2362, 2147483648
        %v2398 = vor.u32 1.1754944e-38, %v2397
        %v2399 = vsel %vm2396, %v2398, %v2394
        %v2400 = vrcp.pop %v2363
        %v2401 = vmul.f32 %v2363, %v2400
        %v2402 = vsub.f32 1.0, %v2401
        %v2403 = vmul.f32 %v2400, %v2402
        %v2404 = vadd.f32 %v2400, %v2403
        %vm2405 = vweird.f32 %v2363
        %vm2406 = vweird.f32 %v2400
        %vm2407 = vmor %vm2405, %vm2406
        %v2408 = vsel %vm2407, %v2400, %v2404
        %v2409 = vand.u32 2147483647, %v2363
        %vm2410 = vcmp.eq.f32.partialorder %v2409, 8.507059e+37
        %v2411 = vand.u32 %v2363, 2147483648
        %v2412 = vor.u32 1.1754944e-38, %v2411
        %v2413 = vsel %vm2410, %v2412, %v2408
        %v2414 = vrcp.pop %v2364
        %v2415 = vmul.f32 %v2364, %v2414
        %v2416 = vsub.f32 1.0, %v2415
        %v2417 = vmul.f32 %v2414, %v2416
        %v2418 = vadd.f32 %v2414, %v2417
        %vm2419 = vweird.f32 %v2364
        %vm2420 = vweird.f32 %v2414
        %vm2421 = vmor %vm2419, %vm2420
        %v2422 = vsel %vm2421, %v2414, %v2418
        %v2423 = vand.u32 2147483647, %v2364
        %vm2424 = vcmp.eq.f32.partialorder %v2423, 8.507059e+37
        %v2425 = vand.u32 %v2364, 2147483648
        %v2426 = vor.u32 1.1754944e-38, %v2425
        %v2427 = vsel %vm2424, %v2426, %v2422
        %v2428 = vrcp.pop %v2365
        %v2429 = vmul.f32 %v2365, %v2428
        %v2430 = vsub.f32 1.0, %v2429
        %v2431 = vmul.f32 %v2428, %v2430
        %v2432 = vadd.f32 %v2428, %v2431
        %vm2433 = vweird.f32 %v2365
        %vm2434 = vweird.f32 %v2428
        %vm2435 = vmor %vm2433, %vm2434
        %v2436 = vsel %vm2435, %v2428, %v2432
        %v2437 = vand.u32 2147483647, %v2365
        %vm2438 = vcmp.eq.f32.partialorder %v2437, 8.507059e+37
        %v2439 = vand.u32 %v2365, 2147483648
        %v2440 = vor.u32 1.1754944e-38, %v2439
        %v2441 = vsel %vm2438, %v2440, %v2436
        %v2442 = vrcp.pop %v2366
        %v2443 = vmul.f32 %v2366, %v2442
        %v2444 = vsub.f32 1.0, %v2443
        %v2445 = vmul.f32 %v2442, %v2444
        %v2446 = vadd.f32 %v2442, %v2445
        %vm2447 = vweird.f32 %v2366
        %vm2448 = vweird.f32 %v2442
        %vm2449 = vmor %vm2447, %vm2448
        %v2450 = vsel %vm2449, %v2442, %v2446
        %v2451 = vand.u32 2147483647, %v2366
        %vm2452 = vcmp.eq.f32.partialorder %v2451, 8.507059e+37
        %v2453 = vand.u32 %v2366, 2147483648
        %v2454 = vor.u32 1.1754944e-38, %v2453
        %v2455 = vsel %vm2452, %v2454, %v2450
        %v2456 = vrcp.pop %v2367
        %v2457 = vmul.f32 %v2367, %v2456
        %v2458 = vsub.f32 1.0, %v2457
        %v2459 = vmul.f32 %v2456, %v2458
        %v2460 = vadd.f32 %v2456, %v2459
        %vm2461 = vweird.f32 %v2367
        %vm2462 = vweird.f32 %v2456
        %vm2463 = vmor %vm2461, %vm2462
        %v2464 = vsel %vm2463, %v2456, %v2460
        %v2465 = vand.u32 2147483647, %v2367
        %vm2466 = vcmp.eq.f32.partialorder %v2465, 8.507059e+37
        %v2467 = vand.u32 %v2367, 2147483648
        %v2468 = vor.u32 1.1754944e-38, %v2467
        %v2469 = vsel %vm2466, %v2468, %v2464
        %v2470 = vrcp.pop %v2368
        %v2471 = vmul.f32 %v2368, %v2470
        %v2472 = vsub.f32 1.0, %v2471
        %v2473 = vmul.f32 %v2470, %v2472
        %v2474 = vadd.f32 %v2470, %v2473
        %vm2475 = vweird.f32 %v2368
        %vm2476 = vweird.f32 %v2470
        %vm2477 = vmor %vm2475, %vm2476
        %v2478 = vsel %vm2477, %v2470, %v2474
        %v2479 = vand.u32 2147483647, %v2368
        %vm2480 = vcmp.eq.f32.partialorder %v2479, 8.507059e+37
        %v2481 = vand.u32 %v2368, 2147483648
        %v2482 = vor.u32 1.1754944e-38, %v2481
        %v2483 = vsel %vm2480, %v2482, %v2478
        %v2484 = vrcp.pop %v2369
        %v2485 = vmul.f32 %v2369, %v2484
        %v2486 = vsub.f32 1.0, %v2485
        %v2487 = vmul.f32 %v2484, %v2486
        %v2488 = vadd.f32 %v2484, %v2487
        %vm2489 = vweird.f32 %v2369
        %vm2490 = vweird.f32 %v2484
        %vm2491 = vmor %vm2489, %vm2490
        %v2492 = vsel %vm2491, %v2484, %v2488
        %v2493 = vand.u32 2147483647, %v2369
        %vm2494 = vcmp.eq.f32.partialorder %v2493, 8.507059e+37
        %v2495 = vand.u32 %v2369, 2147483648
        %v2496 = vor.u32 1.1754944e-38, %v2495
        %v2497 = vsel %vm2494, %v2496, %v2492
        %v2498 = vrcp.pop %v2370
        %v2499 = vmul.f32 %v2370, %v2498
        %v2500 = vsub.f32 1.0, %v2499
        %v2501 = vmul.f32 %v2498, %v2500
        %v2502 = vadd.f32 %v2498, %v2501
        %vm2503 = vweird.f32 %v2370
        %vm2504 = vweird.f32 %v2498
        %vm2505 = vmor %vm2503, %vm2504
        %v2506 = vsel %vm2505, %v2498, %v2502
        %v2507 = vand.u32 2147483647, %v2370
        %vm2508 = vcmp.eq.f32.partialorder %v2507, 8.507059e+37
        %v2509 = vand.u32 %v2370, 2147483648
        %v2510 = vor.u32 1.1754944e-38, %v2509
        %v2511 = vsel %vm2508, %v2510, %v2506
        %v2512 = vrcp.pop %v2371
        %v2513 = vmul.f32 %v2371, %v2512
        %v2514 = vsub.f32 1.0, %v2513
        %v2515 = vmul.f32 %v2512, %v2514
        %v2516 = vadd.f32 %v2512, %v2515
        %vm2517 = vweird.f32 %v2371
        %vm2518 = vweird.f32 %v2512
        %vm2519 = vmor %vm2517, %vm2518
        %v2520 = vsel %vm2519, %v2512, %v2516
        %v2521 = vand.u32 2147483647, %v2371
        %vm2522 = vcmp.eq.f32.partialorder %v2521, 8.507059e+37
        %v2523 = vand.u32 %v2371, 2147483648
        %v2524 = vor.u32 1.1754944e-38, %v2523
        %v2525 = vsel %vm2522, %v2524, %v2520
        %v2526 = vrcp.pop %v2372
        %v2527 = vmul.f32 %v2372, %v2526
        %v2528 = vsub.f32 1.0, %v2527
        %v2529 = vmul.f32 %v2526, %v2528
        %v2530 = vadd.f32 %v2526, %v2529
        %vm2531 = vweird.f32 %v2372
        %vm2532 = vweird.f32 %v2526
        %vm2533 = vmor %vm2531, %vm2532
        %v2534 = vsel %vm2533, %v2526, %v2530
        %v2535 = vand.u32 2147483647, %v2372
        %vm2536 = vcmp.eq.f32.partialorder %v2535, 8.507059e+37
        %v2537 = vand.u32 %v2372, 2147483648
        %v2538 = vor.u32 1.1754944e-38, %v2537
        %v2539 = vsel %vm2536, %v2538, %v2534
        %v2540 = vrcp.pop %v2373
        %v2541 = vmul.f32 %v2373, %v2540
        %v2542 = vsub.f32 1.0, %v2541
        %v2543 = vmul.f32 %v2540, %v2542
        %v2544 = vadd.f32 %v2540, %v2543
        %vm2545 = vweird.f32 %v2373
        %vm2546 = vweird.f32 %v2540
        %vm2547 = vmor %vm2545, %vm2546
        %v2548 = vsel %vm2547, %v2540, %v2544
        %v2549 = vand.u32 2147483647, %v2373
        %vm2550 = vcmp.eq.f32.partialorder %v2549, 8.507059e+37
        %v2551 = vand.u32 %v2373, 2147483648
        %v2552 = vor.u32 1.1754944e-38, %v2551
        %v2553 = vsel %vm2550, %v2552, %v2548
        %v2554 = vrcp.pop %v2374
        %v2555 = vmul.f32 %v2374, %v2554
        %v2556 = vsub.f32 1.0, %v2555
        %v2557 = vmul.f32 %v2554, %v2556
        %v2558 = vadd.f32 %v2554, %v2557
        %vm2559 = vweird.f32 %v2374
        %vm2560 = vweird.f32 %v2554
        %vm2561 = vmor %vm2559, %vm2560
        %v2562 = vsel %vm2561, %v2554, %v2558
        %v2563 = vand.u32 2147483647, %v2374
        %vm2564 = vcmp.eq.f32.partialorder %v2563, 8.507059e+37
        %v2565 = vand.u32 %v2374, 2147483648
        %v2566 = vor.u32 1.1754944e-38, %v2565
        %v2567 = vsel %vm2564, %v2566, %v2562
        %v2568 = vrcp.pop %v2375
        %v2569 = vmul.f32 %v2375, %v2568
        %v2570 = vsub.f32 1.0, %v2569
        %v2571 = vmul.f32 %v2568, %v2570
        %v2572 = vadd.f32 %v2568, %v2571
        %vm2573 = vweird.f32 %v2375
        %vm2574 = vweird.f32 %v2568
        %vm2575 = vmor %vm2573, %vm2574
        %v2576 = vsel %vm2575, %v2568, %v2572
        %v2577 = vand.u32 2147483647, %v2375
        %vm2578 = vcmp.eq.f32.partialorder %v2577, 8.507059e+37
        %v2579 = vand.u32 %v2375, 2147483648
        %v2580 = vor.u32 1.1754944e-38, %v2579
        %v2581 = vsel %vm2578, %v2580, %v2576
        %v2582 = vrcp.pop %v2376
        %v2583 = vmul.f32 %v2376, %v2582
        %v2584 = vsub.f32 1.0, %v2583
        %v2585 = vmul.f32 %v2582, %v2584
        %v2586 = vadd.f32 %v2582, %v2585
        %vm2587 = vweird.f32 %v2376
        %vm2588 = vweird.f32 %v2582
        %vm2589 = vmor %vm2587, %vm2588
        %v2590 = vsel %vm2589, %v2582, %v2586
        %v2591 = vand.u32 2147483647, %v2376
        %vm2592 = vcmp.eq.f32.partialorder %v2591, 8.507059e+37
        %v2593 = vand.u32 %v2376, 2147483648
        %v2594 = vor.u32 1.1754944e-38, %v2593
        %v2595 = vsel %vm2592, %v2594, %v2590
        %v2596 = vrcp.pop %v2377
        %v2597 = vmul.f32 %v2377, %v2596
        %v2598 = vsub.f32 1.0, %v2597
        %v2599 = vmul.f32 %v2596, %v2598
        %v2600 = vadd.f32 %v2596, %v2599
        %vm2601 = vweird.f32 %v2377
        %vm2602 = vweird.f32 %v2596
        %vm2603 = vmor %vm2601, %vm2602
        %v2604 = vsel %vm2603, %v2596, %v2600
        %v2605 = vand.u32 2147483647, %v2377
        %vm2606 = vcmp.eq.f32.partialorder %v2605, 8.507059e+37
        %v2607 = vand.u32 %v2377, 2147483648
        %v2608 = vor.u32 1.1754944e-38, %v2607
        %v2609 = vsel %vm2606, %v2608, %v2604
        %v2610 = vrcp.pop %v2378
        %v2611 = vmul.f32 %v2378, %v2610
        %v2612 = vsub.f32 1.0, %v2611
        %v2613 = vmul.f32 %v2610, %v2612
        %v2614 = vadd.f32 %v2610, %v2613
        %vm2615 = vweird.f32 %v2378
        %vm2616 = vweird.f32 %v2610
        %vm2617 = vmor %vm2615, %vm2616
        %v2618 = vsel %vm2617, %v2610, %v2614
        %v2619 = vand.u32 2147483647, %v2378
        %vm2620 = vcmp.eq.f32.partialorder %v2619, 8.507059e+37
        %v2621 = vand.u32 %v2378, 2147483648
        %v2622 = vor.u32 1.1754944e-38, %v2621
        %v2623 = vsel %vm2620, %v2622, %v2618
        %v2624 = vrcp.pop %v2379
        %v2625 = vmul.f32 %v2379, %v2624
        %v2626 = vsub.f32 1.0, %v2625
        %v2627 = vmul.f32 %v2624, %v2626
        %v2628 = vadd.f32 %v2624, %v2627
        %vm2629 = vweird.f32 %v2379
        %vm2630 = vweird.f32 %v2624
        %vm2631 = vmor %vm2629, %vm2630
        %v2632 = vsel %vm2631, %v2624, %v2628
        %v2633 = vand.u32 2147483647, %v2379
        %vm2634 = vcmp.eq.f32.partialorder %v2633, 8.507059e+37
        %v2635 = vand.u32 %v2379, 2147483648
        %v2636 = vor.u32 1.1754944e-38, %v2635
        %v2637 = vsel %vm2634, %v2636, %v2632
        %v2638 = vrcp.pop %v2380
        %v2639 = vmul.f32 %v2380, %v2638
        %v2640 = vsub.f32 1.0, %v2639
        %v2641 = vmul.f32 %v2638, %v2640
        %v2642 = vadd.f32 %v2638, %v2641
        %vm2643 = vweird.f32 %v2380
        %vm2644 = vweird.f32 %v2638
        %vm2645 = vmor %vm2643, %vm2644
        %v2646 = vsel %vm2645, %v2638, %v2642
        %v2647 = vand.u32 2147483647, %v2380
        %vm2648 = vcmp.eq.f32.partialorder %v2647, 8.507059e+37
        %v2649 = vand.u32 %v2380, 2147483648
        %v2650 = vor.u32 1.1754944e-38, %v2649
        %v2651 = vsel %vm2648, %v2650, %v2646
        %v2652 = vrcp.pop %v2381
        %v2653 = vmul.f32 %v2381, %v2652
        %v2654 = vsub.f32 1.0, %v2653
        %v2655 = vmul.f32 %v2652, %v2654
        %v2656 = vadd.f32 %v2652, %v2655
        %vm2657 = vweird.f32 %v2381
        %vm2658 = vweird.f32 %v2652
        %vm2659 = vmor %vm2657, %vm2658
        %v2660 = vsel %vm2659, %v2652, %v2656
        %v2661 = vand.u32 2147483647, %v2381
        %vm2662 = vcmp.eq.f32.partialorder %v2661, 8.507059e+37
        %v2663 = vand.u32 %v2381, 2147483648
        %v2664 = vor.u32 1.1754944e-38, %v2663
        %v2665 = vsel %vm2662, %v2664, %v2660
        %v2666 = vrcp.pop %v2382
        %v2667 = vmul.f32 %v2382, %v2666
        %v2668 = vsub.f32 1.0, %v2667
        %v2669 = vmul.f32 %v2666, %v2668
        %v2670 = vadd.f32 %v2666, %v2669
        %vm2671 = vweird.f32 %v2382
        %vm2672 = vweird.f32 %v2666
        %vm2673 = vmor %vm2671, %vm2672
        %v2674 = vsel %vm2673, %v2666, %v2670
        %v2675 = vand.u32 2147483647, %v2382
        %vm2676 = vcmp.eq.f32.partialorder %v2675, 8.507059e+37
        %v2677 = vand.u32 %v2382, 2147483648
        %v2678 = vor.u32 1.1754944e-38, %v2677
        %v2679 = vsel %vm2676, %v2678, %v2674
        %v2680 = vrcp.pop %v2383
        %v2681 = vmul.f32 %v2383, %v2680
        %v2682 = vsub.f32 1.0, %v2681
        %v2683 = vmul.f32 %v2680, %v2682
        %v2684 = vadd.f32 %v2680, %v2683
        %vm2685 = vweird.f32 %v2383
        %vm2686 = vweird.f32 %v2680
        %vm2687 = vmor %vm2685, %vm2686
        %v2688 = vsel %vm2687, %v2680, %v2684
        %v2689 = vand.u32 2147483647, %v2383
        %vm2690 = vcmp.eq.f32.partialorder %v2689, 8.507059e+37
        %v2691 = vand.u32 %v2383, 2147483648
        %v2692 = vor.u32 1.1754944e-38, %v2691
        %v2693 = vsel %vm2690, %v2692, %v2688
        %v2694 = vrcp.pop %v2384
        %v2695 = vmul.f32 %v2384, %v2694
        %v2696 = vsub.f32 1.0, %v2695
        %v2697 = vmul.f32 %v2694, %v2696
        %v2698 = vadd.f32 %v2694, %v2697
        %vm2699 = vweird.f32 %v2384
        %vm2700 = vweird.f32 %v2694
        %vm2701 = vmor %vm2699, %vm2700
        %v2702 = vsel %vm2701, %v2694, %v2698
        %v2703 = vand.u32 2147483647, %v2384
        %vm2704 = vcmp.eq.f32.partialorder %v2703, 8.507059e+37
        %v2705 = vand.u32 %v2384, 2147483648
        %v2706 = vor.u32 1.1754944e-38, %v2705
        %v2707 = vsel %vm2704, %v2706, %v2702
        %v2708 = vrcp.pop %v2385
        %v2709 = vmul.f32 %v2385, %v2708
        %v2710 = vsub.f32 1.0, %v2709
        %v2711 = vmul.f32 %v2708, %v2710
        %v2712 = vadd.f32 %v2708, %v2711
        %vm2713 = vweird.f32 %v2385
        %vm2714 = vweird.f32 %v2708
        %vm2715 = vmor %vm2713, %vm2714
        %v2716 = vsel %vm2715, %v2708, %v2712
        %v2717 = vand.u32 2147483647, %v2385
        %vm2718 = vcmp.eq.f32.partialorder %v2717, 8.507059e+37
        %v2719 = vand.u32 %v2385, 2147483648
        %v2720 = vor.u32 1.1754944e-38, %v2719
        %v2721 = vsel %vm2718, %v2720, %v2716
        %v2722 = vld [vmem:[#allocation5] sm:$0xff]
        %v2723 = vld [vmem:[#allocation5 + $0x8] sm:$0xff]
        %v2724 = vld [vmem:[#allocation5 + $0x10] sm:$0xff]
        %v2725 = vld [vmem:[#allocation5 + $0x18] sm:$0xff]
        %v2726 = vld [vmem:[#allocation5 + $0x20] sm:$0xff]
        %v2727 = vld [vmem:[#allocation5 + $0x28] sm:$0xff]
        %v2728 = vld [vmem:[#allocation5 + $0x30] sm:$0xff]
        %v2729 = vld [vmem:[#allocation5 + $0x38] sm:$0xff]
        %v2730 = vld [vmem:[#allocation5 + $0x40] sm:$0xff]
        %v2731 = vld [vmem:[#allocation5 + $0x48] sm:$0xff]
        %v2732 = vld [vmem:[#allocation5 + $0x50] sm:$0xff]
        %v2733 = vld [vmem:[#allocation5 + $0x58] sm:$0xff]
        %v2734 = vld [vmem:[#allocation5 + $0x60] sm:$0xff]
        %v2735 = vld [vmem:[#allocation5 + $0x68] sm:$0xff]
        %v2736 = vld [vmem:[#allocation5 + $0x70] sm:$0xff]
        %v2737 = vld [vmem:[#allocation5 + $0x78] sm:$0xff]
        %v2738 = vld [vmem:[#allocation5 + $0x80] sm:$0xff]
        %v2739 = vld [vmem:[#allocation5 + $0x88] sm:$0xff]
        %v2740 = vld [vmem:[#allocation5 + $0x90] sm:$0xff]
        %v2741 = vld [vmem:[#allocation5 + $0x98] sm:$0xff]
        %v2742 = vld [vmem:[#allocation5 + $0xa0] sm:$0xff]
        %v2743 = vld [vmem:[#allocation5 + $0xa8] sm:$0xff]
        %v2744 = vld [vmem:[#allocation5 + $0xb0] sm:$0xff]
        %v2745 = vld [vmem:[#allocation5 + $0xb8] sm:$0xff]
        %2747 = vset.pattern.permute.xlu0 0
        %2748 = vperm.xlu0 %2747, %v2399
        %v2749 = vpop.permute.xlu0 %2748
        %2752 = vset.pattern.permute.xlu0 0
        %2753 = vperm.xlu0 %2752, %v2413
        %v2754 = vpop.permute.xlu0 %2753
        %2757 = vset.pattern.permute.xlu0 0
        %2758 = vperm.xlu0 %2757, %v2427
        %v2759 = vpop.permute.xlu0 %2758
        %2762 = vset.pattern.permute.xlu0 0
        %2763 = vperm.xlu0 %2762, %v2441
        %v2764 = vpop.permute.xlu0 %2763
        %2767 = vset.pattern.permute.xlu0 0
        %2768 = vperm.xlu0 %2767, %v2455
        %v2769 = vpop.permute.xlu0 %2768
        %2772 = vset.pattern.permute.xlu0 0
        %2773 = vperm.xlu0 %2772, %v2469
        %v2774 = vpop.permute.xlu0 %2773
        %2777 = vset.pattern.permute.xlu0 0
        %2778 = vperm.xlu0 %2777, %v2483
        %v2779 = vpop.permute.xlu0 %2778
        %2782 = vset.pattern.permute.xlu0 0
        %2783 = vperm.xlu0 %2782, %v2497
        %v2784 = vpop.permute.xlu0 %2783
        %2787 = vset.pattern.permute.xlu0 0
        %2788 = vperm.xlu0 %2787, %v2511
        %v2789 = vpop.permute.xlu0 %2788
        %2792 = vset.pattern.permute.xlu0 0
        %2793 = vperm.xlu0 %2792, %v2525
        %v2794 = vpop.permute.xlu0 %2793
        %2797 = vset.pattern.permute.xlu0 0
        %2798 = vperm.xlu0 %2797, %v2539
        %v2799 = vpop.permute.xlu0 %2798
        %2802 = vset.pattern.permute.xlu0 0
        %2803 = vperm.xlu0 %2802, %v2553
        %v2804 = vpop.permute.xlu0 %2803
        %2807 = vset.pattern.permute.xlu0 0
        %2808 = vperm.xlu0 %2807, %v2567
        %v2809 = vpop.permute.xlu0 %2808
        %2812 = vset.pattern.permute.xlu0 0
        %2813 = vperm.xlu0 %2812, %v2581
        %v2814 = vpop.permute.xlu0 %2813
        %2817 = vset.pattern.permute.xlu0 0
        %2818 = vperm.xlu0 %2817, %v2595
        %v2819 = vpop.permute.xlu0 %2818
        %2822 = vset.pattern.permute.xlu0 0
        %2823 = vperm.xlu0 %2822, %v2609
        %v2824 = vpop.permute.xlu0 %2823
        %2827 = vset.pattern.permute.xlu0 0
        %2828 = vperm.xlu0 %2827, %v2623
        %v2829 = vpop.permute.xlu0 %2828
        %2832 = vset.pattern.permute.xlu0 0
        %2833 = vperm.xlu0 %2832, %v2637
        %v2834 = vpop.permute.xlu0 %2833
        %2837 = vset.pattern.permute.xlu0 0
        %2838 = vperm.xlu0 %2837, %v2651
        %v2839 = vpop.permute.xlu0 %2838
        %2842 = vset.pattern.permute.xlu0 0
        %2843 = vperm.xlu0 %2842, %v2665
        %v2844 = vpop.permute.xlu0 %2843
        %2847 = vset.pattern.permute.xlu0 0
        %2848 = vperm.xlu0 %2847, %v2679
        %v2849 = vpop.permute.xlu0 %2848
        %2852 = vset.pattern.permute.xlu0 0
        %2853 = vperm.xlu0 %2852, %v2693
        %v2854 = vpop.permute.xlu0 %2853
        %2857 = vset.pattern.permute.xlu0 0
        %2858 = vperm.xlu0 %2857, %v2707
        %v2859 = vpop.permute.xlu0 %2858
        %2862 = vset.pattern.permute.xlu0 0
        %2863 = vperm.xlu0 %2862, %v2721
        %v2864 = vpop.permute.xlu0 %2863
        %v2866 = vmul.f32 %v2722, %v2749
        %v2867 = vmul.f32 %v2723, %v2754
        %v2868 = vmul.f32 %v2724, %v2759
        %v2869 = vmul.f32 %v2725, %v2764
        %v2870 = vmul.f32 %v2726, %v2769
        %v2871 = vmul.f32 %v2727, %v2774
        %v2872 = vmul.f32 %v2728, %v2779
        %v2873 = vmul.f32 %v2729, %v2784
        %v2874 = vmul.f32 %v2730, %v2789
        %v2875 = vmul.f32 %v2731, %v2794
        %v2876 = vmul.f32 %v2732, %v2799
        %v2877 = vmul.f32 %v2733, %v2804
        %v2878 = vmul.f32 %v2734, %v2809
        %v2879 = vmul.f32 %v2735, %v2814
        %v2880 = vmul.f32 %v2736, %v2819
        %v2881 = vmul.f32 %v2737, %v2824
        %v2882 = vmul.f32 %v2738, %v2829
        %v2883 = vmul.f32 %v2739, %v2834
        %v2884 = vmul.f32 %v2740, %v2839
        %v2885 = vmul.f32 %v2741, %v2844
        %v2886 = vmul.f32 %v2742, %v2849
        %v2887 = vmul.f32 %v2743, %v2854
        %v2888 = vmul.f32 %v2744, %v2859
        %v2889 = vmul.f32 %v2745, %v2864
        %2890 = vst.msk [vmem:[#allocation6] sm:$0xff] %vm1069, %v2866
        %2891 = vst.msk [vmem:[#allocation6 + $0x8] sm:$0xff] %vm1069, %v2867
        %2892 = vst.msk [vmem:[#allocation6 + $0x10] sm:$0xff] %vm1069, %v2868
        %2893 = vst.msk [vmem:[#allocation6 + $0x18] sm:$0xff] %vm1069, %v2869
        %2894 = vst.msk [vmem:[#allocation6 + $0x20] sm:$0xff] %vm1069, %v2870
        %2895 = vst.msk [vmem:[#allocation6 + $0x28] sm:$0xff] %vm1069, %v2871
        %2902 = vrot.lane.b32.xlu0 %v2872, 8
        %v2903 = vpop.permute.xlu0 %2902
        %2904 = vrot.lane.b32.xlu0 %v2873, 8
        %v2905 = vpop.permute.xlu0 %2904
        %2906 = vrot.lane.b32.xlu0 %v2874, 8
        %v2907 = vpop.permute.xlu0 %2906
        %2908 = vrot.lane.b32.xlu0 %v2875, 8
        %v2909 = vpop.permute.xlu0 %2908
        %2910 = vrot.lane.b32.xlu0 %v2876, 8
        %v2911 = vpop.permute.xlu0 %2910
        %2912 = vrot.lane.b32.xlu0 %v2877, 8
        %v2913 = vpop.permute.xlu0 %2912
        %vm2920 = vcmask 130112
        %2921 = vst.msk [vmem:[#allocation6] sm:$0xff] %vm2920, %v2903
        %2922 = vst.msk [vmem:[#allocation6 + $0x8] sm:$0xff] %vm2920, %v2905
        %2923 = vst.msk [vmem:[#allocation6 + $0x10] sm:$0xff] %vm2920, %v2907
        %2924 = vst.msk [vmem:[#allocation6 + $0x18] sm:$0xff] %vm2920, %v2909
        %2925 = vst.msk [vmem:[#allocation6 + $0x20] sm:$0xff] %vm2920, %v2911
        %2926 = vst.msk [vmem:[#allocation6 + $0x28] sm:$0xff] %vm2920, %v2913
        %2933 = vrot.lane.b32.xlu0 %v2878, 16
        %v2934 = vpop.permute.xlu0 %2933
        %2935 = vrot.lane.b32.xlu0 %v2879, 16
        %v2936 = vpop.permute.xlu0 %2935
        %2937 = vrot.lane.b32.xlu0 %v2880, 16
        %v2938 = vpop.permute.xlu0 %2937
        %2939 = vrot.lane.b32.xlu0 %v2881, 16
        %v2940 = vpop.permute.xlu0 %2939
        %2941 = vrot.lane.b32.xlu0 %v2882, 16
        %v2942 = vpop.permute.xlu0 %2941
        %2943 = vrot.lane.b32.xlu0 %v2883, 16
        %v2944 = vpop.permute.xlu0 %2943
        %vm2951 = vcmask 195712
        %2952 = vst.msk [vmem:[#allocation6] sm:$0xff] %vm2951, %v2934
        %2953 = vst.msk [vmem:[#allocation6 + $0x8] sm:$0xff] %vm2951, %v2936
        %2954 = vst.msk [vmem:[#allocation6 + $0x10] sm:$0xff] %vm2951, %v2938
        %2955 = vst.msk [vmem:[#allocation6 + $0x18] sm:$0xff] %vm2951, %v2940
        %2956 = vst.msk [vmem:[#allocation6 + $0x20] sm:$0xff] %vm2951, %v2942
        %2957 = vst.msk [vmem:[#allocation6 + $0x28] sm:$0xff] %vm2951, %v2944
        %2964 = vrot.lane.b32.xlu0 %v2884, 24
        %v2965 = vpop.permute.xlu0 %2964
        %2966 = vrot.lane.b32.xlu0 %v2885, 24
        %v2967 = vpop.permute.xlu0 %2966
        %2968 = vrot.lane.b32.xlu0 %v2886, 24
        %v2969 = vpop.permute.xlu0 %2968
        %2970 = vrot.lane.b32.xlu0 %v2887, 24
        %v2971 = vpop.permute.xlu0 %2970
        %2972 = vrot.lane.b32.xlu0 %v2888, 24
        %v2973 = vpop.permute.xlu0 %2972
        %2974 = vrot.lane.b32.xlu0 %v2889, 24
        %v2975 = vpop.permute.xlu0 %2974
        %vm2982 = vcmask 261312
        %2983 = vst.msk [vmem:[#allocation6] sm:$0xff] %vm2982, %v2965
        %2984 = vst.msk [vmem:[#allocation6 + $0x8] sm:$0xff] %vm2982, %v2967
        %2985 = vst.msk [vmem:[#allocation6 + $0x10] sm:$0xff] %vm2982, %v2969
        %2986 = vst.msk [vmem:[#allocation6 + $0x18] sm:$0xff] %vm2982, %v2971
        %2987 = vst.msk [vmem:[#allocation6 + $0x20] sm:$0xff] %vm2982, %v2973
        %2988 = vst.msk [vmem:[#allocation6 + $0x28] sm:$0xff] %vm2982, %v2975
        %v2989 = vld [vmem:[#allocation6] sm:$0xff]
        %v2990 = vld [vmem:[#allocation6 + $0x8] sm:$0xff]
        %v2991 = vld [vmem:[#allocation6 + $0x10] sm:$0xff]
        %v2992 = vld [vmem:[#allocation6 + $0x18] sm:$0xff]
        %v2993 = vld [vmem:[#allocation6 + $0x20] sm:$0xff]
        %v2994 = vld [vmem:[#allocation6 + $0x28] sm:$0xff]
        %v2995 = vpack.c.bf16 %v2990, %v2989
        %v2996 = vpack.c.bf16 %v2992, %v2991
        %v2997 = vpack.c.bf16 %v2994, %v2993
        %v2998 = vld [vmem:[%s5] sm:$0xf]
        %v2999 = vld [vmem:[%s5 + $0x4] sm:$0xf]
        %v3000 = vld [vmem:[%s5 + $0x8] sm:$0xf]
        %v3001 = vld [vmem:[%s5 + $0xc] sm:$0xf]
        %v3006 = vunpack.c.l.b16 %v2998
        %v3007 = vunpack.c.l.b16 %v2999
        %v3008 = vunpack.c.l.b16 %v3000
        %v3009 = vunpack.c.l.b16 %v3001
        %v3010 = vpack.c.b16 %v3007, %v3006
        %v3011 = vpack.c.b16 %v3009, %v3008
        %v3015 = vsel %vm729, %v2995, 0
        %v3018 = vsel %vm729, %v2996, 0
        %v3021 = vsel %vm729, %v2997, 0
        %3023 = vmatpush.bf16.msra.mxu0 0
        %3024 = vmatpush.bf16.msra.mxu0 0
        %3025 = vmatpush.bf16.msra.mxu0 0
        %3026 = vmatpush.bf16.msra.mxu0 0
        %3027 = vmatpush.bf16.msra.mxu0 0
        %3028 = vmatpush.bf16.msra.mxu0 0
        %3029 = vmatpush.bf16.msra.mxu0 %v3011
        %3030 = vmatpush.bf16.msra.mxu0 %v3010
        %3031 = vmatmul.bf16.gmra.mxu0 %v3015
        %v3032 = vpop.f32.mrf.mxu0
        %v3033 = vadd.f32 0.0, %v3032
        %v3034 = vpop.f32.mrf.mxu0
        %v3035 = vadd.f32 0.0, %v3034
        %3036 = vmatmul.bf16.gmra.mxu0 %v3018
        %v3037 = vpop.f32.mrf.mxu0
        %v3038 = vadd.f32 0.0, %v3037
        %v3039 = vpop.f32.mrf.mxu0
        %v3040 = vadd.f32 0.0, %v3039
        %3041 = vmatmul.bf16.gmra.mxu0 %v3021
        %v3042 = vpop.f32.mrf.mxu0
        %v3043 = vadd.f32 0.0, %v3042
        %v3044 = vpop.f32.mrf.mxu0
        %v3045 = vadd.f32 0.0, %v3044
        %3046 = vdwg.mxu0
        %3047 = vst.msk [vmem:[%s332] sm:$0xff] %vm729, %v3033
        %3048 = vst.msk [vmem:[%s332 + $0x8] sm:$0xff] %vm729, %v3035
        %3049 = vst.msk [vmem:[%s332 + $0x10] sm:$0xff] %vm729, %v3038
        %3050 = vst.msk [vmem:[%s332 + $0x18] sm:$0xff] %vm729, %v3040
        %3051 = vst.msk [vmem:[%s332 + $0x20] sm:$0xff] %vm729, %v3043
        %3052 = vst.msk [vmem:[%s332 + $0x28] sm:$0xff] %vm729, %v3045
      $region52: #{tpu_custom_call.1} parent=43 // pred_fallthru
        _
      %s3053 = smul.u32 6, %s23
      %p3054 = scmp.lt.s32.totalorder %s22, 1
      %s3055 = scalar_select %p3054, %s22, 1
      %p3056 = scmp.lt.s32.totalorder %s3053, 11
      %s3057 = scalar_select %p3056, %s3053, 11
      %s3058 = smul.addr %s3055, 12
      %s3059 = sadd.s32 %s3057, %s3058
      %s3060 = smul.addr %s3059, 8
      %s3061 = scalar_lea.vmem %s6, %s3060
      // Predicated region
      $region53: #{tpu_custom_call.1} parent=43 // pred_check
        %p3062 = pneg %p196
      $region54: #{tpu_custom_call.1} parent=43 // pred_check_branch
        %3064 = sbr.rel (%p3062) target = $region56
      $region55: #{tpu_custom_call.1} parent=43 // pred_region
        %s3065 = smul.u32 6, %s23
      $region56: #{tpu_custom_call.1} parent=43 // pred_fallthru
        _
    $region44: #{tpu_custom_call.1} parent=5 // pred_fallthru
      _
    %p3066 = scmp.le.s32.totalorder 2, %s12
    // Predicated region
    $region57: #{tpu_custom_call.1} parent=5 // pred_check
      %p3067 = pneg %p3066
    $region58: #{tpu_custom_call.1} parent=5 // pred_check_branch
      %3069 = sbr.rel (%p3067) target = $region60
    $region59: #{tpu_custom_call.1} parent=5 // pred_region
      %s3070 = ssub.s32 %s12, 2
      // Predicated region
      $region61: #{tpu_custom_call.1} parent=59 // pred_check
        %p3071 = pneg %p202
      $region62: #{tpu_custom_call.1} parent=59 // pred_check_branch
        %3073 = sbr.rel (%p3071) target = $region64
      $region63: #{tpu_custom_call.1} parent=59 // pred_region
        %s3074 = smul.u32 6, %s26
        %p3075 = scmp.lt.s32.totalorder %s25, 1
        %s3076 = scalar_select %p3075, %s25, 1
        %p3077 = scmp.lt.s32.totalorder %s3074, 11
        %s3078 = scalar_select %p3077, %s3074, 11
        %s3079 = smul.addr %s3076, 12
        %s3080 = sadd.s32 %s3078, %s3079
        %s3081 = smul.addr %s3080, 8
        %s3082 = scalar_lea.vmem %s6, %s3081
      $region64: #{tpu_custom_call.1} parent=59 // pred_fallthru
        _
    $region60: #{tpu_custom_call.1} parent=5 // pred_fallthru
      _
  $region6: #{tpu_custom_call.1} parent=0 // loop_footer
    %s16 = sadd.s32 1, %s12
  $region7: #{tpu_custom_call.1} parent=0 // loop_footer_branch
    %11 = sbr.rel target = $region3
  $region8: #{tpu_custom_call.1} parent=0 // loop_exit
    _

</llo_original>
